<compile_context>
chip_gen: v7x
topology: tpu7x:2x2x1
jax: 0.10.0
libtpu: 0.0.40
codegen_flags: <defaults>
</compile_context>

<pallas_src>
import functools

import jax
import jax.numpy as jnp
from jax import lax
from jax.experimental import pallas as pl
from jax.experimental.pallas import tpu as pltpu


def _round_up(x, m):
    return ((x + m - 1) // m) * m


def _gru_decode_kernel(tok_ref,                 # (2T,) int32  SMEM (scalar prefetch)
                       emb_ref,                 # (V, Hp)      VMEM resident
                       wia_ref, wib_ref,        # (Hp, 3Hp)    input proj (token slot 0 / 1)
                       bi_ref,                  # (1, 3Hp)
                       wh_ref,                  # (Hp, 3Hp)    fused hidden-side gate weights
                       bh_ref,                  # (1, 3Hp)
                       wdec_ref, bdec_ref,      # (Hp, OP), (1, OP)
                       h0_ref,                  # (1, Hp)      initial hidden (lane-padded)
                       out_ref,                 # (T, OP)      per-step decoder outputs
                       hout_ref,                # (1, Hp)      final hidden
                       x0_scr, x1_scr,          # (T, Hp)      gathered embedding rows
                       gi_scr,                  # (T, 3Hp)     precomputed input projections
                       hall_scr):               # (T, Hp)      per-step hidden states
    T, Hp = hall_scr.shape

    # ---- Phase 1: embedding gather for all T steps (off the serial chain) ----
    @pl.loop(0, T)
    def _(t):
        x0_scr[pl.ds(t, 1), :] = emb_ref[pl.ds(tok_ref[2 * t], 1), :]
        x1_scr[pl.ds(t, 1), :] = emb_ref[pl.ds(tok_ref[2 * t + 1], 1), :]

    # ---- Phase 2: batched (M=T) token-only input projection on the MXU ----
    gi_scr[...] = (
        jnp.dot(x0_scr[...], wia_ref[...], preferred_element_type=jnp.float32)
        + jnp.dot(x1_scr[...], wib_ref[...], preferred_element_type=jnp.float32)
        + bi_ref[...])

    # ---- Phase 3: serial GRU recurrence; only h @ W_h stays on the chain ----
    def step(t, h):
        gi = gi_scr[pl.ds(t, 1), :]                                   # (1, 3Hp)
        gh = jnp.dot(h, wh_ref[...],
                     preferred_element_type=jnp.float32) + bh_ref[...]  # one MXU push
        # Gate slices are 128-lane aligned (each gate padded to Hp lanes).
        r = jax.nn.sigmoid(gi[:, 0:Hp] + gh[:, 0:Hp])
        z = jax.nn.sigmoid(gi[:, Hp:2 * Hp] + gh[:, Hp:2 * Hp])
        n = jnp.tanh(gi[:, 2 * Hp:3 * Hp] + r * gh[:, 2 * Hp:3 * Hp])
        h_new = n + z * (h - n)                                       # == (1-z)*n + z*h
        hall_scr[pl.ds(t, 1), :] = h_new
        return h_new

    h_final = lax.fori_loop(0, T, step, h0_ref[...], unroll=(T <= 16))
    hout_ref[...] = h_final                                           # written exactly once

    # ---- Phase 4: deferred decoder: one (T,Hp)@(Hp,OP) matmul, dense store ----
    out_ref[...] = (
        jnp.dot(hall_scr[...], wdec_ref[...], preferred_element_type=jnp.float32)
        + bdec_ref[...])


def prepare_params(params):
    """One-time re-layout of the PyTorch-style parameters: transpose,
    gate-major split with each gate padded to a 128-lane block, zero row/col
    padding chosen so the pad lanes of h stay exactly 0 through the GRU."""
    f32 = jnp.float32
    emb = params["embedding"].astype(f32)
    V, H = emb.shape
    O = params["b_dec"].shape[0]
    Hp = _round_up(max(H, 1), 128)       # per-gate lane-padded width (>= 128)
    OP = _round_up(max(O, 1), 128)

    emb_p = jnp.zeros((V, Hp), f32).at[:, :H].set(emb)

    w_ih_t = params["w_ih"].astype(f32).T            # (2H, 3H), cols in gate order r,z,n
    w_hh_t = params["w_hh"].astype(f32).T            # (H, 3H)

    def gate_pad_cols(w):                            # (rows, 3H) -> (rows, 3Hp)
        out = jnp.zeros((w.shape[0], 3 * Hp), f32)
        for g in range(3):
            out = out.at[:, g * Hp:g * Hp + H].set(w[:, g * H:(g + 1) * H])
        return out

    def gate_pad_bias(b):                            # (3H,) -> (1, 3Hp)
        out = jnp.zeros((1, 3 * Hp), f32)
        for g in range(3):
            out = out.at[0, g * Hp:g * Hp + H].set(b[g * H:(g + 1) * H])
        return out

    wi_p = gate_pad_cols(w_ih_t)                     # (2H, 3Hp)
    wia = jnp.zeros((Hp, 3 * Hp), f32).at[:H].set(wi_p[:H])        # token slot 0
    wib = jnp.zeros((Hp, 3 * Hp), f32).at[:H].set(wi_p[H:2 * H])   # token slot 1
    wh = jnp.zeros((Hp, 3 * Hp), f32).at[:H].set(gate_pad_cols(w_hh_t))

    bi = gate_pad_bias(params["b_ih"].astype(f32))
    bh = gate_pad_bias(params["b_hh"].astype(f32))

    w_dec = jnp.zeros((Hp, OP), f32).at[:H, :O].set(params["w_dec"].astype(f32).T)
    b_dec = jnp.zeros((1, OP), f32).at[0, :O].set(params["b_dec"].astype(f32))

    kp = {
        "emb": emb_p, "wia": wia, "wib": wib, "bi": bi,
        "wh": wh, "bh": bh, "w_dec": w_dec, "b_dec": b_dec,
    }
    return kp


@functools.partial(jax.jit, static_argnames=("hidden_size", "out_size"))
def rnn_decode(tokens, hidden, kp, *, hidden_size, out_size):
    """Run T fused forward() steps in ONE pallas_call (single grid step).

    tokens: (T, 2) int32 -- the 2 token ids consumed by each forward() call.
    hidden: (1, 1, H) f32 -- initial hidden state.
    Returns (outputs (T, out_size) f32, final hidden (1, 1, H) f32).
    """
    T = tokens.shape[0]
    H, O = hidden_size, out_size
    V, Hp = kp["emb"].shape
    OP = kp["w_dec"].shape[1]

    # Flatten to 1D for minimal SMEM padding; clamp (no VMEM bounds checks).
    tok_flat = jnp.clip(tokens.reshape(-1), 0, V - 1).astype(jnp.int32)     # (2T,)
    h0 = jnp.zeros((1, Hp), jnp.float32).at[:, :H].set(hidden.reshape(1, H))

    ordered = (kp["emb"], kp["wia"], kp["wib"], kp["bi"], kp["wh"], kp["bh"],
               kp["w_dec"], kp["b_dec"], h0)

    def _resident(a):                 # full-array block, constant index -> DMA'd once
        return pl.BlockSpec(a.shape, lambda i, tok: (0, 0))

    grid_spec = pltpu.PrefetchScalarGridSpec(
        num_scalar_prefetch=1,                       # tokens -> SMEM
        grid=(1,),                                   # time loop lives inside the kernel
        in_specs=[_resident(a) for a in ordered],
        out_specs=(
            pl.BlockSpec((T, OP), lambda i, tok: (0, 0)),   # all step outputs, dense store
            pl.BlockSpec((1, Hp), lambda i, tok: (0, 0)),   # final hidden
        ),
        scratch_shapes=[
            pltpu.VMEM((T, Hp), jnp.float32),        # x0: embedding rows (token slot 0)
            pltpu.VMEM((T, Hp), jnp.float32),        # x1: embedding rows (token slot 1)
            pltpu.VMEM((T, 3 * Hp), jnp.float32),    # gi: precomputed input projections
            pltpu.VMEM((T, Hp), jnp.float32),        # h_all: per-step hidden states
        ],
    )

    outs, h_final = pl.pallas_call(
        _gru_decode_kernel,
        grid_spec=grid_spec,
        out_shape=(
            jax.ShapeDtypeStruct((T, OP), jnp.float32),
            jax.ShapeDtypeStruct((1, Hp), jnp.float32),
        ),
        compiler_params=pltpu.CompilerParams(
            dimension_semantics=("arbitrary",)),     # recurrence is sequential
    )(tok_flat, *ordered)

    return outs[:, :O], h_final[:, :H].reshape(1, 1, H)


def rnn_forward(token_pair, hidden, kp, *, hidden_size, out_size):
    """Exactly the PyTorch module's forward(): one GRU step + decoder.
    token_pair: (2,) int32.  Returns (output (1, O), hidden (1, 1, H))."""
    outs, h = rnn_decode(token_pair.reshape(1, 2), hidden, kp,
                         hidden_size=hidden_size, out_size=out_size)
    return outs, h


def init_params(key, vocab_size, hidden_size, output_size):
    ks = jax.random.split(key, 7)
    s = 0.1
    return {
        "embedding": jax.random.normal(ks[0], (vocab_size, hidden_size), jnp.float32) * s,
        "w_ih": jax.random.normal(ks[1], (3 * hidden_size, 2 * hidden_size), jnp.float32) * s,
        "w_hh": jax.random.normal(ks[2], (3 * hidden_size, hidden_size), jnp.float32) * s,
        "b_ih": jax.random.normal(ks[3], (3 * hidden_size,), jnp.float32) * s,
        "b_hh": jax.random.normal(ks[4], (3 * hidden_size,), jnp.float32) * s,
        "w_dec": jax.random.normal(ks[5], (output_size, hidden_size), jnp.float32) * s,
        "b_dec": jax.random.normal(ks[6], (output_size,), jnp.float32) * s,
    }


def rnn_ref(token_pair, hidden, params):
    """Pure-JAX reference reproducing one PyTorch forward() call."""
    H = params["embedding"].shape[1]
    x = jnp.take(params["embedding"], token_pair, axis=0).reshape(1, 2 * H)
    h = hidden.reshape(1, H)
    gi = x @ params["w_ih"].T + params["b_ih"]
    gh = h @ params["w_hh"].T + params["b_hh"]
    i_r, i_z, i_n = gi[:, :H], gi[:, H:2 * H], gi[:, 2 * H:]
    h_r, h_z, h_n = gh[:, :H], gh[:, H:2 * H], gh[:, 2 * H:]
    r = jax.nn.sigmoid(i_r + h_r)
    z = jax.nn.sigmoid(i_z + h_z)
    n = jnp.tanh(i_n + r * h_n)
    h_new = (1.0 - z) * n + z * h
    out = h_new @ params["w_dec"].T + params["b_dec"]
    return out, h_new.reshape(1, 1, H)


if __name__ == "__main__":
    vocab_size = 64
    hidden_size = 32      # module default is 100; small shape for the demo
    output_size = 16
    T = 8                 # fused decode steps (each = one module forward())

    key = jax.random.PRNGKey(0)
    pkey, tkey = jax.random.split(key)
    params = init_params(pkey, vocab_size, hidden_size, output_size)
    kp = prepare_params(params)                     # one-time weight re-layout

    tokens = jax.random.randint(tkey, (T, 2), 0, vocab_size, dtype=jnp.int32)
    hidden0 = jnp.zeros((1, 1, hidden_size), jnp.float32)   # init_hidden()

    # Fused multi-step decode: one pallas_call, one grid step, h kept in vregs.
    outs, h_final = rnn_decode(tokens, hidden0, kp,
                               hidden_size=hidden_size, out_size=output_size)
    outs = jax.block_until_ready(outs)
    h_final = jax.block_until_ready(h_final)

    # Pure-JAX reference: T sequential applications of the PyTorch forward.
    h_ref = hidden0
    ref_outs = []
    for t in range(T):
        o_ref, h_ref = rnn_ref(tokens[t], h_ref, params)
        ref_outs.append(o_ref)
    ref_outs = jnp.concatenate(ref_outs, axis=0)

    assert outs.shape == (T, output_size)
    assert h_final.shape == (1, 1, hidden_size)
    assert jnp.allclose(outs, ref_outs, atol=1e-4), "decoder outputs mismatch"
    assert jnp.allclose(h_final, h_ref, atol=1e-4), "hidden state mismatch"

    # Single-step forward (exact module semantics: forward(input, hidden)).
    out1, h1 = rnn_forward(tokens[0], hidden0, kp,
                           hidden_size=hidden_size, out_size=output_size)
    out1 = jax.block_until_ready(out1)
    out1_ref, h1_ref = rnn_ref(tokens[0], hidden0, params)
    assert out1.shape == (1, output_size) and h1.shape == (1, 1, hidden_size)
    assert jnp.allclose(out1, out1_ref, atol=1e-4), "single-step output mismatch"
    assert jnp.allclose(h1, h1_ref, atol=1e-4), "single-step hidden mismatch"

    print("KERNEL_OK")
</pallas_src>

<mosaic_0001>
module attributes {stable_mosaic.version = 11 : i64} {
  func.func @_gru_decode_kernel(%arg0: i32, %arg1: memref<16xi32, #tpu.memory_space<smem>>, %arg2: memref<64x128xf32, #tpu.memory_space<vmem>>, %arg3: memref<128x384xf32, #tpu.memory_space<vmem>>, %arg4: memref<128x384xf32, #tpu.memory_space<vmem>>, %arg5: memref<1x384xf32, #tpu.memory_space<vmem>>, %arg6: memref<128x384xf32, #tpu.memory_space<vmem>>, %arg7: memref<1x384xf32, #tpu.memory_space<vmem>>, %arg8: memref<128x128xf32, #tpu.memory_space<vmem>>, %arg9: memref<1x128xf32, #tpu.memory_space<vmem>>, %arg10: memref<1x128xf32, #tpu.memory_space<vmem>>, %arg11: memref<8x128xf32, #tpu.memory_space<vmem>>, %arg12: memref<1x128xf32, #tpu.memory_space<vmem>>, %arg13: memref<8x128xf32, #tpu.memory_space<vmem>>, %arg14: memref<8x128xf32, #tpu.memory_space<vmem>>, %arg15: memref<8x384xf32, #tpu.memory_space<vmem>>, %arg16: memref<8x128xf32, #tpu.memory_space<vmem>>) attributes {dimension_semantics = [#tpu.dimension_semantics<arbitrary>], iteration_bounds = array<i64: 1>, scalar_prefetch = 1 : i64, scratch_operands = 4 : i64, tpu.core_type = #tpu.core_type<tc>, window_params = [{pipeline_mode = #tpu.pipeline_mode<synchronous>, transform_indices = @transform_0, window_bounds = array<i64: 64, 128>}, {pipeline_mode = #tpu.pipeline_mode<synchronous>, transform_indices = @transform_1, window_bounds = array<i64: 128, 384>}, {pipeline_mode = #tpu.pipeline_mode<synchronous>, transform_indices = @transform_2, window_bounds = array<i64: 128, 384>}, {pipeline_mode = #tpu.pipeline_mode<synchronous>, transform_indices = @transform_3, window_bounds = array<i64: 1, 384>}, {pipeline_mode = #tpu.pipeline_mode<synchronous>, transform_indices = @transform_4, window_bounds = array<i64: 128, 384>}, {pipeline_mode = #tpu.pipeline_mode<synchronous>, transform_indices = @transform_5, window_bounds = array<i64: 1, 384>}, {pipeline_mode = #tpu.pipeline_mode<synchronous>, transform_indices = @transform_6, window_bounds = array<i64: 128, 128>}, {pipeline_mode = #tpu.pipeline_mode<synchronous>, transform_indices = @transform_7, window_bounds = array<i64: 1, 128>}, {pipeline_mode = #tpu.pipeline_mode<synchronous>, transform_indices = @transform_8, window_bounds = array<i64: 1, 128>}, {pipeline_mode = #tpu.pipeline_mode<synchronous>, transform_indices = @transform_9, window_bounds = array<i64: 8, 128>}, {pipeline_mode = #tpu.pipeline_mode<synchronous>, transform_indices = @transform_10, window_bounds = array<i64: 1, 128>}]} {
    %c0_i32 = arith.constant 0 : i32
    %c8_i32 = arith.constant 8 : i32
    %0 = arith.addi %c0_i32, %c8_i32 : i32
    %c1_i32 = arith.constant 1 : i32
    scf.for %arg17 = %c0_i32 to %0 step %c1_i32  : i32 {
      %c1_i32_101 = arith.constant 1 : i32
      %277 = arith.muli %arg17, %c1_i32_101 : i32
      %c0_i32_102 = arith.constant 0 : i32
      %278 = arith.addi %c0_i32_102, %277 : i32
      %c2_i32_103 = arith.constant 2 : i32
      %279 = arith.muli %c2_i32_103, %278 : i32
      %280 = arith.index_cast %279 : i32 to index
      %281 = memref.load %arg1[%280] : memref<16xi32, #tpu.memory_space<smem>>
      %282 = arith.index_cast %281 : i32 to index
      %c0_104 = arith.constant 0 : index
      %283 = vector.load %arg2[%282, %c0_104] : memref<64x128xf32, #tpu.memory_space<vmem>>, vector<1x128xf32>
      %284 = arith.index_cast %278 : i32 to index
      %c0_105 = arith.constant 0 : index
      %285 = vector.load %arg13[%284, %c0_105] : memref<8x128xf32, #tpu.memory_space<vmem>>, vector<1x128xf32>
      tpu.vector_store %arg13[%284, %c0_105], %283 {strides = array<i32>} : memref<8x128xf32, #tpu.memory_space<vmem>>, vector<1x128xf32>,
      %c2_i32_106 = arith.constant 2 : i32
      %286 = arith.muli %c2_i32_106, %278 : i32
      %c1_i32_107 = arith.constant 1 : i32
      %287 = arith.addi %286, %c1_i32_107 : i32
      %288 = arith.index_cast %287 : i32 to index
      %289 = memref.load %arg1[%288] : memref<16xi32, #tpu.memory_space<smem>>
      %290 = arith.index_cast %289 : i32 to index
      %c0_108 = arith.constant 0 : index
      %291 = vector.load %arg2[%290, %c0_108] : memref<64x128xf32, #tpu.memory_space<vmem>>, vector<1x128xf32>
      %292 = arith.index_cast %278 : i32 to index
      %c0_109 = arith.constant 0 : index
      %293 = vector.load %arg14[%292, %c0_109] : memref<8x128xf32, #tpu.memory_space<vmem>>, vector<1x128xf32>
      tpu.vector_store %arg14[%292, %c0_109], %291 {strides = array<i32>} : memref<8x128xf32, #tpu.memory_space<vmem>>, vector<1x128xf32>,
    }
    %c8_i32_0 = arith.constant 8 : i32
    %c0 = arith.constant 0 : index
    %c0_1 = arith.constant 0 : index
    %1 = vector.load %arg13[%c0, %c0_1] : memref<8x128xf32, #tpu.memory_space<vmem>>, vector<8x128xf32>
    %c0_2 = arith.constant 0 : index
    %c0_3 = arith.constant 0 : index
    %2 = vector.load %arg3[%c0_2, %c0_3] : memref<128x384xf32, #tpu.memory_space<vmem>>, vector<128x384xf32>
    %cst = arith.constant dense<0.000000e+00> : vector<8x384xf32>
    %3 = tpu.matmul %1, %2, %cst {dimension_numbers = #tpu.dot_dimension_numbers<[1], [0], [0], [1], [0, 0, 1, 1], [], []>} : vector<8x128xf32>, vector<128x384xf32>, vector<8x384xf32> -> vector<8x384xf32>
    %c0_4 = arith.constant 0 : index
    %c0_5 = arith.constant 0 : index
    %4 = vector.load %arg14[%c0_4, %c0_5] : memref<8x128xf32, #tpu.memory_space<vmem>>, vector<8x128xf32>
    %c0_6 = arith.constant 0 : index
    %c0_7 = arith.constant 0 : index
    %5 = vector.load %arg4[%c0_6, %c0_7] : memref<128x384xf32, #tpu.memory_space<vmem>>, vector<128x384xf32>
    %cst_8 = arith.constant dense<0.000000e+00> : vector<8x384xf32>
    %6 = tpu.matmul %4, %5, %cst_8 {dimension_numbers = #tpu.dot_dimension_numbers<[1], [0], [0], [1], [0, 0, 1, 1], [], []>} : vector<8x128xf32>, vector<128x384xf32>, vector<8x384xf32> -> vector<8x384xf32>
    %7 = arith.addf %3, %6 : vector<8x384xf32>
    %c0_9 = arith.constant 0 : index
    %c0_10 = arith.constant 0 : index
    %8 = vector.load %arg5[%c0_9, %c0_10] : memref<1x384xf32, #tpu.memory_space<vmem>>, vector<1x384xf32>
    %9 = vector.broadcast %8 : vector<1x384xf32> to vector<8x384xf32>
    %10 = arith.addf %7, %9 : vector<8x384xf32>
    %c0_11 = arith.constant 0 : index
    %c0_12 = arith.constant 0 : index
    %11 = vector.load %arg15[%c0_11, %c0_12] : memref<8x384xf32, #tpu.memory_space<vmem>>, vector<8x384xf32>
    tpu.vector_store %arg15[%c0_11, %c0_12], %10 {strides = array<i32>} : memref<8x384xf32, #tpu.memory_space<vmem>>, vector<8x384xf32>,
    %c0_13 = arith.constant 0 : index
    %c0_14 = arith.constant 0 : index
    %12 = vector.load %arg10[%c0_13, %c0_14] : memref<1x128xf32, #tpu.memory_space<vmem>>, vector<1x128xf32>
    %c0_i32_15 = arith.constant 0 : i32
    %13 = arith.index_cast %c0_i32_15 : i32 to index
    %c0_16 = arith.constant 0 : index
    %14 = vector.load %arg15[%13, %c0_16] : memref<8x384xf32, #tpu.memory_space<vmem>>, vector<1x384xf32>
    %c0_17 = arith.constant 0 : index
    %c0_18 = arith.constant 0 : index
    %15 = vector.load %arg6[%c0_17, %c0_18] : memref<128x384xf32, #tpu.memory_space<vmem>>, vector<128x384xf32>
    %cst_19 = arith.constant dense<0.000000e+00> : vector<1x384xf32>
    %16 = tpu.matmul %12, %15, %cst_19 {dimension_numbers = #tpu.dot_dimension_numbers<[1], [0], [0], [1], [0, 0, 1, 1], [], []>} : vector<1x128xf32>, vector<128x384xf32>, vector<1x384xf32> -> vector<1x384xf32>
    %c0_20 = arith.constant 0 : index
    %c0_21 = arith.constant 0 : index
    %17 = vector.load %arg7[%c0_20, %c0_21] : memref<1x384xf32, #tpu.memory_space<vmem>>, vector<1x384xf32>
    %18 = arith.addf %16, %17 : vector<1x384xf32>
    %19 = vector.extract_strided_slice %14 {offsets = [0, 0], sizes = [1, 128], strides = [1, 1]} : vector<1x384xf32> to vector<1x128xf32>
    %20 = vector.extract_strided_slice %18 {offsets = [0, 0], sizes = [1, 128], strides = [1, 1]} : vector<1x384xf32> to vector<1x128xf32>
    %21 = arith.addf %19, %20 : vector<1x128xf32>
    %22 = arith.negf %21 : vector<1x128xf32>
    %23 = math.exp %22 : vector<1x128xf32>
    %cst_22 = arith.constant 1.000000e+00 : f32
    %24 = vector.broadcast %cst_22 : f32 to vector<1x128xf32>
    %25 = arith.addf %24, %23 : vector<1x128xf32>
    %26 = arith.divf %24, %25 : vector<1x128xf32>
    %27 = vector.extract_strided_slice %14 {offsets = [0, 128], sizes = [1, 128], strides = [1, 1]} : vector<1x384xf32> to vector<1x128xf32>
    %28 = vector.extract_strided_slice %18 {offsets = [0, 128], sizes = [1, 128], strides = [1, 1]} : vector<1x384xf32> to vector<1x128xf32>
    %29 = arith.addf %27, %28 : vector<1x128xf32>
    %30 = arith.negf %29 : vector<1x128xf32>
    %31 = math.exp %30 : vector<1x128xf32>
    %cst_23 = arith.constant 1.000000e+00 : f32
    %32 = vector.broadcast %cst_23 : f32 to vector<1x128xf32>
    %33 = arith.addf %32, %31 : vector<1x128xf32>
    %34 = arith.divf %32, %33 : vector<1x128xf32>
    %35 = vector.extract_strided_slice %14 {offsets = [0, 256], sizes = [1, 128], strides = [1, 1]} : vector<1x384xf32> to vector<1x128xf32>
    %36 = vector.extract_strided_slice %18 {offsets = [0, 256], sizes = [1, 128], strides = [1, 1]} : vector<1x384xf32> to vector<1x128xf32>
    %37 = arith.mulf %26, %36 : vector<1x128xf32>
    %38 = arith.addf %35, %37 : vector<1x128xf32>
    %39 = math.tanh %38 : vector<1x128xf32>
    %40 = arith.subf %12, %39 : vector<1x128xf32>
    %41 = arith.mulf %34, %40 : vector<1x128xf32>
    %42 = arith.addf %39, %41 : vector<1x128xf32>
    %43 = arith.index_cast %c0_i32_15 : i32 to index
    %c0_24 = arith.constant 0 : index
    %44 = vector.load %arg16[%43, %c0_24] : memref<8x128xf32, #tpu.memory_space<vmem>>, vector<1x128xf32>
    tpu.vector_store %arg16[%43, %c0_24], %42 {strides = array<i32>} : memref<8x128xf32, #tpu.memory_space<vmem>>, vector<1x128xf32>,
    %c1_i32_25 = arith.constant 1 : i32
    %45 = arith.index_cast %c1_i32_25 : i32 to index
    %c0_26 = arith.constant 0 : index
    %46 = vector.load %arg15[%45, %c0_26] : memref<8x384xf32, #tpu.memory_space<vmem>>, vector<1x384xf32>
    %c0_27 = arith.constant 0 : index
    %c0_28 = arith.constant 0 : index
    %47 = vector.load %arg6[%c0_27, %c0_28] : memref<128x384xf32, #tpu.memory_space<vmem>>, vector<128x384xf32>
    %cst_29 = arith.constant dense<0.000000e+00> : vector<1x384xf32>
    %48 = tpu.matmul %42, %47, %cst_29 {dimension_numbers = #tpu.dot_dimension_numbers<[1], [0], [0], [1], [0, 0, 1, 1], [], []>} : vector<1x128xf32>, vector<128x384xf32>, vector<1x384xf32> -> vector<1x384xf32>
    %c0_30 = arith.constant 0 : index
    %c0_31 = arith.constant 0 : index
    %49 = vector.load %arg7[%c0_30, %c0_31] : memref<1x384xf32, #tpu.memory_space<vmem>>, vector<1x384xf32>
    %50 = arith.addf %48, %49 : vector<1x384xf32>
    %51 = vector.extract_strided_slice %46 {offsets = [0, 0], sizes = [1, 128], strides = [1, 1]} : vector<1x384xf32> to vector<1x128xf32>
    %52 = vector.extract_strided_slice %50 {offsets = [0, 0], sizes = [1, 128], strides = [1, 1]} : vector<1x384xf32> to vector<1x128xf32>
    %53 = arith.addf %51, %52 : vector<1x128xf32>
    %54 = arith.negf %53 : vector<1x128xf32>
    %55 = math.exp %54 : vector<1x128xf32>
    %cst_32 = arith.constant 1.000000e+00 : f32
    %56 = vector.broadcast %cst_32 : f32 to vector<1x128xf32>
    %57 = arith.addf %56, %55 : vector<1x128xf32>
    %58 = arith.divf %56, %57 : vector<1x128xf32>
    %59 = vector.extract_strided_slice %46 {offsets = [0, 128], sizes = [1, 128], strides = [1, 1]} : vector<1x384xf32> to vector<1x128xf32>
    %60 = vector.extract_strided_slice %50 {offsets = [0, 128], sizes = [1, 128], strides = [1, 1]} : vector<1x384xf32> to vector<1x128xf32>
    %61 = arith.addf %59, %60 : vector<1x128xf32>
    %62 = arith.negf %61 : vector<1x128xf32>
    %63 = math.exp %62 : vector<1x128xf32>
    %cst_33 = arith.constant 1.000000e+00 : f32
    %64 = vector.broadcast %cst_33 : f32 to vector<1x128xf32>
    %65 = arith.addf %64, %63 : vector<1x128xf32>
    %66 = arith.divf %64, %65 : vector<1x128xf32>
    %67 = vector.extract_strided_slice %46 {offsets = [0, 256], sizes = [1, 128], strides = [1, 1]} : vector<1x384xf32> to vector<1x128xf32>
    %68 = vector.extract_strided_slice %50 {offsets = [0, 256], sizes = [1, 128], strides = [1, 1]} : vector<1x384xf32> to vector<1x128xf32>
    %69 = arith.mulf %58, %68 : vector<1x128xf32>
    %70 = arith.addf %67, %69 : vector<1x128xf32>
    %71 = math.tanh %70 : vector<1x128xf32>
    %72 = arith.subf %42, %71 : vector<1x128xf32>
    %73 = arith.mulf %66, %72 : vector<1x128xf32>
    %74 = arith.addf %71, %73 : vector<1x128xf32>
    %75 = arith.index_cast %c1_i32_25 : i32 to index
    %c0_34 = arith.constant 0 : index
    %76 = vector.load %arg16[%75, %c0_34] : memref<8x128xf32, #tpu.memory_space<vmem>>, vector<1x128xf32>
    tpu.vector_store %arg16[%75, %c0_34], %74 {strides = array<i32>} : memref<8x128xf32, #tpu.memory_space<vmem>>, vector<1x128xf32>,
    %c2_i32 = arith.constant 2 : i32
    %77 = arith.index_cast %c2_i32 : i32 to index
    %c0_35 = arith.constant 0 : index
    %78 = vector.load %arg15[%77, %c0_35] : memref<8x384xf32, #tpu.memory_space<vmem>>, vector<1x384xf32>
    %c0_36 = arith.constant 0 : index
    %c0_37 = arith.constant 0 : index
    %79 = vector.load %arg6[%c0_36, %c0_37] : memref<128x384xf32, #tpu.memory_space<vmem>>, vector<128x384xf32>
    %cst_38 = arith.constant dense<0.000000e+00> : vector<1x384xf32>
    %80 = tpu.matmul %74, %79, %cst_38 {dimension_numbers = #tpu.dot_dimension_numbers<[1], [0], [0], [1], [0, 0, 1, 1], [], []>} : vector<1x128xf32>, vector<128x384xf32>, vector<1x384xf32> -> vector<1x384xf32>
    %c0_39 = arith.constant 0 : index
    %c0_40 = arith.constant 0 : index
    %81 = vector.load %arg7[%c0_39, %c0_40] : memref<1x384xf32, #tpu.memory_space<vmem>>, vector<1x384xf32>
    %82 = arith.addf %80, %81 : vector<1x384xf32>
    %83 = vector.extract_strided_slice %78 {offsets = [0, 0], sizes = [1, 128], strides = [1, 1]} : vector<1x384xf32> to vector<1x128xf32>
    %84 = vector.extract_strided_slice %82 {offsets = [0, 0], sizes = [1, 128], strides = [1, 1]} : vector<1x384xf32> to vector<1x128xf32>
    %85 = arith.addf %83, %84 : vector<1x128xf32>
    %86 = arith.negf %85 : vector<1x128xf32>
    %87 = math.exp %86 : vector<1x128xf32>
    %cst_41 = arith.constant 1.000000e+00 : f32
    %88 = vector.broadcast %cst_41 : f32 to vector<1x128xf32>
    %89 = arith.addf %88, %87 : vector<1x128xf32>
    %90 = arith.divf %88, %89 : vector<1x128xf32>
    %91 = vector.extract_strided_slice %78 {offsets = [0, 128], sizes = [1, 128], strides = [1, 1]} : vector<1x384xf32> to vector<1x128xf32>
    %92 = vector.extract_strided_slice %82 {offsets = [0, 128], sizes = [1, 128], strides = [1, 1]} : vector<1x384xf32> to vector<1x128xf32>
    %93 = arith.addf %91, %92 : vector<1x128xf32>
    %94 = arith.negf %93 : vector<1x128xf32>
    %95 = math.exp %94 : vector<1x128xf32>
    %cst_42 = arith.constant 1.000000e+00 : f32
    %96 = vector.broadcast %cst_42 : f32 to vector<1x128xf32>
    %97 = arith.addf %96, %95 : vector<1x128xf32>
    %98 = arith.divf %96, %97 : vector<1x128xf32>
    %99 = vector.extract_strided_slice %78 {offsets = [0, 256], sizes = [1, 128], strides = [1, 1]} : vector<1x384xf32> to vector<1x128xf32>
    %100 = vector.extract_strided_slice %82 {offsets = [0, 256], sizes = [1, 128], strides = [1, 1]} : vector<1x384xf32> to vector<1x128xf32>
    %101 = arith.mulf %90, %100 : vector<1x128xf32>
    %102 = arith.addf %99, %101 : vector<1x128xf32>
    %103 = math.tanh %102 : vector<1x128xf32>
    %104 = arith.subf %74, %103 : vector<1x128xf32>
    %105 = arith.mulf %98, %104 : vector<1x128xf32>
    %106 = arith.addf %103, %105 : vector<1x128xf32>
    %107 = arith.index_cast %c2_i32 : i32 to index
    %c0_43 = arith.constant 0 : index
    %108 = vector.load %arg16[%107, %c0_43] : memref<8x128xf32, #tpu.memory_space<vmem>>, vector<1x128xf32>
    tpu.vector_store %arg16[%107, %c0_43], %106 {strides = array<i32>} : memref<8x128xf32, #tpu.memory_space<vmem>>, vector<1x128xf32>,
    %c3_i32 = arith.constant 3 : i32
    %109 = arith.index_cast %c3_i32 : i32 to index
    %c0_44 = arith.constant 0 : index
    %110 = vector.load %arg15[%109, %c0_44] : memref<8x384xf32, #tpu.memory_space<vmem>>, vector<1x384xf32>
    %c0_45 = arith.constant 0 : index
    %c0_46 = arith.constant 0 : index
    %111 = vector.load %arg6[%c0_45, %c0_46] : memref<128x384xf32, #tpu.memory_space<vmem>>, vector<128x384xf32>
    %cst_47 = arith.constant dense<0.000000e+00> : vector<1x384xf32>
    %112 = tpu.matmul %106, %111, %cst_47 {dimension_numbers = #tpu.dot_dimension_numbers<[1], [0], [0], [1], [0, 0, 1, 1], [], []>} : vector<1x128xf32>, vector<128x384xf32>, vector<1x384xf32> -> vector<1x384xf32>
    %c0_48 = arith.constant 0 : index
    %c0_49 = arith.constant 0 : index
    %113 = vector.load %arg7[%c0_48, %c0_49] : memref<1x384xf32, #tpu.memory_space<vmem>>, vector<1x384xf32>
    %114 = arith.addf %112, %113 : vector<1x384xf32>
    %115 = vector.extract_strided_slice %110 {offsets = [0, 0], sizes = [1, 128], strides = [1, 1]} : vector<1x384xf32> to vector<1x128xf32>
    %116 = vector.extract_strided_slice %114 {offsets = [0, 0], sizes = [1, 128], strides = [1, 1]} : vector<1x384xf32> to vector<1x128xf32>
    %117 = arith.addf %115, %116 : vector<1x128xf32>
    %118 = arith.negf %117 : vector<1x128xf32>
    %119 = math.exp %118 : vector<1x128xf32>
    %cst_50 = arith.constant 1.000000e+00 : f32
    %120 = vector.broadcast %cst_50 : f32 to vector<1x128xf32>
    %121 = arith.addf %120, %119 : vector<1x128xf32>
    %122 = arith.divf %120, %121 : vector<1x128xf32>
    %123 = vector.extract_strided_slice %110 {offsets = [0, 128], sizes = [1, 128], strides = [1, 1]} : vector<1x384xf32> to vector<1x128xf32>
    %124 = vector.extract_strided_slice %114 {offsets = [0, 128], sizes = [1, 128], strides = [1, 1]} : vector<1x384xf32> to vector<1x128xf32>
    %125 = arith.addf %123, %124 : vector<1x128xf32>
    %126 = arith.negf %125 : vector<1x128xf32>
    %127 = math.exp %126 : vector<1x128xf32>
    %cst_51 = arith.constant 1.000000e+00 : f32
    %128 = vector.broadcast %cst_51 : f32 to vector<1x128xf32>
    %129 = arith.addf %128, %127 : vector<1x128xf32>
    %130 = arith.divf %128, %129 : vector<1x128xf32>
    %131 = vector.extract_strided_slice %110 {offsets = [0, 256], sizes = [1, 128], strides = [1, 1]} : vector<1x384xf32> to vector<1x128xf32>
    %132 = vector.extract_strided_slice %114 {offsets = [0, 256], sizes = [1, 128], strides = [1, 1]} : vector<1x384xf32> to vector<1x128xf32>
    %133 = arith.mulf %122, %132 : vector<1x128xf32>
    %134 = arith.addf %131, %133 : vector<1x128xf32>
    %135 = math.tanh %134 : vector<1x128xf32>
    %136 = arith.subf %106, %135 : vector<1x128xf32>
    %137 = arith.mulf %130, %136 : vector<1x128xf32>
    %138 = arith.addf %135, %137 : vector<1x128xf32>
    %139 = arith.index_cast %c3_i32 : i32 to index
    %c0_52 = arith.constant 0 : index
    %140 = vector.load %arg16[%139, %c0_52] : memref<8x128xf32, #tpu.memory_space<vmem>>, vector<1x128xf32>
    tpu.vector_store %arg16[%139, %c0_52], %138 {strides = array<i32>} : memref<8x128xf32, #tpu.memory_space<vmem>>, vector<1x128xf32>,
    %c4_i32 = arith.constant 4 : i32
    %141 = arith.index_cast %c4_i32 : i32 to index
    %c0_53 = arith.constant 0 : index
    %142 = vector.load %arg15[%141, %c0_53] : memref<8x384xf32, #tpu.memory_space<vmem>>, vector<1x384xf32>
    %c0_54 = arith.constant 0 : index
    %c0_55 = arith.constant 0 : index
    %143 = vector.load %arg6[%c0_54, %c0_55] : memref<128x384xf32, #tpu.memory_space<vmem>>, vector<128x384xf32>
    %cst_56 = arith.constant dense<0.000000e+00> : vector<1x384xf32>
    %144 = tpu.matmul %138, %143, %cst_56 {dimension_numbers = #tpu.dot_dimension_numbers<[1], [0], [0], [1], [0, 0, 1, 1], [], []>} : vector<1x128xf32>, vector<128x384xf32>, vector<1x384xf32> -> vector<1x384xf32>
    %c0_57 = arith.constant 0 : index
    %c0_58 = arith.constant 0 : index
    %145 = vector.load %arg7[%c0_57, %c0_58] : memref<1x384xf32, #tpu.memory_space<vmem>>, vector<1x384xf32>
    %146 = arith.addf %144, %145 : vector<1x384xf32>
    %147 = vector.extract_strided_slice %142 {offsets = [0, 0], sizes = [1, 128], strides = [1, 1]} : vector<1x384xf32> to vector<1x128xf32>
    %148 = vector.extract_strided_slice %146 {offsets = [0, 0], sizes = [1, 128], strides = [1, 1]} : vector<1x384xf32> to vector<1x128xf32>
    %149 = arith.addf %147, %148 : vector<1x128xf32>
    %150 = arith.negf %149 : vector<1x128xf32>
    %151 = math.exp %150 : vector<1x128xf32>
    %cst_59 = arith.constant 1.000000e+00 : f32
    %152 = vector.broadcast %cst_59 : f32 to vector<1x128xf32>
    %153 = arith.addf %152, %151 : vector<1x128xf32>
    %154 = arith.divf %152, %153 : vector<1x128xf32>
    %155 = vector.extract_strided_slice %142 {offsets = [0, 128], sizes = [1, 128], strides = [1, 1]} : vector<1x384xf32> to vector<1x128xf32>
    %156 = vector.extract_strided_slice %146 {offsets = [0, 128], sizes = [1, 128], strides = [1, 1]} : vector<1x384xf32> to vector<1x128xf32>
    %157 = arith.addf %155, %156 : vector<1x128xf32>
    %158 = arith.negf %157 : vector<1x128xf32>
    %159 = math.exp %158 : vector<1x128xf32>
    %cst_60 = arith.constant 1.000000e+00 : f32
    %160 = vector.broadcast %cst_60 : f32 to vector<1x128xf32>
    %161 = arith.addf %160, %159 : vector<1x128xf32>
    %162 = arith.divf %160, %161 : vector<1x128xf32>
    %163 = vector.extract_strided_slice %142 {offsets = [0, 256], sizes = [1, 128], strides = [1, 1]} : vector<1x384xf32> to vector<1x128xf32>
    %164 = vector.extract_strided_slice %146 {offsets = [0, 256], sizes = [1, 128], strides = [1, 1]} : vector<1x384xf32> to vector<1x128xf32>
    %165 = arith.mulf %154, %164 : vector<1x128xf32>
    %166 = arith.addf %163, %165 : vector<1x128xf32>
    %167 = math.tanh %166 : vector<1x128xf32>
    %168 = arith.subf %138, %167 : vector<1x128xf32>
    %169 = arith.mulf %162, %168 : vector<1x128xf32>
    %170 = arith.addf %167, %169 : vector<1x128xf32>
    %171 = arith.index_cast %c4_i32 : i32 to index
    %c0_61 = arith.constant 0 : index
    %172 = vector.load %arg16[%171, %c0_61] : memref<8x128xf32, #tpu.memory_space<vmem>>, vector<1x128xf32>
    tpu.vector_store %arg16[%171, %c0_61], %170 {strides = array<i32>} : memref<8x128xf32, #tpu.memory_space<vmem>>, vector<1x128xf32>,
    %c5_i32 = arith.constant 5 : i32
    %173 = arith.index_cast %c5_i32 : i32 to index
    %c0_62 = arith.constant 0 : index
    %174 = vector.load %arg15[%173, %c0_62] : memref<8x384xf32, #tpu.memory_space<vmem>>, vector<1x384xf32>
    %c0_63 = arith.constant 0 : index
    %c0_64 = arith.constant 0 : index
    %175 = vector.load %arg6[%c0_63, %c0_64] : memref<128x384xf32, #tpu.memory_space<vmem>>, vector<128x384xf32>
    %cst_65 = arith.constant dense<0.000000e+00> : vector<1x384xf32>
    %176 = tpu.matmul %170, %175, %cst_65 {dimension_numbers = #tpu.dot_dimension_numbers<[1], [0], [0], [1], [0, 0, 1, 1], [], []>} : vector<1x128xf32>, vector<128x384xf32>, vector<1x384xf32> -> vector<1x384xf32>
    %c0_66 = arith.constant 0 : index
    %c0_67 = arith.constant 0 : index
    %177 = vector.load %arg7[%c0_66, %c0_67] : memref<1x384xf32, #tpu.memory_space<vmem>>, vector<1x384xf32>
    %178 = arith.addf %176, %177 : vector<1x384xf32>
    %179 = vector.extract_strided_slice %174 {offsets = [0, 0], sizes = [1, 128], strides = [1, 1]} : vector<1x384xf32> to vector<1x128xf32>
    %180 = vector.extract_strided_slice %178 {offsets = [0, 0], sizes = [1, 128], strides = [1, 1]} : vector<1x384xf32> to vector<1x128xf32>
    %181 = arith.addf %179, %180 : vector<1x128xf32>
    %182 = arith.negf %181 : vector<1x128xf32>
    %183 = math.exp %182 : vector<1x128xf32>
    %cst_68 = arith.constant 1.000000e+00 : f32
    %184 = vector.broadcast %cst_68 : f32 to vector<1x128xf32>
    %185 = arith.addf %184, %183 : vector<1x128xf32>
    %186 = arith.divf %184, %185 : vector<1x128xf32>
    %187 = vector.extract_strided_slice %174 {offsets = [0, 128], sizes = [1, 128], strides = [1, 1]} : vector<1x384xf32> to vector<1x128xf32>
    %188 = vector.extract_strided_slice %178 {offsets = [0, 128], sizes = [1, 128], strides = [1, 1]} : vector<1x384xf32> to vector<1x128xf32>
    %189 = arith.addf %187, %188 : vector<1x128xf32>
    %190 = arith.negf %189 : vector<1x128xf32>
    %191 = math.exp %190 : vector<1x128xf32>
    %cst_69 = arith.constant 1.000000e+00 : f32
    %192 = vector.broadcast %cst_69 : f32 to vector<1x128xf32>
    %193 = arith.addf %192, %191 : vector<1x128xf32>
    %194 = arith.divf %192, %193 : vector<1x128xf32>
    %195 = vector.extract_strided_slice %174 {offsets = [0, 256], sizes = [1, 128], strides = [1, 1]} : vector<1x384xf32> to vector<1x128xf32>
    %196 = vector.extract_strided_slice %178 {offsets = [0, 256], sizes = [1, 128], strides = [1, 1]} : vector<1x384xf32> to vector<1x128xf32>
    %197 = arith.mulf %186, %196 : vector<1x128xf32>
    %198 = arith.addf %195, %197 : vector<1x128xf32>
    %199 = math.tanh %198 : vector<1x128xf32>
    %200 = arith.subf %170, %199 : vector<1x128xf32>
    %201 = arith.mulf %194, %200 : vector<1x128xf32>
    %202 = arith.addf %199, %201 : vector<1x128xf32>
    %203 = arith.index_cast %c5_i32 : i32 to index
    %c0_70 = arith.constant 0 : index
    %204 = vector.load %arg16[%203, %c0_70] : memref<8x128xf32, #tpu.memory_space<vmem>>, vector<1x128xf32>
    tpu.vector_store %arg16[%203, %c0_70], %202 {strides = array<i32>} : memref<8x128xf32, #tpu.memory_space<vmem>>, vector<1x128xf32>,
    %c6_i32 = arith.constant 6 : i32
    %205 = arith.index_cast %c6_i32 : i32 to index
    %c0_71 = arith.constant 0 : index
    %206 = vector.load %arg15[%205, %c0_71] : memref<8x384xf32, #tpu.memory_space<vmem>>, vector<1x384xf32>
    %c0_72 = arith.constant 0 : index
    %c0_73 = arith.constant 0 : index
    %207 = vector.load %arg6[%c0_72, %c0_73] : memref<128x384xf32, #tpu.memory_space<vmem>>, vector<128x384xf32>
    %cst_74 = arith.constant dense<0.000000e+00> : vector<1x384xf32>
    %208 = tpu.matmul %202, %207, %cst_74 {dimension_numbers = #tpu.dot_dimension_numbers<[1], [0], [0], [1], [0, 0, 1, 1], [], []>} : vector<1x128xf32>, vector<128x384xf32>, vector<1x384xf32> -> vector<1x384xf32>
    %c0_75 = arith.constant 0 : index
    %c0_76 = arith.constant 0 : index
    %209 = vector.load %arg7[%c0_75, %c0_76] : memref<1x384xf32, #tpu.memory_space<vmem>>, vector<1x384xf32>
    %210 = arith.addf %208, %209 : vector<1x384xf32>
    %211 = vector.extract_strided_slice %206 {offsets = [0, 0], sizes = [1, 128], strides = [1, 1]} : vector<1x384xf32> to vector<1x128xf32>
    %212 = vector.extract_strided_slice %210 {offsets = [0, 0], sizes = [1, 128], strides = [1, 1]} : vector<1x384xf32> to vector<1x128xf32>
    %213 = arith.addf %211, %212 : vector<1x128xf32>
    %214 = arith.negf %213 : vector<1x128xf32>
    %215 = math.exp %214 : vector<1x128xf32>
    %cst_77 = arith.constant 1.000000e+00 : f32
    %216 = vector.broadcast %cst_77 : f32 to vector<1x128xf32>
    %217 = arith.addf %216, %215 : vector<1x128xf32>
    %218 = arith.divf %216, %217 : vector<1x128xf32>
    %219 = vector.extract_strided_slice %206 {offsets = [0, 128], sizes = [1, 128], strides = [1, 1]} : vector<1x384xf32> to vector<1x128xf32>
    %220 = vector.extract_strided_slice %210 {offsets = [0, 128], sizes = [1, 128], strides = [1, 1]} : vector<1x384xf32> to vector<1x128xf32>
    %221 = arith.addf %219, %220 : vector<1x128xf32>
    %222 = arith.negf %221 : vector<1x128xf32>
    %223 = math.exp %222 : vector<1x128xf32>
    %cst_78 = arith.constant 1.000000e+00 : f32
    %224 = vector.broadcast %cst_78 : f32 to vector<1x128xf32>
    %225 = arith.addf %224, %223 : vector<1x128xf32>
    %226 = arith.divf %224, %225 : vector<1x128xf32>
    %227 = vector.extract_strided_slice %206 {offsets = [0, 256], sizes = [1, 128], strides = [1, 1]} : vector<1x384xf32> to vector<1x128xf32>
    %228 = vector.extract_strided_slice %210 {offsets = [0, 256], sizes = [1, 128], strides = [1, 1]} : vector<1x384xf32> to vector<1x128xf32>
    %229 = arith.mulf %218, %228 : vector<1x128xf32>
    %230 = arith.addf %227, %229 : vector<1x128xf32>
    %231 = math.tanh %230 : vector<1x128xf32>
    %232 = arith.subf %202, %231 : vector<1x128xf32>
    %233 = arith.mulf %226, %232 : vector<1x128xf32>
    %234 = arith.addf %231, %233 : vector<1x128xf32>
    %235 = arith.index_cast %c6_i32 : i32 to index
    %c0_79 = arith.constant 0 : index
    %236 = vector.load %arg16[%235, %c0_79] : memref<8x128xf32, #tpu.memory_space<vmem>>, vector<1x128xf32>
    tpu.vector_store %arg16[%235, %c0_79], %234 {strides = array<i32>} : memref<8x128xf32, #tpu.memory_space<vmem>>, vector<1x128xf32>,
    %c7_i32 = arith.constant 7 : i32
    %237 = arith.index_cast %c7_i32 : i32 to index
    %c0_80 = arith.constant 0 : index
    %238 = vector.load %arg15[%237, %c0_80] : memref<8x384xf32, #tpu.memory_space<vmem>>, vector<1x384xf32>
    %c0_81 = arith.constant 0 : index
    %c0_82 = arith.constant 0 : index
    %239 = vector.load %arg6[%c0_81, %c0_82] : memref<128x384xf32, #tpu.memory_space<vmem>>, vector<128x384xf32>
    %cst_83 = arith.constant dense<0.000000e+00> : vector<1x384xf32>
    %240 = tpu.matmul %234, %239, %cst_83 {dimension_numbers = #tpu.dot_dimension_numbers<[1], [0], [0], [1], [0, 0, 1, 1], [], []>} : vector<1x128xf32>, vector<128x384xf32>, vector<1x384xf32> -> vector<1x384xf32>
    %c0_84 = arith.constant 0 : index
    %c0_85 = arith.constant 0 : index
    %241 = vector.load %arg7[%c0_84, %c0_85] : memref<1x384xf32, #tpu.memory_space<vmem>>, vector<1x384xf32>
    %242 = arith.addf %240, %241 : vector<1x384xf32>
    %243 = vector.extract_strided_slice %238 {offsets = [0, 0], sizes = [1, 128], strides = [1, 1]} : vector<1x384xf32> to vector<1x128xf32>
    %244 = vector.extract_strided_slice %242 {offsets = [0, 0], sizes = [1, 128], strides = [1, 1]} : vector<1x384xf32> to vector<1x128xf32>
    %245 = arith.addf %243, %244 : vector<1x128xf32>
    %246 = arith.negf %245 : vector<1x128xf32>
    %247 = math.exp %246 : vector<1x128xf32>
    %cst_86 = arith.constant 1.000000e+00 : f32
    %248 = vector.broadcast %cst_86 : f32 to vector<1x128xf32>
    %249 = arith.addf %248, %247 : vector<1x128xf32>
    %250 = arith.divf %248, %249 : vector<1x128xf32>
    %251 = vector.extract_strided_slice %238 {offsets = [0, 128], sizes = [1, 128], strides = [1, 1]} : vector<1x384xf32> to vector<1x128xf32>
    %252 = vector.extract_strided_slice %242 {offsets = [0, 128], sizes = [1, 128], strides = [1, 1]} : vector<1x384xf32> to vector<1x128xf32>
    %253 = arith.addf %251, %252 : vector<1x128xf32>
    %254 = arith.negf %253 : vector<1x128xf32>
    %255 = math.exp %254 : vector<1x128xf32>
    %cst_87 = arith.constant 1.000000e+00 : f32
    %256 = vector.broadcast %cst_87 : f32 to vector<1x128xf32>
    %257 = arith.addf %256, %255 : vector<1x128xf32>
    %258 = arith.divf %256, %257 : vector<1x128xf32>
    %259 = vector.extract_strided_slice %238 {offsets = [0, 256], sizes = [1, 128], strides = [1, 1]} : vector<1x384xf32> to vector<1x128xf32>
    %260 = vector.extract_strided_slice %242 {offsets = [0, 256], sizes = [1, 128], strides = [1, 1]} : vector<1x384xf32> to vector<1x128xf32>
    %261 = arith.mulf %250, %260 : vector<1x128xf32>
    %262 = arith.addf %259, %261 : vector<1x128xf32>
    %263 = math.tanh %262 : vector<1x128xf32>
    %264 = arith.subf %234, %263 : vector<1x128xf32>
    %265 = arith.mulf %258, %264 : vector<1x128xf32>
    %266 = arith.addf %263, %265 : vector<1x128xf32>
    %267 = arith.index_cast %c7_i32 : i32 to index
    %c0_88 = arith.constant 0 : index
    %268 = vector.load %arg16[%267, %c0_88] : memref<8x128xf32, #tpu.memory_space<vmem>>, vector<1x128xf32>
    tpu.vector_store %arg16[%267, %c0_88], %266 {strides = array<i32>} : memref<8x128xf32, #tpu.memory_space<vmem>>, vector<1x128xf32>,
    %c8_i32_89 = arith.constant 8 : i32
    %c0_90 = arith.constant 0 : index
    %c0_91 = arith.constant 0 : index
    %269 = vector.load %arg12[%c0_90, %c0_91] : memref<1x128xf32, #tpu.memory_space<vmem>>, vector<1x128xf32>
    tpu.vector_store %arg12[%c0_90, %c0_91], %266 {strides = array<i32>} : memref<1x128xf32, #tpu.memory_space<vmem>>, vector<1x128xf32>,
    %c0_92 = arith.constant 0 : index
    %c0_93 = arith.constant 0 : index
    %270 = vector.load %arg16[%c0_92, %c0_93] : memref<8x128xf32, #tpu.memory_space<vmem>>, vector<8x128xf32>
    %c0_94 = arith.constant 0 : index
    %c0_95 = arith.constant 0 : index
    %271 = vector.load %arg8[%c0_94, %c0_95] : memref<128x128xf32, #tpu.memory_space<vmem>>, vector<128x128xf32>
    %cst_96 = arith.constant dense<0.000000e+00> : vector<8x128xf32>
    %272 = tpu.matmul %270, %271, %cst_96 {dimension_numbers = #tpu.dot_dimension_numbers<[1], [0], [0], [1], [0, 0, 1, 1], [], []>} : vector<8x128xf32>, vector<128x128xf32>, vector<8x128xf32> -> vector<8x128xf32>
    %c0_97 = arith.constant 0 : index
    %c0_98 = arith.constant 0 : index
    %273 = vector.load %arg9[%c0_97, %c0_98] : memref<1x128xf32, #tpu.memory_space<vmem>>, vector<1x128xf32>
    %274 = vector.broadcast %273 : vector<1x128xf32> to vector<8x128xf32>
    %275 = arith.addf %272, %274 : vector<8x128xf32>
    %c0_99 = arith.constant 0 : index
    %c0_100 = arith.constant 0 : index
    %276 = vector.load %arg11[%c0_99, %c0_100] : memref<8x128xf32, #tpu.memory_space<vmem>>, vector<8x128xf32>
    tpu.vector_store %arg11[%c0_99, %c0_100], %275 {strides = array<i32>} : memref<8x128xf32, #tpu.memory_space<vmem>>, vector<8x128xf32>,
    return
  }
  func.func @transform_0(%arg0: i32, %arg1: memref<16xi32, #tpu.memory_space<smem>>) -> (i32, i32) {
    %c0_i32 = arith.constant 0 : i32
    %c0_i32_0 = arith.constant 0 : i32
    %c0_i32_1 = arith.constant 0 : i32
    return %c0_i32, %c0_i32_0 : i32, i32
  }
  func.func @transform_1(%arg0: i32, %arg1: memref<16xi32, #tpu.memory_space<smem>>) -> (i32, i32) {
    %c0_i32 = arith.constant 0 : i32
    %c0_i32_0 = arith.constant 0 : i32
    %c0_i32_1 = arith.constant 0 : i32
    return %c0_i32, %c0_i32_0 : i32, i32
  }
  func.func @transform_2(%arg0: i32, %arg1: memref<16xi32, #tpu.memory_space<smem>>) -> (i32, i32) {
    %c0_i32 = arith.constant 0 : i32
    %c0_i32_0 = arith.constant 0 : i32
    %c0_i32_1 = arith.constant 0 : i32
    return %c0_i32, %c0_i32_0 : i32, i32
  }
  func.func @transform_3(%arg0: i32, %arg1: memref<16xi32, #tpu.memory_space<smem>>) -> (i32, i32) {
    %c0_i32 = arith.constant 0 : i32
    %c0_i32_0 = arith.constant 0 : i32
    %c0_i32_1 = arith.constant 0 : i32
    return %c0_i32, %c0_i32_0 : i32, i32
  }
  func.func @transform_4(%arg0: i32, %arg1: memref<16xi32, #tpu.memory_space<smem>>) -> (i32, i32) {
    %c0_i32 = arith.constant 0 : i32
    %c0_i32_0 = arith.constant 0 : i32
    %c0_i32_1 = arith.constant 0 : i32
    return %c0_i32, %c0_i32_0 : i32, i32
  }
  func.func @transform_5(%arg0: i32, %arg1: memref<16xi32, #tpu.memory_space<smem>>) -> (i32, i32) {
    %c0_i32 = arith.constant 0 : i32
    %c0_i32_0 = arith.constant 0 : i32
    %c0_i32_1 = arith.constant 0 : i32
    return %c0_i32, %c0_i32_0 : i32, i32
  }
  func.func @transform_6(%arg0: i32, %arg1: memref<16xi32, #tpu.memory_space<smem>>) -> (i32, i32) {
    %c0_i32 = arith.constant 0 : i32
    %c0_i32_0 = arith.constant 0 : i32
    %c0_i32_1 = arith.constant 0 : i32
    return %c0_i32, %c0_i32_0 : i32, i32
  }
  func.func @transform_7(%arg0: i32, %arg1: memref<16xi32, #tpu.memory_space<smem>>) -> (i32, i32) {
    %c0_i32 = arith.constant 0 : i32
    %c0_i32_0 = arith.constant 0 : i32
    %c0_i32_1 = arith.constant 0 : i32
    return %c0_i32, %c0_i32_0 : i32, i32
  }
  func.func @transform_8(%arg0: i32, %arg1: memref<16xi32, #tpu.memory_space<smem>>) -> (i32, i32) {
    %c0_i32 = arith.constant 0 : i32
    %c0_i32_0 = arith.constant 0 : i32
    %c0_i32_1 = arith.constant 0 : i32
    return %c0_i32, %c0_i32_0 : i32, i32
  }
  func.func @transform_9(%arg0: i32, %arg1: memref<16xi32, #tpu.memory_space<smem>>) -> (i32, i32) {
    %c0_i32 = arith.constant 0 : i32
    %c0_i32_0 = arith.constant 0 : i32
    %c0_i32_1 = arith.constant 0 : i32
    return %c0_i32, %c0_i32_0 : i32, i32
  }
  func.func @transform_10(%arg0: i32, %arg1: memref<16xi32, #tpu.memory_space<smem>>) -> (i32, i32) {
    %c0_i32 = arith.constant 0 : i32
    %c0_i32_0 = arith.constant 0 : i32
    %c0_i32_1 = arith.constant 0 : i32
    return %c0_i32, %c0_i32_0 : i32, i32
  }
}

</mosaic_0001>

<llo_original>
// kernel: rnn_decode.1
$region0: #{rnn_decode.1}
  #allocation0 [shape = 'u32[]', space=smem, size = 0x4, offset = 0x4, fixed_abs, tag = 'smem constant byte address 0x4 - core index']
  #allocation1 [shape = 'u32[144,128]{1,0:T(1,128)}', space=vmem, size = 0x12000, scoped, tag = 'internal scratch']
  #allocation2 [shape = 'f32[8,128]{1,0:T(8,128)}', space=vmem, size = 0x1000, scoped, tag = 'scratch operand']
  #allocation3 [shape = 'f32[8,128]{1,0:T(8,128)}', space=vmem, size = 0x1000, scoped, tag = 'scratch operand']
  #allocation4 [shape = 'f32[8,384]{1,0:T(8,128)}', space=vmem, size = 0x3000, scoped, tag = 'scratch operand']
  #allocation5 [shape = 'f32[8,128]{1,0:T(8,128)}', space=vmem, size = 0x1000, scoped, tag = 'scratch operand']
  #allocation6 [shape = 's32[1]{0}', space=sflag, size = 0x4, scoped, tag = 'scoped memory for rnn_decode.1']
  #allocation7 [shape = 'u8[512]{0}', space=smem, size = 0x200, scoped, tag = 'prefetched SMEM operand 0']
  %s0 = inlined_call_operand.vmem [shape: s32[16], index: 0, kind: input, shape index: {}]
  %s1 = inlined_call_operand.hbm [shape: f32[64,128], index: 1, kind: input, shape index: {}]
  %s2 = inlined_call_operand.hbm [shape: f32[128,384], index: 2, kind: input, shape index: {}]
  %s3 = inlined_call_operand.hbm [shape: f32[128,384], index: 3, kind: input, shape index: {}]
  %s4 = inlined_call_operand.vmem [shape: f32[1,384], index: 4, kind: input, shape index: {}]
  %s5 = inlined_call_operand.hbm [shape: f32[128,384], index: 5, kind: input, shape index: {}]
  %s6 = inlined_call_operand.vmem [shape: f32[1,384], index: 6, kind: input, shape index: {}]
  %s7 = inlined_call_operand.hbm [shape: f32[128,128], index: 7, kind: input, shape index: {}]
  %s8 = inlined_call_operand.vmem [shape: f32[1,128], index: 8, kind: input, shape index: {}]
  %s9 = inlined_call_operand.vmem [shape: f32[1,128], index: 9, kind: input, shape index: {}]
  %s10 = inlined_call_operand.hbm [shape: f32[8,128], index: 10, kind: output, shape index: {0}]
  %s11 = inlined_call_operand.vmem [shape: f32[1,128], index: 11, kind: output, shape index: {1}]
  %12 = xla_tuple %s10, %s11
  %s13 = sld [smem:[#allocation0]]
  $region81: #{rnn_decode.1} parent=0
    _
  %s15 = ssub.s32 1, %s13
  %s16 = scalar_select 0, %s15, %s13
  %s17 = sshll.u32 %s0, 4
  %s18 = int_to_ptr.vmem [resolvable:$true] %s17
  %20 = dma.vmem_to_smem %s18, 16, [#allocation7], [#allocation6]
  %21 = dma.done [#allocation6], 16
  %22 = sfence
  $region1: #{rnn_decode.1} parent=0
    #allocation8 [shape = 'u8[32768]{0}', space=vmem, size = 0x8000, scoped, tag = 'input window, operand 1, single buffered']
    #allocation9 [shape = 's32[1]{0}', space=sflag, size = 0x4, scoped, tag = 'scoped memory for rnn_decode.1']
    #allocation10 [shape = 's32[1]{0}', space=sflag, size = 0x4, scoped, tag = 'scoped memory for rnn_decode.1']
    #allocation11 [shape = 'u8[196608]{0}', space=vmem, size = 0x30000, scoped, tag = 'input window, operand 2, single buffered']
    #allocation12 [shape = 's32[1]{0}', space=sflag, size = 0x4, scoped, tag = 'scoped memory for rnn_decode.1']
    #allocation13 [shape = 'u8[196608]{0}', space=vmem, size = 0x30000, scoped, tag = 'input window, operand 3, single buffered']
    #allocation14 [shape = 'u8[196608]{0}', space=vmem, size = 0x30000, scoped, tag = 'input window, operand 5, single buffered']
    #allocation15 [shape = 's32[1]{0}', space=sflag, size = 0x4, scoped, tag = 'scoped memory for rnn_decode.1']
    #allocation16 [shape = 'u8[65536]{0}', space=vmem, size = 0x10000, scoped, tag = 'input window, operand 7, single buffered']
    #allocation17 [shape = 'u8[4096]{0}', space=vmem, size = 0x1000, scoped, tag = 'output window, operand 0, single buffered']
    %23 = vsyncpa [#allocation9], 0
    %24 = vsyncpa [#allocation12], 0
    %25 = vsyncpa [#allocation15], 0
    %26 = vsyncpa [#allocation10], 0
    // Predicated region
    $region2: #{rnn_decode.1} parent=1 // pred_check
      _
    $region3: #{rnn_decode.1} parent=1 // pred_check_branch
      %28 = sbr.rel (0) target = $region5
    $region4: #{rnn_decode.1} parent=1 // pred_region
      %s30 = ssub.s32 1024, 1024
      %31 = vsyncadd [#allocation9], %s30
      %s32 = sshll.u32 [#allocation8], 4
      %s33 = int_to_ptr.vmem [resolvable:$true] %s32
      %38 = dma.hbm_to_vmem [thread:$0]  %s1, 1024, %s33, [#allocation9], 128, 128, 8
    $region5: #{rnn_decode.1} parent=1 // pred_fallthru
      _
    // Predicated region
    $region6: #{rnn_decode.1} parent=1 // pred_check
      _
    $region7: #{rnn_decode.1} parent=1 // pred_check_branch
      %40 = sbr.rel (0) target = $region9
    $region8: #{rnn_decode.1} parent=1 // pred_region
      %s42 = ssub.s32 6144, 6144
      %43 = vsyncadd [#allocation12], %s42
      %s44 = sshll.u32 [#allocation11], 4
      %s45 = int_to_ptr.vmem [resolvable:$true] %s44
      %50 = dma.hbm_to_vmem [thread:$0]  %s2, 6144, %s45, [#allocation12], 384, 384, 24
    $region9: #{rnn_decode.1} parent=1 // pred_fallthru
      _
    // Predicated region
    $region10: #{rnn_decode.1} parent=1 // pred_check
      _
    $region11: #{rnn_decode.1} parent=1 // pred_check_branch
      %52 = sbr.rel (0) target = $region13
    $region12: #{rnn_decode.1} parent=1 // pred_region
      %s54 = ssub.s32 6144, 6144
      %55 = vsyncadd [#allocation12], %s54
      %s56 = sshll.u32 [#allocation13], 4
      %s57 = int_to_ptr.vmem [resolvable:$true] %s56
      %62 = dma.hbm_to_vmem [thread:$0]  %s3, 6144, %s57, [#allocation12], 384, 384, 24
    $region13: #{rnn_decode.1} parent=1 // pred_fallthru
      _
    // Predicated region
    $region14: #{rnn_decode.1} parent=1 // pred_check
      _
    $region15: #{rnn_decode.1} parent=1 // pred_check_branch
      %64 = sbr.rel (0) target = $region17
    $region16: #{rnn_decode.1} parent=1 // pred_region
      _
    $region17: #{rnn_decode.1} parent=1 // pred_fallthru
      _
    // Predicated region
    $region18: #{rnn_decode.1} parent=1 // pred_check
      _
    $region19: #{rnn_decode.1} parent=1 // pred_check_branch
      %66 = sbr.rel (0) target = $region21
    $region20: #{rnn_decode.1} parent=1 // pred_region
      %s68 = ssub.s32 6144, 6144
      %69 = vsyncadd [#allocation15], %s68
      %s70 = sshll.u32 [#allocation14], 4
      %s71 = int_to_ptr.vmem [resolvable:$true] %s70
      %76 = dma.hbm_to_vmem [thread:$0]  %s5, 6144, %s71, [#allocation15], 384, 384, 24
    $region21: #{rnn_decode.1} parent=1 // pred_fallthru
      _
    // Predicated region
    $region22: #{rnn_decode.1} parent=1 // pred_check
      _
    $region23: #{rnn_decode.1} parent=1 // pred_check_branch
      %78 = sbr.rel (0) target = $region25
    $region24: #{rnn_decode.1} parent=1 // pred_region
      _
    $region25: #{rnn_decode.1} parent=1 // pred_fallthru
      _
    // Predicated region
    $region26: #{rnn_decode.1} parent=1 // pred_check
      _
    $region27: #{rnn_decode.1} parent=1 // pred_check_branch
      %80 = sbr.rel (0) target = $region29
    $region28: #{rnn_decode.1} parent=1 // pred_region
      %s82 = ssub.s32 2048, 2048
      %83 = vsyncadd [#allocation15], %s82
      %s84 = sshll.u32 [#allocation16], 4
      %s85 = int_to_ptr.vmem [resolvable:$true] %s84
      %90 = dma.hbm_to_vmem [thread:$0]  %s7, 2048, %s85, [#allocation15], 128, 128, 8
    $region29: #{rnn_decode.1} parent=1 // pred_fallthru
      _
    // Predicated region
    $region30: #{rnn_decode.1} parent=1 // pred_check
      _
    $region31: #{rnn_decode.1} parent=1 // pred_check_branch
      %92 = sbr.rel (0) target = $region33
    $region32: #{rnn_decode.1} parent=1 // pred_region
      _
    $region33: #{rnn_decode.1} parent=1 // pred_fallthru
      _
    // Predicated region
    $region34: #{rnn_decode.1} parent=1 // pred_check
      _
    $region35: #{rnn_decode.1} parent=1 // pred_check_branch
      %94 = sbr.rel (0) target = $region37
    $region36: #{rnn_decode.1} parent=1 // pred_region
      _
    $region37: #{rnn_decode.1} parent=1 // pred_fallthru
      _
    // Predicated region
    $region38: #{rnn_decode.1} parent=1 // pred_check
      _
    $region39: #{rnn_decode.1} parent=1 // pred_check_branch
      %96 = sbr.rel (0) target = $region41
    $region40: #{rnn_decode.1} parent=1 // pred_region
      %97 = dma.done [#allocation9], 1024
    $region41: #{rnn_decode.1} parent=1 // pred_fallthru
      _
    // Predicated region
    $region42: #{rnn_decode.1} parent=1 // pred_check
      _
    $region43: #{rnn_decode.1} parent=1 // pred_check_branch
      %99 = sbr.rel (0) target = $region45
    $region44: #{rnn_decode.1} parent=1 // pred_region
      %100 = dma.done [#allocation12], 6144
    $region45: #{rnn_decode.1} parent=1 // pred_fallthru
      _
    // Predicated region
    $region46: #{rnn_decode.1} parent=1 // pred_check
      _
    $region47: #{rnn_decode.1} parent=1 // pred_check_branch
      %102 = sbr.rel (0) target = $region49
    $region48: #{rnn_decode.1} parent=1 // pred_region
      %103 = dma.done [#allocation12], 6144
    $region49: #{rnn_decode.1} parent=1 // pred_fallthru
      _
    // Predicated region
    $region50: #{rnn_decode.1} parent=1 // pred_check
      _
    $region51: #{rnn_decode.1} parent=1 // pred_check_branch
      %105 = sbr.rel (0) target = $region53
    $region52: #{rnn_decode.1} parent=1 // pred_region
      %106 = dma.done [#allocation15], 6144
    $region53: #{rnn_decode.1} parent=1 // pred_fallthru
      _
    // Predicated region
    $region54: #{rnn_decode.1} parent=1 // pred_check
      _
    $region55: #{rnn_decode.1} parent=1 // pred_check_branch
      %108 = sbr.rel (0) target = $region57
    $region56: #{rnn_decode.1} parent=1 // pred_region
      %109 = dma.done [#allocation15], 2048
    $region57: #{rnn_decode.1} parent=1 // pred_fallthru
      _
    loop: start=0, step=1, limit=8
    $region58: #{rnn_decode.1} parent=1 // loop_pre_header
      _
    $region59: #{rnn_decode.1} parent=1 // loop_header
      %s111 = sphi 0, %s115
      %p112 = scmp.ge.s32.totalorder %s111, 8
    $region60: #{rnn_decode.1} parent=1 // loop_header_branch
      %114 = sbr.rel (%p112) target = $region64
    $region61: #{rnn_decode.1} parent=1 // loop_body
      %s116 = smul.u32 %s111, 2
      %s117 = sld [smem:[#allocation7 + %s116]]
      %s118 = scalar_lea.vmem [#allocation8], %s117
      %v119 = vld [vmem:[%s118] sm:$0x1]
      %s120 = scalar_lea.vmem [#allocation2], %s111
      %121 = vst [vmem:[%s120] sm:$0x1] %v119
      %s122 = sadd.s32 %s116, 1
      %s123 = sld [smem:[#allocation7 + %s122]]
      %s124 = scalar_lea.vmem [#allocation8], %s123
      %v125 = vld [vmem:[%s124] sm:$0x1]
      %s126 = scalar_lea.vmem [#allocation3], %s111
      %127 = vst [vmem:[%s126] sm:$0x1] %v125
    $region62: #{rnn_decode.1} parent=1 // loop_footer
      %s115 = sadd.s32 1, %s111
    $region63: #{rnn_decode.1} parent=1 // loop_footer_branch
      %110 = sbr.rel target = $region59
    $region64: #{rnn_decode.1} parent=1 // loop_exit
      _
    %v128 = vld [vmem:[#allocation2] sm:$0xff]
    %v129 = vld [vmem:[#allocation11] sm:$0xff]
    %v130 = vld [vmem:[#allocation11 + $0x8] sm:$0xff]
    %v131 = vld [vmem:[#allocation11 + $0x10] sm:$0xff]
    %v132 = vld [vmem:[#allocation11 + $0x18] sm:$0xff]
    %v133 = vld [vmem:[#allocation11 + $0x20] sm:$0xff]
    %v134 = vld [vmem:[#allocation11 + $0x28] sm:$0xff]
    %v135 = vld [vmem:[#allocation11 + $0x30] sm:$0xff]
    %v136 = vld [vmem:[#allocation11 + $0x38] sm:$0xff]
    %v137 = vld [vmem:[#allocation11 + $0x40] sm:$0xff]
    %v138 = vld [vmem:[#allocation11 + $0x48] sm:$0xff]
    %v139 = vld [vmem:[#allocation11 + $0x50] sm:$0xff]
    %v140 = vld [vmem:[#allocation11 + $0x58] sm:$0xff]
    %v141 = vld [vmem:[#allocation11 + $0x60] sm:$0xff]
    %v142 = vld [vmem:[#allocation11 + $0x68] sm:$0xff]
    %v143 = vld [vmem:[#allocation11 + $0x70] sm:$0xff]
    %v144 = vld [vmem:[#allocation11 + $0x78] sm:$0xff]
    %v145 = vld [vmem:[#allocation11 + $0x80] sm:$0xff]
    %v146 = vld [vmem:[#allocation11 + $0x88] sm:$0xff]
    %v147 = vld [vmem:[#allocation11 + $0x90] sm:$0xff]
    %v148 = vld [vmem:[#allocation11 + $0x98] sm:$0xff]
    %v149 = vld [vmem:[#allocation11 + $0xa0] sm:$0xff]
    %v150 = vld [vmem:[#allocation11 + $0xa8] sm:$0xff]
    %v151 = vld [vmem:[#allocation11 + $0xb0] sm:$0xff]
    %v152 = vld [vmem:[#allocation11 + $0xb8] sm:$0xff]
    %v153 = vld [vmem:[#allocation11 + $0xc0] sm:$0xff]
    %v154 = vld [vmem:[#allocation11 + $0xc8] sm:$0xff]
    %v155 = vld [vmem:[#allocation11 + $0xd0] sm:$0xff]
    %v156 = vld [vmem:[#allocation11 + $0xd8] sm:$0xff]
    %v157 = vld [vmem:[#allocation11 + $0xe0] sm:$0xff]
    %v158 = vld [vmem:[#allocation11 + $0xe8] sm:$0xff]
    %v159 = vld [vmem:[#allocation11 + $0xf0] sm:$0xff]
    %v160 = vld [vmem:[#allocation11 + $0xf8] sm:$0xff]
    %v161 = vld [vmem:[#allocation11 + $0x100] sm:$0xff]
    %v162 = vld [vmem:[#allocation11 + $0x108] sm:$0xff]
    %v163 = vld [vmem:[#allocation11 + $0x110] sm:$0xff]
    %v164 = vld [vmem:[#allocation11 + $0x118] sm:$0xff]
    %v165 = vld [vmem:[#allocation11 + $0x120] sm:$0xff]
    %v166 = vld [vmem:[#allocation11 + $0x128] sm:$0xff]
    %v167 = vld [vmem:[#allocation11 + $0x130] sm:$0xff]
    %v168 = vld [vmem:[#allocation11 + $0x138] sm:$0xff]
    %v169 = vld [vmem:[#allocation11 + $0x140] sm:$0xff]
    %v170 = vld [vmem:[#allocation11 + $0x148] sm:$0xff]
    %v171 = vld [vmem:[#allocation11 + $0x150] sm:$0xff]
    %v172 = vld [vmem:[#allocation11 + $0x158] sm:$0xff]
    %v173 = vld [vmem:[#allocation11 + $0x160] sm:$0xff]
    %v174 = vld [vmem:[#allocation11 + $0x168] sm:$0xff]
    %v175 = vld [vmem:[#allocation11 + $0x170] sm:$0xff]
    %v176 = vld [vmem:[#allocation11 + $0x178] sm:$0xff]
    %v177 = vld [vmem:[#allocation3] sm:$0xff]
    %v178 = vld [vmem:[#allocation13] sm:$0xff]
    %v179 = vld [vmem:[#allocation13 + $0x8] sm:$0xff]
    %v180 = vld [vmem:[#allocation13 + $0x10] sm:$0xff]
    %v181 = vld [vmem:[#allocation13 + $0x18] sm:$0xff]
    %v182 = vld [vmem:[#allocation13 + $0x20] sm:$0xff]
    %v183 = vld [vmem:[#allocation13 + $0x28] sm:$0xff]
    %v184 = vld [vmem:[#allocation13 + $0x30] sm:$0xff]
    %v185 = vld [vmem:[#allocation13 + $0x38] sm:$0xff]
    %v186 = vld [vmem:[#allocation13 + $0x40] sm:$0xff]
    %v187 = vld [vmem:[#allocation13 + $0x48] sm:$0xff]
    %v188 = vld [vmem:[#allocation13 + $0x50] sm:$0xff]
    %v189 = vld [vmem:[#allocation13 + $0x58] sm:$0xff]
    %v190 = vld [vmem:[#allocation13 + $0x60] sm:$0xff]
    %v191 = vld [vmem:[#allocation13 + $0x68] sm:$0xff]
    %v192 = vld [vmem:[#allocation13 + $0x70] sm:$0xff]
    %v193 = vld [vmem:[#allocation13 + $0x78] sm:$0xff]
    %v194 = vld [vmem:[#allocation13 + $0x80] sm:$0xff]
    %v195 = vld [vmem:[#allocation13 + $0x88] sm:$0xff]
    %v196 = vld [vmem:[#allocation13 + $0x90] sm:$0xff]
    %v197 = vld [vmem:[#allocation13 + $0x98] sm:$0xff]
    %v198 = vld [vmem:[#allocation13 + $0xa0] sm:$0xff]
    %v199 = vld [vmem:[#allocation13 + $0xa8] sm:$0xff]
    %v200 = vld [vmem:[#allocation13 + $0xb0] sm:$0xff]
    %v201 = vld [vmem:[#allocation13 + $0xb8] sm:$0xff]
    %v202 = vld [vmem:[#allocation13 + $0xc0] sm:$0xff]
    %v203 = vld [vmem:[#allocation13 + $0xc8] sm:$0xff]
    %v204 = vld [vmem:[#allocation13 + $0xd0] sm:$0xff]
    %v205 = vld [vmem:[#allocation13 + $0xd8] sm:$0xff]
    %v206 = vld [vmem:[#allocation13 + $0xe0] sm:$0xff]
    %v207 = vld [vmem:[#allocation13 + $0xe8] sm:$0xff]
    %v208 = vld [vmem:[#allocation13 + $0xf0] sm:$0xff]
    %v209 = vld [vmem:[#allocation13 + $0xf8] sm:$0xff]
    %v210 = vld [vmem:[#allocation13 + $0x100] sm:$0xff]
    %v211 = vld [vmem:[#allocation13 + $0x108] sm:$0xff]
    %v212 = vld [vmem:[#allocation13 + $0x110] sm:$0xff]
    %v213 = vld [vmem:[#allocation13 + $0x118] sm:$0xff]
    %v214 = vld [vmem:[#allocation13 + $0x120] sm:$0xff]
    %v215 = vld [vmem:[#allocation13 + $0x128] sm:$0xff]
    %v216 = vld [vmem:[#allocation13 + $0x130] sm:$0xff]
    %v217 = vld [vmem:[#allocation13 + $0x138] sm:$0xff]
    %v218 = vld [vmem:[#allocation13 + $0x140] sm:$0xff]
    %v219 = vld [vmem:[#allocation13 + $0x148] sm:$0xff]
    %v220 = vld [vmem:[#allocation13 + $0x150] sm:$0xff]
    %v221 = vld [vmem:[#allocation13 + $0x158] sm:$0xff]
    %v222 = vld [vmem:[#allocation13 + $0x160] sm:$0xff]
    %v223 = vld [vmem:[#allocation13 + $0x168] sm:$0xff]
    %v224 = vld [vmem:[#allocation13 + $0x170] sm:$0xff]
    %v225 = vld [vmem:[#allocation13 + $0x178] sm:$0xff]
    %226 = vmatprep.subr.mxu0 %v179
    %227 = vmatpush1.msra.mxu0 %v178
    %228 = vmatprep.subr.mxu0 %v182
    %229 = vmatpush1.msra.mxu0 %v181
    %230 = vmatprep.subr.mxu0 %v185
    %231 = vmatpush1.msra.mxu0 %v184
    %232 = vmatprep.subr.mxu0 %v188
    %233 = vmatpush1.msra.mxu0 %v187
    %234 = vmatprep.subr.mxu0 %v191
    %235 = vmatpush1.msra.mxu0 %v190
    %236 = vmatprep.subr.mxu0 %v194
    %237 = vmatpush1.msra.mxu0 %v193
    %238 = vmatprep.subr.mxu0 %v197
    %239 = vmatpush1.msra.mxu0 %v196
    %240 = vmatprep.subr.mxu0 %v200
    %241 = vmatpush1.msra.mxu0 %v199
    %242 = vmatprep.subr.mxu0 %v203
    %243 = vmatpush1.msra.mxu0 %v202
    %244 = vmatprep.subr.mxu0 %v206
    %245 = vmatpush1.msra.mxu0 %v205
    %246 = vmatprep.subr.mxu0 %v209
    %247 = vmatpush1.msra.mxu0 %v208
    %248 = vmatprep.subr.mxu0 %v212
    %249 = vmatpush1.msra.mxu0 %v211
    %250 = vmatprep.subr.mxu0 %v215
    %251 = vmatpush1.msra.mxu0 %v214
    %252 = vmatprep.subr.mxu0 %v218
    %253 = vmatpush1.msra.mxu0 %v217
    %254 = vmatprep.subr.mxu0 %v221
    %255 = vmatpush1.msra.mxu0 %v220
    %256 = vmatprep.subr.mxu0 %v224
    %257 = vmatpush1.msra.mxu0 %v223
    %258 = vmatprep.subr.mxu0 0.0
    %259 = vmatpush1.msra.mxu0 0.0
    %260 = vmatprep.subr.mxu0 0.0
    %261 = vmatpush1.msra.mxu0 0.0
    %262 = vmatprep.subr.mxu0 0.0
    %263 = vmatpush1.msra.mxu0 0.0
    %264 = vmatprep.subr.mxu0 0.0
    %265 = vmatpush1.msra.mxu0 0.0
    %266 = vmatprep.subr.mxu0 0.0
    %267 = vmatpush1.msra.mxu0 0.0
    %268 = vmatprep.subr.mxu0 0.0
    %269 = vmatpush1.msra.mxu0 0.0
    %270 = vmatprep.subr.mxu0 0.0
    %271 = vmatpush1.msra.mxu0 0.0
    %272 = vmatprep.subr.mxu0 0.0
    %273 = vmatpush1.msra.mxu0 0.0
    %274 = vmatprep.subr.mxu0 0.0
    %275 = vmatpush1.msra.mxu0 0.0
    %276 = vmatprep.subr.mxu0 0.0
    %277 = vmatpush1.msra.mxu0 0.0
    %278 = vmatprep.subr.mxu0 0.0
    %279 = vmatpush1.msra.mxu0 0.0
    %280 = vmatprep.subr.mxu0 0.0
    %281 = vmatpush1.msra.mxu0 0.0
    %282 = vmatprep.subr.mxu0 0.0
    %283 = vmatpush1.msra.mxu0 0.0
    %284 = vmatprep.subr.mxu0 0.0
    %285 = vmatpush1.msra.mxu0 0.0
    %286 = vmatprep.subr.mxu0 0.0
    %287 = vmatpush1.msra.mxu0 0.0
    %288 = vmatprep.subr.mxu0 0.0
    %289 = vmatpush1.msra.mxu0 0.0
    %290 = vmatprep.mubr.f32.mxu0 0.0
    %291 = vmatmul.mubr.f32.gmra.mrb[0].mxu0 %v177
    %v292 = vpop.f32.mrb[0].mxu0
    %v293 = vadd.f32 0.0, %v292
    %v294 = vpop.f32.mrb[0].mxu0
    %v295 = vadd.f32 0.0, %v294
    %296 = vdwg.mxu0
    %297 = vmatprep.subr.mxu0 0.0
    %298 = vmatpush1.msra.mxu0 %v180
    %299 = vmatprep.subr.mxu0 0.0
    %300 = vmatpush1.msra.mxu0 %v183
    %301 = vmatprep.subr.mxu0 0.0
    %302 = vmatpush1.msra.mxu0 %v186
    %303 = vmatprep.subr.mxu0 0.0
    %304 = vmatpush1.msra.mxu0 %v189
    %305 = vmatprep.subr.mxu0 0.0
    %306 = vmatpush1.msra.mxu0 %v192
    %307 = vmatprep.subr.mxu0 0.0
    %308 = vmatpush1.msra.mxu0 %v195
    %309 = vmatprep.subr.mxu0 0.0
    %310 = vmatpush1.msra.mxu0 %v198
    %311 = vmatprep.subr.mxu0 0.0
    %312 = vmatpush1.msra.mxu0 %v201
    %313 = vmatprep.subr.mxu0 0.0
    %314 = vmatpush1.msra.mxu0 %v204
    %315 = vmatprep.subr.mxu0 0.0
    %316 = vmatpush1.msra.mxu0 %v207
    %317 = vmatprep.subr.mxu0 0.0
    %318 = vmatpush1.msra.mxu0 %v210
    %319 = vmatprep.subr.mxu0 0.0
    %320 = vmatpush1.msra.mxu0 %v213
    %321 = vmatprep.subr.mxu0 0.0
    %322 = vmatpush1.msra.mxu0 %v216
    %323 = vmatprep.subr.mxu0 0.0
    %324 = vmatpush1.msra.mxu0 %v219
    %325 = vmatprep.subr.mxu0 0.0
    %326 = vmatpush1.msra.mxu0 %v222
    %327 = vmatprep.subr.mxu0 0.0
    %328 = vmatpush1.msra.mxu0 %v225
    %329 = vmatprep.subr.mxu0 0.0
    %330 = vmatpush1.msra.mxu0 0.0
    %331 = vmatprep.subr.mxu0 0.0
    %332 = vmatpush1.msra.mxu0 0.0
    %333 = vmatprep.subr.mxu0 0.0
    %334 = vmatpush1.msra.mxu0 0.0
    %335 = vmatprep.subr.mxu0 0.0
    %336 = vmatpush1.msra.mxu0 0.0
    %337 = vmatprep.subr.mxu0 0.0
    %338 = vmatpush1.msra.mxu0 0.0
    %339 = vmatprep.subr.mxu0 0.0
    %340 = vmatpush1.msra.mxu0 0.0
    %341 = vmatprep.subr.mxu0 0.0
    %342 = vmatpush1.msra.mxu0 0.0
    %343 = vmatprep.subr.mxu0 0.0
    %344 = vmatpush1.msra.mxu0 0.0
    %345 = vmatprep.subr.mxu0 0.0
    %346 = vmatpush1.msra.mxu0 0.0
    %347 = vmatprep.subr.mxu0 0.0
    %348 = vmatpush1.msra.mxu0 0.0
    %349 = vmatprep.subr.mxu0 0.0
    %350 = vmatpush1.msra.mxu0 0.0
    %351 = vmatprep.subr.mxu0 0.0
    %352 = vmatpush1.msra.mxu0 0.0
    %353 = vmatprep.subr.mxu0 0.0
    %354 = vmatpush1.msra.mxu0 0.0
    %355 = vmatprep.subr.mxu0 0.0
    %356 = vmatpush1.msra.mxu0 0.0
    %357 = vmatprep.subr.mxu0 0.0
    %358 = vmatpush1.msra.mxu0 0.0
    %359 = vmatprep.subr.mxu0 0.0
    %360 = vmatpush1.msra.mxu0 0.0
    %361 = vmatprep.mubr.f32.mxu0 0.0
    %362 = vmatmul.mubr.f32.gmra.mrb[0].mxu0 %v177
    %v363 = vpop.f32.mrb[0].mxu0
    %v364 = vadd.f32 0.0, %v363
    %v365 = vpop.f32.mrb[0].mxu0
    %366 = vdwg.mxu0
    %367 = vmatprep.subr.mxu0 %v130
    %368 = vmatpush1.msra.mxu0 %v129
    %369 = vmatprep.subr.mxu0 %v133
    %370 = vmatpush1.msra.mxu0 %v132
    %371 = vmatprep.subr.mxu0 %v136
    %372 = vmatpush1.msra.mxu0 %v135
    %373 = vmatprep.subr.mxu0 %v139
    %374 = vmatpush1.msra.mxu0 %v138
    %375 = vmatprep.subr.mxu0 %v142
    %376 = vmatpush1.msra.mxu0 %v141
    %377 = vmatprep.subr.mxu0 %v145
    %378 = vmatpush1.msra.mxu0 %v144
    %379 = vmatprep.subr.mxu0 %v148
    %380 = vmatpush1.msra.mxu0 %v147
    %381 = vmatprep.subr.mxu0 %v151
    %382 = vmatpush1.msra.mxu0 %v150
    %383 = vmatprep.subr.mxu0 %v154
    %384 = vmatpush1.msra.mxu0 %v153
    %385 = vmatprep.subr.mxu0 %v157
    %386 = vmatpush1.msra.mxu0 %v156
    %387 = vmatprep.subr.mxu0 %v160
    %388 = vmatpush1.msra.mxu0 %v159
    %389 = vmatprep.subr.mxu0 %v163
    %390 = vmatpush1.msra.mxu0 %v162
    %391 = vmatprep.subr.mxu0 %v166
    %392 = vmatpush1.msra.mxu0 %v165
    %393 = vmatprep.subr.mxu0 %v169
    %394 = vmatpush1.msra.mxu0 %v168
    %395 = vmatprep.subr.mxu0 %v172
    %396 = vmatpush1.msra.mxu0 %v171
    %397 = vmatprep.subr.mxu0 %v175
    %398 = vmatpush1.msra.mxu0 %v174
    %399 = vmatprep.subr.mxu0 0.0
    %400 = vmatpush1.msra.mxu0 0.0
    %401 = vmatprep.subr.mxu0 0.0
    %402 = vmatpush1.msra.mxu0 0.0
    %403 = vmatprep.subr.mxu0 0.0
    %404 = vmatpush1.msra.mxu0 0.0
    %405 = vmatprep.subr.mxu0 0.0
    %406 = vmatpush1.msra.mxu0 0.0
    %407 = vmatprep.subr.mxu0 0.0
    %408 = vmatpush1.msra.mxu0 0.0
    %409 = vmatprep.subr.mxu0 0.0
    %410 = vmatpush1.msra.mxu0 0.0
    %411 = vmatprep.subr.mxu0 0.0
    %412 = vmatpush1.msra.mxu0 0.0
    %413 = vmatprep.subr.mxu0 0.0
    %414 = vmatpush1.msra.mxu0 0.0
    %415 = vmatprep.subr.mxu0 0.0
    %416 = vmatpush1.msra.mxu0 0.0
    %417 = vmatprep.subr.mxu0 0.0
    %418 = vmatpush1.msra.mxu0 0.0
    %419 = vmatprep.subr.mxu0 0.0
    %420 = vmatpush1.msra.mxu0 0.0
    %421 = vmatprep.subr.mxu0 0.0
    %422 = vmatpush1.msra.mxu0 0.0
    %423 = vmatprep.subr.mxu0 0.0
    %424 = vmatpush1.msra.mxu0 0.0
    %425 = vmatprep.subr.mxu0 0.0
    %426 = vmatpush1.msra.mxu0 0.0
    %427 = vmatprep.subr.mxu0 0.0
    %428 = vmatpush1.msra.mxu0 0.0
    %429 = vmatprep.subr.mxu0 0.0
    %430 = vmatpush1.msra.mxu0 0.0
    %431 = vmatprep.mubr.f32.mxu0 0.0
    %432 = vmatmul.mubr.f32.gmra.mrb[0].mxu0 %v128
    %v433 = vpop.f32.mrb[0].mxu0
    %v434 = vadd.f32 %v293, %v433
    %v435 = vpop.f32.mrb[0].mxu0
    %v436 = vadd.f32 %v295, %v435
    %437 = vdwg.mxu0
    %438 = vmatprep.subr.mxu0 0.0
    %439 = vmatpush1.msra.mxu0 %v131
    %440 = vmatprep.subr.mxu0 0.0
    %441 = vmatpush1.msra.mxu0 %v134
    %442 = vmatprep.subr.mxu0 0.0
    %443 = vmatpush1.msra.mxu0 %v137
    %444 = vmatprep.subr.mxu0 0.0
    %445 = vmatpush1.msra.mxu0 %v140
    %446 = vmatprep.subr.mxu0 0.0
    %447 = vmatpush1.msra.mxu0 %v143
    %448 = vmatprep.subr.mxu0 0.0
    %449 = vmatpush1.msra.mxu0 %v146
    %450 = vmatprep.subr.mxu0 0.0
    %451 = vmatpush1.msra.mxu0 %v149
    %452 = vmatprep.subr.mxu0 0.0
    %453 = vmatpush1.msra.mxu0 %v152
    %454 = vmatprep.subr.mxu0 0.0
    %455 = vmatpush1.msra.mxu0 %v155
    %456 = vmatprep.subr.mxu0 0.0
    %457 = vmatpush1.msra.mxu0 %v158
    %458 = vmatprep.subr.mxu0 0.0
    %459 = vmatpush1.msra.mxu0 %v161
    %460 = vmatprep.subr.mxu0 0.0
    %461 = vmatpush1.msra.mxu0 %v164
    %462 = vmatprep.subr.mxu0 0.0
    %463 = vmatpush1.msra.mxu0 %v167
    %464 = vmatprep.subr.mxu0 0.0
    %465 = vmatpush1.msra.mxu0 %v170
    %466 = vmatprep.subr.mxu0 0.0
    %467 = vmatpush1.msra.mxu0 %v173
    %468 = vmatprep.subr.mxu0 0.0
    %469 = vmatpush1.msra.mxu0 %v176
    %470 = vmatprep.subr.mxu0 0.0
    %471 = vmatpush1.msra.mxu0 0.0
    %472 = vmatprep.subr.mxu0 0.0
    %473 = vmatpush1.msra.mxu0 0.0
    %474 = vmatprep.subr.mxu0 0.0
    %475 = vmatpush1.msra.mxu0 0.0
    %476 = vmatprep.subr.mxu0 0.0
    %477 = vmatpush1.msra.mxu0 0.0
    %478 = vmatprep.subr.mxu0 0.0
    %479 = vmatpush1.msra.mxu0 0.0
    %480 = vmatprep.subr.mxu0 0.0
    %481 = vmatpush1.msra.mxu0 0.0
    %482 = vmatprep.subr.mxu0 0.0
    %483 = vmatpush1.msra.mxu0 0.0
    %484 = vmatprep.subr.mxu0 0.0
    %485 = vmatpush1.msra.mxu0 0.0
    %486 = vmatprep.subr.mxu0 0.0
    %487 = vmatpush1.msra.mxu0 0.0
    %488 = vmatprep.subr.mxu0 0.0
    %489 = vmatpush1.msra.mxu0 0.0
    %490 = vmatprep.subr.mxu0 0.0
    %491 = vmatpush1.msra.mxu0 0.0
    %492 = vmatprep.subr.mxu0 0.0
    %493 = vmatpush1.msra.mxu0 0.0
    %494 = vmatprep.subr.mxu0 0.0
    %495 = vmatpush1.msra.mxu0 0.0
    %496 = vmatprep.subr.mxu0 0.0
    %497 = vmatpush1.msra.mxu0 0.0
    %498 = vmatprep.subr.mxu0 0.0
    %499 = vmatpush1.msra.mxu0 0.0
    %500 = vmatprep.subr.mxu0 0.0
    %501 = vmatpush1.msra.mxu0 0.0
    %502 = vmatprep.mubr.f32.mxu0 0.0
    %503 = vmatmul.mubr.f32.gmra.mrb[0].mxu0 %v128
    %v504 = vpop.f32.mrb[0].mxu0
    %v505 = vadd.f32 %v364, %v504
    %v506 = vpop.f32.mrb[0].mxu0
    %507 = vdwg.mxu0
    %v508 = vld [vmem:[%s4] sm:$0x7]
    %v510 = vlaneseq
    %v511 = vshrl.u32 %v510, 7
    %v512 = vsub.s32 0, %v511
    %v513 = vrot.slane %v508, %v512
    %v514 = vlaneseq
    %v515 = vshrl.u32 %v514, 7
    %v516 = vsub.s32 1, %v515
    %v517 = vrot.slane %v508, %v516
    %v518 = vlaneseq
    %v519 = vshrl.u32 %v518, 7
    %v520 = vsub.s32 2, %v519
    %v521 = vrot.slane %v508, %v520
    %v525 = vadd.f32 %v434, %v513
    %v526 = vadd.f32 %v436, %v517
    %v527 = vadd.f32 %v505, %v521
    %528 = vst [vmem:[#allocation4] sm:$0xff] %v525
    %529 = vst [vmem:[#allocation4 + $0x8] sm:$0xff] %v526
    %530 = vst [vmem:[#allocation4 + $0x10] sm:$0xff] %v527
    %v531 = vld [vmem:[%s9] sm:$0x1]
    %v532 = vld [vmem:[#allocation4] ss:$8 sm:$0x7]
    %v533 = vld [vmem:[#allocation14] sm:$0xff]
    %v534 = vld [vmem:[#allocation14 + $0x8] sm:$0xff]
    %v535 = vld [vmem:[#allocation14 + $0x10] sm:$0xff]
    %v536 = vld [vmem:[#allocation14 + $0x18] sm:$0xff]
    %v537 = vld [vmem:[#allocation14 + $0x20] sm:$0xff]
    %v538 = vld [vmem:[#allocation14 + $0x28] sm:$0xff]
    %v539 = vld [vmem:[#allocation14 + $0x30] sm:$0xff]
    %v540 = vld [vmem:[#allocation14 + $0x38] sm:$0xff]
    %v541 = vld [vmem:[#allocation14 + $0x40] sm:$0xff]
    %v542 = vld [vmem:[#allocation14 + $0x48] sm:$0xff]
    %v543 = vld [vmem:[#allocation14 + $0x50] sm:$0xff]
    %v544 = vld [vmem:[#allocation14 + $0x58] sm:$0xff]
    %v545 = vld [vmem:[#allocation14 + $0x60] sm:$0xff]
    %v546 = vld [vmem:[#allocation14 + $0x68] sm:$0xff]
    %v547 = vld [vmem:[#allocation14 + $0x70] sm:$0xff]
    %v548 = vld [vmem:[#allocation14 + $0x78] sm:$0xff]
    %v549 = vld [vmem:[#allocation14 + $0x80] sm:$0xff]
    %v550 = vld [vmem:[#allocation14 + $0x88] sm:$0xff]
    %v551 = vld [vmem:[#allocation14 + $0x90] sm:$0xff]
    %v552 = vld [vmem:[#allocation14 + $0x98] sm:$0xff]
    %v553 = vld [vmem:[#allocation14 + $0xa0] sm:$0xff]
    %v554 = vld [vmem:[#allocation14 + $0xa8] sm:$0xff]
    %v555 = vld [vmem:[#allocation14 + $0xb0] sm:$0xff]
    %v556 = vld [vmem:[#allocation14 + $0xb8] sm:$0xff]
    %v557 = vld [vmem:[#allocation14 + $0xc0] sm:$0xff]
    %v558 = vld [vmem:[#allocation14 + $0xc8] sm:$0xff]
    %v559 = vld [vmem:[#allocation14 + $0xd0] sm:$0xff]
    %v560 = vld [vmem:[#allocation14 + $0xd8] sm:$0xff]
    %v561 = vld [vmem:[#allocation14 + $0xe0] sm:$0xff]
    %v562 = vld [vmem:[#allocation14 + $0xe8] sm:$0xff]
    %v563 = vld [vmem:[#allocation14 + $0xf0] sm:$0xff]
    %v564 = vld [vmem:[#allocation14 + $0xf8] sm:$0xff]
    %v565 = vld [vmem:[#allocation14 + $0x100] sm:$0xff]
    %v566 = vld [vmem:[#allocation14 + $0x108] sm:$0xff]
    %v567 = vld [vmem:[#allocation14 + $0x110] sm:$0xff]
    %v568 = vld [vmem:[#allocation14 + $0x118] sm:$0xff]
    %v569 = vld [vmem:[#allocation14 + $0x120] sm:$0xff]
    %v570 = vld [vmem:[#allocation14 + $0x128] sm:$0xff]
    %v571 = vld [vmem:[#allocation14 + $0x130] sm:$0xff]
    %v572 = vld [vmem:[#allocation14 + $0x138] sm:$0xff]
    %v573 = vld [vmem:[#allocation14 + $0x140] sm:$0xff]
    %v574 = vld [vmem:[#allocation14 + $0x148] sm:$0xff]
    %v575 = vld [vmem:[#allocation14 + $0x150] sm:$0xff]
    %v576 = vld [vmem:[#allocation14 + $0x158] sm:$0xff]
    %v577 = vld [vmem:[#allocation14 + $0x160] sm:$0xff]
    %v578 = vld [vmem:[#allocation14 + $0x168] sm:$0xff]
    %v579 = vld [vmem:[#allocation14 + $0x170] sm:$0xff]
    %v580 = vld [vmem:[#allocation14 + $0x178] sm:$0xff]
    %v581 = vld [vmem:[%s6] sm:$0x7]
    %v583 = vlaneseq
    %v584 = vshrl.u32 %v583, 7
    %v585 = vsub.s32 0, %v584
    %v586 = vrot.slane %v581, %v585
    %v587 = vlaneseq
    %v588 = vshrl.u32 %v587, 7
    %v589 = vsub.s32 1, %v588
    %v590 = vrot.slane %v581, %v589
    %v591 = vlaneseq
    %v592 = vshrl.u32 %v591, 7
    %v593 = vsub.s32 2, %v592
    %v594 = vrot.slane %v581, %v593
    %598 = vmatprep.subr.mxu0 %v534
    %599 = vmatpush1.msra.mxu0 %v533
    %600 = vmatprep.subr.mxu0 %v537
    %601 = vmatpush1.msra.mxu0 %v536
    %602 = vmatprep.subr.mxu0 %v540
    %603 = vmatpush1.msra.mxu0 %v539
    %604 = vmatprep.subr.mxu0 %v543
    %605 = vmatpush1.msra.mxu0 %v542
    %606 = vmatprep.subr.mxu0 %v546
    %607 = vmatpush1.msra.mxu0 %v545
    %608 = vmatprep.subr.mxu0 %v549
    %609 = vmatpush1.msra.mxu0 %v548
    %610 = vmatprep.subr.mxu0 %v552
    %611 = vmatpush1.msra.mxu0 %v551
    %612 = vmatprep.subr.mxu0 %v555
    %613 = vmatpush1.msra.mxu0 %v554
    %614 = vmatprep.subr.mxu0 %v558
    %615 = vmatpush1.msra.mxu0 %v557
    %616 = vmatprep.subr.mxu0 %v561
    %617 = vmatpush1.msra.mxu0 %v560
    %618 = vmatprep.subr.mxu0 %v564
    %619 = vmatpush1.msra.mxu0 %v563
    %620 = vmatprep.subr.mxu0 %v567
    %621 = vmatpush1.msra.mxu0 %v566
    %622 = vmatprep.subr.mxu0 %v570
    %623 = vmatpush1.msra.mxu0 %v569
    %624 = vmatprep.subr.mxu0 %v573
    %625 = vmatpush1.msra.mxu0 %v572
    %626 = vmatprep.subr.mxu0 %v576
    %627 = vmatpush1.msra.mxu0 %v575
    %628 = vmatprep.subr.mxu0 %v579
    %629 = vmatpush1.msra.mxu0 %v578
    %630 = vmatprep.subr.mxu0 0.0
    %631 = vmatpush1.msra.mxu0 0.0
    %632 = vmatprep.subr.mxu0 0.0
    %633 = vmatpush1.msra.mxu0 0.0
    %634 = vmatprep.subr.mxu0 0.0
    %635 = vmatpush1.msra.mxu0 0.0
    %636 = vmatprep.subr.mxu0 0.0
    %637 = vmatpush1.msra.mxu0 0.0
    %638 = vmatprep.subr.mxu0 0.0
    %639 = vmatpush1.msra.mxu0 0.0
    %640 = vmatprep.subr.mxu0 0.0
    %641 = vmatpush1.msra.mxu0 0.0
    %642 = vmatprep.subr.mxu0 0.0
    %643 = vmatpush1.msra.mxu0 0.0
    %644 = vmatprep.subr.mxu0 0.0
    %645 = vmatpush1.msra.mxu0 0.0
    %646 = vmatprep.subr.mxu0 0.0
    %647 = vmatpush1.msra.mxu0 0.0
    %648 = vmatprep.subr.mxu0 0.0
    %649 = vmatpush1.msra.mxu0 0.0
    %650 = vmatprep.subr.mxu0 0.0
    %651 = vmatpush1.msra.mxu0 0.0
    %652 = vmatprep.subr.mxu0 0.0
    %653 = vmatpush1.msra.mxu0 0.0
    %654 = vmatprep.subr.mxu0 0.0
    %655 = vmatpush1.msra.mxu0 0.0
    %656 = vmatprep.subr.mxu0 0.0
    %657 = vmatpush1.msra.mxu0 0.0
    %658 = vmatprep.subr.mxu0 0.0
    %659 = vmatpush1.msra.mxu0 0.0
    %660 = vmatprep.subr.mxu0 0.0
    %661 = vmatpush1.msra.mxu0 0.0
    %662 = vmatprep.mubr.f32.mxu0 0.0
    %663 = vmatmul.mubr.f32.gmra.mrb[0].mxu0 %v531
    %v664 = vpop.f32.mrb[0].mxu0
    %v665 = vadd.f32 %v586, %v664
    %v666 = vpop.f32.mrb[0].mxu0
    %v667 = vadd.f32 %v590, %v666
    %668 = vdwg.mxu0
    %669 = vmatprep.subr.mxu0 0.0
    %670 = vmatpush1.msra.mxu0 %v535
    %671 = vmatprep.subr.mxu0 0.0
    %672 = vmatpush1.msra.mxu0 %v538
    %673 = vmatprep.subr.mxu0 0.0
    %674 = vmatpush1.msra.mxu0 %v541
    %675 = vmatprep.subr.mxu0 0.0
    %676 = vmatpush1.msra.mxu0 %v544
    %677 = vmatprep.subr.mxu0 0.0
    %678 = vmatpush1.msra.mxu0 %v547
    %679 = vmatprep.subr.mxu0 0.0
    %680 = vmatpush1.msra.mxu0 %v550
    %681 = vmatprep.subr.mxu0 0.0
    %682 = vmatpush1.msra.mxu0 %v553
    %683 = vmatprep.subr.mxu0 0.0
    %684 = vmatpush1.msra.mxu0 %v556
    %685 = vmatprep.subr.mxu0 0.0
    %686 = vmatpush1.msra.mxu0 %v559
    %687 = vmatprep.subr.mxu0 0.0
    %688 = vmatpush1.msra.mxu0 %v562
    %689 = vmatprep.subr.mxu0 0.0
    %690 = vmatpush1.msra.mxu0 %v565
    %691 = vmatprep.subr.mxu0 0.0
    %692 = vmatpush1.msra.mxu0 %v568
    %693 = vmatprep.subr.mxu0 0.0
    %694 = vmatpush1.msra.mxu0 %v571
    %695 = vmatprep.subr.mxu0 0.0
    %696 = vmatpush1.msra.mxu0 %v574
    %697 = vmatprep.subr.mxu0 0.0
    %698 = vmatpush1.msra.mxu0 %v577
    %699 = vmatprep.subr.mxu0 0.0
    %700 = vmatpush1.msra.mxu0 %v580
    %701 = vmatprep.subr.mxu0 0.0
    %702 = vmatpush1.msra.mxu0 0.0
    %703 = vmatprep.subr.mxu0 0.0
    %704 = vmatpush1.msra.mxu0 0.0
    %705 = vmatprep.subr.mxu0 0.0
    %706 = vmatpush1.msra.mxu0 0.0
    %707 = vmatprep.subr.mxu0 0.0
    %708 = vmatpush1.msra.mxu0 0.0
    %709 = vmatprep.subr.mxu0 0.0
    %710 = vmatpush1.msra.mxu0 0.0
    %711 = vmatprep.subr.mxu0 0.0
    %712 = vmatpush1.msra.mxu0 0.0
    %713 = vmatprep.subr.mxu0 0.0
    %714 = vmatpush1.msra.mxu0 0.0
    %715 = vmatprep.subr.mxu0 0.0
    %716 = vmatpush1.msra.mxu0 0.0
    %717 = vmatprep.subr.mxu0 0.0
    %718 = vmatpush1.msra.mxu0 0.0
    %719 = vmatprep.subr.mxu0 0.0
    %720 = vmatpush1.msra.mxu0 0.0
    %721 = vmatprep.subr.mxu0 0.0
    %722 = vmatpush1.msra.mxu0 0.0
    %723 = vmatprep.subr.mxu0 0.0
    %724 = vmatpush1.msra.mxu0 0.0
    %725 = vmatprep.subr.mxu0 0.0
    %726 = vmatpush1.msra.mxu0 0.0
    %727 = vmatprep.subr.mxu0 0.0
    %728 = vmatpush1.msra.mxu0 0.0
    %729 = vmatprep.subr.mxu0 0.0
    %730 = vmatpush1.msra.mxu0 0.0
    %731 = vmatprep.subr.mxu0 0.0
    %732 = vmatpush1.msra.mxu0 0.0
    %733 = vmatprep.mubr.f32.mxu0 0.0
    %734 = vmatmul.mubr.f32.gmra.mrb[0].mxu0 %v531
    %v735 = vpop.f32.mrb[0].mxu0
    %v736 = vadd.f32 %v594, %v735
    %v737 = vpop.f32.mrb[0].mxu0
    %738 = vdwg.mxu0
    %v739 = vadd.f32 %v532, %v665
    %v740 = vxor.u32 %v739, 2147483648
    %v741 = vmul.f32 %v740, 1.442695
    %v742 = vpow.pop %v741
    %v743 = vadd.f32 %v742, 1.0
    %v744 = vrcp.pop %v743
    %v745 = vmul.f32 1.0, %v744
    %v747 = vrot.slane %v532, 1
    %v749 = vadd.f32 %v747, %v667
    %v750 = vxor.u32 %v749, 2147483648
    %v751 = vmul.f32 %v750, 1.442695
    %v752 = vpow.pop %v751
    %v753 = vadd.f32 %v752, 1.0
    %v754 = vrcp.pop %v753
    %v755 = vmul.f32 1.0, %v754
    %v756 = vmul.f32 %v745, %v736
    %v757 = vrot.slane %v532, 2
    %v759 = vadd.f32 %v757, %v756
    %v760 = vtanh.pop %v759
    %v761 = vsub.f32 %v531, %v760
    %v762 = vmul.f32 %v755, %v761
    %v763 = vadd.f32 %v760, %v762
    %764 = vst [vmem:[#allocation5] sm:$0x1] %v763
    %s765 = scalar_lea.vmem [#allocation4], 1
    %v766 = vld [vmem:[%s765] ss:$8 sm:$0x7]
    %v767 = vld [vmem:[#allocation14] sm:$0xff]
    %v768 = vld [vmem:[#allocation14 + $0x8] sm:$0xff]
    %v769 = vld [vmem:[#allocation14 + $0x10] sm:$0xff]
    %v770 = vld [vmem:[#allocation14 + $0x18] sm:$0xff]
    %v771 = vld [vmem:[#allocation14 + $0x20] sm:$0xff]
    %v772 = vld [vmem:[#allocation14 + $0x28] sm:$0xff]
    %v773 = vld [vmem:[#allocation14 + $0x30] sm:$0xff]
    %v774 = vld [vmem:[#allocation14 + $0x38] sm:$0xff]
    %v775 = vld [vmem:[#allocation14 + $0x40] sm:$0xff]
    %v776 = vld [vmem:[#allocation14 + $0x48] sm:$0xff]
    %v777 = vld [vmem:[#allocation14 + $0x50] sm:$0xff]
    %v778 = vld [vmem:[#allocation14 + $0x58] sm:$0xff]
    %v779 = vld [vmem:[#allocation14 + $0x60] sm:$0xff]
    %v780 = vld [vmem:[#allocation14 + $0x68] sm:$0xff]
    %v781 = vld [vmem:[#allocation14 + $0x70] sm:$0xff]
    %v782 = vld [vmem:[#allocation14 + $0x78] sm:$0xff]
    %v783 = vld [vmem:[#allocation14 + $0x80] sm:$0xff]
    %v784 = vld [vmem:[#allocation14 + $0x88] sm:$0xff]
    %v785 = vld [vmem:[#allocation14 + $0x90] sm:$0xff]
    %v786 = vld [vmem:[#allocation14 + $0x98] sm:$0xff]
    %v787 = vld [vmem:[#allocation14 + $0xa0] sm:$0xff]
    %v788 = vld [vmem:[#allocation14 + $0xa8] sm:$0xff]
    %v789 = vld [vmem:[#allocation14 + $0xb0] sm:$0xff]
    %v790 = vld [vmem:[#allocation14 + $0xb8] sm:$0xff]
    %v791 = vld [vmem:[#allocation14 + $0xc0] sm:$0xff]
    %v792 = vld [vmem:[#allocation14 + $0xc8] sm:$0xff]
    %v793 = vld [vmem:[#allocation14 + $0xd0] sm:$0xff]
    %v794 = vld [vmem:[#allocation14 + $0xd8] sm:$0xff]
    %v795 = vld [vmem:[#allocation14 + $0xe0] sm:$0xff]
    %v796 = vld [vmem:[#allocation14 + $0xe8] sm:$0xff]
    %v797 = vld [vmem:[#allocation14 + $0xf0] sm:$0xff]
    %v798 = vld [vmem:[#allocation14 + $0xf8] sm:$0xff]
    %v799 = vld [vmem:[#allocation14 + $0x100] sm:$0xff]
    %v800 = vld [vmem:[#allocation14 + $0x108] sm:$0xff]
    %v801 = vld [vmem:[#allocation14 + $0x110] sm:$0xff]
    %v802 = vld [vmem:[#allocation14 + $0x118] sm:$0xff]
    %v803 = vld [vmem:[#allocation14 + $0x120] sm:$0xff]
    %v804 = vld [vmem:[#allocation14 + $0x128] sm:$0xff]
    %v805 = vld [vmem:[#allocation14 + $0x130] sm:$0xff]
    %v806 = vld [vmem:[#allocation14 + $0x138] sm:$0xff]
    %v807 = vld [vmem:[#allocation14 + $0x140] sm:$0xff]
    %v808 = vld [vmem:[#allocation14 + $0x148] sm:$0xff]
    %v809 = vld [vmem:[#allocation14 + $0x150] sm:$0xff]
    %v810 = vld [vmem:[#allocation14 + $0x158] sm:$0xff]
    %v811 = vld [vmem:[#allocation14 + $0x160] sm:$0xff]
    %v812 = vld [vmem:[#allocation14 + $0x168] sm:$0xff]
    %v813 = vld [vmem:[#allocation14 + $0x170] sm:$0xff]
    %v814 = vld [vmem:[#allocation14 + $0x178] sm:$0xff]
    %v815 = vld [vmem:[%s6] sm:$0x7]
    %v817 = vlaneseq
    %v818 = vshrl.u32 %v817, 7
    %v819 = vsub.s32 0, %v818
    %v820 = vrot.slane %v815, %v819
    %v821 = vlaneseq
    %v822 = vshrl.u32 %v821, 7
    %v823 = vsub.s32 1, %v822
    %v824 = vrot.slane %v815, %v823
    %v825 = vlaneseq
    %v826 = vshrl.u32 %v825, 7
    %v827 = vsub.s32 2, %v826
    %v828 = vrot.slane %v815, %v827
    %832 = vmatprep.subr.mxu0 %v768
    %833 = vmatpush1.msra.mxu0 %v767
    %834 = vmatprep.subr.mxu0 %v771
    %835 = vmatpush1.msra.mxu0 %v770
    %836 = vmatprep.subr.mxu0 %v774
    %837 = vmatpush1.msra.mxu0 %v773
    %838 = vmatprep.subr.mxu0 %v777
    %839 = vmatpush1.msra.mxu0 %v776
    %840 = vmatprep.subr.mxu0 %v780
    %841 = vmatpush1.msra.mxu0 %v779
    %842 = vmatprep.subr.mxu0 %v783
    %843 = vmatpush1.msra.mxu0 %v782
    %844 = vmatprep.subr.mxu0 %v786
    %845 = vmatpush1.msra.mxu0 %v785
    %846 = vmatprep.subr.mxu0 %v789
    %847 = vmatpush1.msra.mxu0 %v788
    %848 = vmatprep.subr.mxu0 %v792
    %849 = vmatpush1.msra.mxu0 %v791
    %850 = vmatprep.subr.mxu0 %v795
    %851 = vmatpush1.msra.mxu0 %v794
    %852 = vmatprep.subr.mxu0 %v798
    %853 = vmatpush1.msra.mxu0 %v797
    %854 = vmatprep.subr.mxu0 %v801
    %855 = vmatpush1.msra.mxu0 %v800
    %856 = vmatprep.subr.mxu0 %v804
    %857 = vmatpush1.msra.mxu0 %v803
    %858 = vmatprep.subr.mxu0 %v807
    %859 = vmatpush1.msra.mxu0 %v806
    %860 = vmatprep.subr.mxu0 %v810
    %861 = vmatpush1.msra.mxu0 %v809
    %862 = vmatprep.subr.mxu0 %v813
    %863 = vmatpush1.msra.mxu0 %v812
    %864 = vmatprep.subr.mxu0 0.0
    %865 = vmatpush1.msra.mxu0 0.0
    %866 = vmatprep.subr.mxu0 0.0
    %867 = vmatpush1.msra.mxu0 0.0
    %868 = vmatprep.subr.mxu0 0.0
    %869 = vmatpush1.msra.mxu0 0.0
    %870 = vmatprep.subr.mxu0 0.0
    %871 = vmatpush1.msra.mxu0 0.0
    %872 = vmatprep.subr.mxu0 0.0
    %873 = vmatpush1.msra.mxu0 0.0
    %874 = vmatprep.subr.mxu0 0.0
    %875 = vmatpush1.msra.mxu0 0.0
    %876 = vmatprep.subr.mxu0 0.0
    %877 = vmatpush1.msra.mxu0 0.0
    %878 = vmatprep.subr.mxu0 0.0
    %879 = vmatpush1.msra.mxu0 0.0
    %880 = vmatprep.subr.mxu0 0.0
    %881 = vmatpush1.msra.mxu0 0.0
    %882 = vmatprep.subr.mxu0 0.0
    %883 = vmatpush1.msra.mxu0 0.0
    %884 = vmatprep.subr.mxu0 0.0
    %885 = vmatpush1.msra.mxu0 0.0
    %886 = vmatprep.subr.mxu0 0.0
    %887 = vmatpush1.msra.mxu0 0.0
    %888 = vmatprep.subr.mxu0 0.0
    %889 = vmatpush1.msra.mxu0 0.0
    %890 = vmatprep.subr.mxu0 0.0
    %891 = vmatpush1.msra.mxu0 0.0
    %892 = vmatprep.subr.mxu0 0.0
    %893 = vmatpush1.msra.mxu0 0.0
    %894 = vmatprep.subr.mxu0 0.0
    %895 = vmatpush1.msra.mxu0 0.0
    %896 = vmatprep.mubr.f32.mxu0 0.0
    %897 = vmatmul.mubr.f32.gmra.mrb[0].mxu0 %v763
    %v898 = vpop.f32.mrb[0].mxu0
    %v899 = vadd.f32 %v820, %v898
    %v900 = vpop.f32.mrb[0].mxu0
    %v901 = vadd.f32 %v824, %v900
    %902 = vdwg.mxu0
    %903 = vmatprep.subr.mxu0 0.0
    %904 = vmatpush1.msra.mxu0 %v769
    %905 = vmatprep.subr.mxu0 0.0
    %906 = vmatpush1.msra.mxu0 %v772
    %907 = vmatprep.subr.mxu0 0.0
    %908 = vmatpush1.msra.mxu0 %v775
    %909 = vmatprep.subr.mxu0 0.0
    %910 = vmatpush1.msra.mxu0 %v778
    %911 = vmatprep.subr.mxu0 0.0
    %912 = vmatpush1.msra.mxu0 %v781
    %913 = vmatprep.subr.mxu0 0.0
    %914 = vmatpush1.msra.mxu0 %v784
    %915 = vmatprep.subr.mxu0 0.0
    %916 = vmatpush1.msra.mxu0 %v787
    %917 = vmatprep.subr.mxu0 0.0
    %918 = vmatpush1.msra.mxu0 %v790
    %919 = vmatprep.subr.mxu0 0.0
    %920 = vmatpush1.msra.mxu0 %v793
    %921 = vmatprep.subr.mxu0 0.0
    %922 = vmatpush1.msra.mxu0 %v796
    %923 = vmatprep.subr.mxu0 0.0
    %924 = vmatpush1.msra.mxu0 %v799
    %925 = vmatprep.subr.mxu0 0.0
    %926 = vmatpush1.msra.mxu0 %v802
    %927 = vmatprep.subr.mxu0 0.0
    %928 = vmatpush1.msra.mxu0 %v805
    %929 = vmatprep.subr.mxu0 0.0
    %930 = vmatpush1.msra.mxu0 %v808
    %931 = vmatprep.subr.mxu0 0.0
    %932 = vmatpush1.msra.mxu0 %v811
    %933 = vmatprep.subr.mxu0 0.0
    %934 = vmatpush1.msra.mxu0 %v814
    %935 = vmatprep.subr.mxu0 0.0
    %936 = vmatpush1.msra.mxu0 0.0
    %937 = vmatprep.subr.mxu0 0.0
    %938 = vmatpush1.msra.mxu0 0.0
    %939 = vmatprep.subr.mxu0 0.0
    %940 = vmatpush1.msra.mxu0 0.0
    %941 = vmatprep.subr.mxu0 0.0
    %942 = vmatpush1.msra.mxu0 0.0
    %943 = vmatprep.subr.mxu0 0.0
    %944 = vmatpush1.msra.mxu0 0.0
    %945 = vmatprep.subr.mxu0 0.0
    %946 = vmatpush1.msra.mxu0 0.0
    %947 = vmatprep.subr.mxu0 0.0
    %948 = vmatpush1.msra.mxu0 0.0
    %949 = vmatprep.subr.mxu0 0.0
    %950 = vmatpush1.msra.mxu0 0.0
    %951 = vmatprep.subr.mxu0 0.0
    %952 = vmatpush1.msra.mxu0 0.0
    %953 = vmatprep.subr.mxu0 0.0
    %954 = vmatpush1.msra.mxu0 0.0
    %955 = vmatprep.subr.mxu0 0.0
    %956 = vmatpush1.msra.mxu0 0.0
    %957 = vmatprep.subr.mxu0 0.0
    %958 = vmatpush1.msra.mxu0 0.0
    %959 = vmatprep.subr.mxu0 0.0
    %960 = vmatpush1.msra.mxu0 0.0
    %961 = vmatprep.subr.mxu0 0.0
    %962 = vmatpush1.msra.mxu0 0.0
    %963 = vmatprep.subr.mxu0 0.0
    %964 = vmatpush1.msra.mxu0 0.0
    %965 = vmatprep.subr.mxu0 0.0
    %966 = vmatpush1.msra.mxu0 0.0
    %967 = vmatprep.mubr.f32.mxu0 0.0
    %968 = vmatmul.mubr.f32.gmra.mrb[0].mxu0 %v763
    %v969 = vpop.f32.mrb[0].mxu0
    %v970 = vadd.f32 %v828, %v969
    %v971 = vpop.f32.mrb[0].mxu0
    %972 = vdwg.mxu0
    %v973 = vadd.f32 %v766, %v899
    %v974 = vxor.u32 %v973, 2147483648
    %v975 = vmul.f32 %v974, 1.442695
    %v976 = vpow.pop %v975
    %v977 = vadd.f32 %v976, 1.0
    %v978 = vrcp.pop %v977
    %v979 = vmul.f32 1.0, %v978
    %v981 = vrot.slane %v766, 1
    %v983 = vadd.f32 %v981, %v901
    %v984 = vxor.u32 %v983, 2147483648
    %v985 = vmul.f32 %v984, 1.442695
    %v986 = vpow.pop %v985
    %v987 = vadd.f32 %v986, 1.0
    %v988 = vrcp.pop %v987
    %v989 = vmul.f32 1.0, %v988
    %v990 = vmul.f32 %v979, %v970
    %v991 = vrot.slane %v766, 2
    %v993 = vadd.f32 %v991, %v990
    %v994 = vtanh.pop %v993
    %v995 = vsub.f32 %v763, %v994
    %v996 = vmul.f32 %v989, %v995
    %v997 = vadd.f32 %v994, %v996
    %998 = vst [vmem:[#allocation5 + $0x1] sm:$0x1] %v997
    %s999 = scalar_lea.vmem [#allocation4], 2
    %v1000 = vld [vmem:[%s999] ss:$8 sm:$0x7]
    %v1001 = vld [vmem:[#allocation14] sm:$0xff]
    %v1002 = vld [vmem:[#allocation14 + $0x8] sm:$0xff]
    %v1003 = vld [vmem:[#allocation14 + $0x10] sm:$0xff]
    %v1004 = vld [vmem:[#allocation14 + $0x18] sm:$0xff]
    %v1005 = vld [vmem:[#allocation14 + $0x20] sm:$0xff]
    %v1006 = vld [vmem:[#allocation14 + $0x28] sm:$0xff]
    %v1007 = vld [vmem:[#allocation14 + $0x30] sm:$0xff]
    %v1008 = vld [vmem:[#allocation14 + $0x38] sm:$0xff]
    %v1009 = vld [vmem:[#allocation14 + $0x40] sm:$0xff]
    %v1010 = vld [vmem:[#allocation14 + $0x48] sm:$0xff]
    %v1011 = vld [vmem:[#allocation14 + $0x50] sm:$0xff]
    %v1012 = vld [vmem:[#allocation14 + $0x58] sm:$0xff]
    %v1013 = vld [vmem:[#allocation14 + $0x60] sm:$0xff]
    %v1014 = vld [vmem:[#allocation14 + $0x68] sm:$0xff]
    %v1015 = vld [vmem:[#allocation14 + $0x70] sm:$0xff]
    %v1016 = vld [vmem:[#allocation14 + $0x78] sm:$0xff]
    %v1017 = vld [vmem:[#allocation14 + $0x80] sm:$0xff]
    %v1018 = vld [vmem:[#allocation14 + $0x88] sm:$0xff]
    %v1019 = vld [vmem:[#allocation14 + $0x90] sm:$0xff]
    %v1020 = vld [vmem:[#allocation14 + $0x98] sm:$0xff]
    %v1021 = vld [vmem:[#allocation14 + $0xa0] sm:$0xff]
    %v1022 = vld [vmem:[#allocation14 + $0xa8] sm:$0xff]
    %v1023 = vld [vmem:[#allocation14 + $0xb0] sm:$0xff]
    %v1024 = vld [vmem:[#allocation14 + $0xb8] sm:$0xff]
    %v1025 = vld [vmem:[#allocation14 + $0xc0] sm:$0xff]
    %v1026 = vld [vmem:[#allocation14 + $0xc8] sm:$0xff]
    %v1027 = vld [vmem:[#allocation14 + $0xd0] sm:$0xff]
    %v1028 = vld [vmem:[#allocation14 + $0xd8] sm:$0xff]
    %v1029 = vld [vmem:[#allocation14 + $0xe0] sm:$0xff]
    %v1030 = vld [vmem:[#allocation14 + $0xe8] sm:$0xff]
    %v1031 = vld [vmem:[#allocation14 + $0xf0] sm:$0xff]
    %v1032 = vld [vmem:[#allocation14 + $0xf8] sm:$0xff]
    %v1033 = vld [vmem:[#allocation14 + $0x100] sm:$0xff]
    %v1034 = vld [vmem:[#allocation14 + $0x108] sm:$0xff]
    %v1035 = vld [vmem:[#allocation14 + $0x110] sm:$0xff]
    %v1036 = vld [vmem:[#allocation14 + $0x118] sm:$0xff]
    %v1037 = vld [vmem:[#allocation14 + $0x120] sm:$0xff]
    %v1038 = vld [vmem:[#allocation14 + $0x128] sm:$0xff]
    %v1039 = vld [vmem:[#allocation14 + $0x130] sm:$0xff]
    %v1040 = vld [vmem:[#allocation14 + $0x138] sm:$0xff]
    %v1041 = vld [vmem:[#allocation14 + $0x140] sm:$0xff]
    %v1042 = vld [vmem:[#allocation14 + $0x148] sm:$0xff]
    %v1043 = vld [vmem:[#allocation14 + $0x150] sm:$0xff]
    %v1044 = vld [vmem:[#allocation14 + $0x158] sm:$0xff]
    %v1045 = vld [vmem:[#allocation14 + $0x160] sm:$0xff]
    %v1046 = vld [vmem:[#allocation14 + $0x168] sm:$0xff]
    %v1047 = vld [vmem:[#allocation14 + $0x170] sm:$0xff]
    %v1048 = vld [vmem:[#allocation14 + $0x178] sm:$0xff]
    %v1049 = vld [vmem:[%s6] sm:$0x7]
    %v1051 = vlaneseq
    %v1052 = vshrl.u32 %v1051, 7
    %v1053 = vsub.s32 0, %v1052
    %v1054 = vrot.slane %v1049, %v1053
    %v1055 = vlaneseq
    %v1056 = vshrl.u32 %v1055, 7
    %v1057 = vsub.s32 1, %v1056
    %v1058 = vrot.slane %v1049, %v1057
    %v1059 = vlaneseq
    %v1060 = vshrl.u32 %v1059, 7
    %v1061 = vsub.s32 2, %v1060
    %v1062 = vrot.slane %v1049, %v1061
    %1066 = vmatprep.subr.mxu0 %v1002
    %1067 = vmatpush1.msra.mxu0 %v1001
    %1068 = vmatprep.subr.mxu0 %v1005
    %1069 = vmatpush1.msra.mxu0 %v1004
    %1070 = vmatprep.subr.mxu0 %v1008
    %1071 = vmatpush1.msra.mxu0 %v1007
    %1072 = vmatprep.subr.mxu0 %v1011
    %1073 = vmatpush1.msra.mxu0 %v1010
    %1074 = vmatprep.subr.mxu0 %v1014
    %1075 = vmatpush1.msra.mxu0 %v1013
    %1076 = vmatprep.subr.mxu0 %v1017
    %1077 = vmatpush1.msra.mxu0 %v1016
    %1078 = vmatprep.subr.mxu0 %v1020
    %1079 = vmatpush1.msra.mxu0 %v1019
    %1080 = vmatprep.subr.mxu0 %v1023
    %1081 = vmatpush1.msra.mxu0 %v1022
    %1082 = vmatprep.subr.mxu0 %v1026
    %1083 = vmatpush1.msra.mxu0 %v1025
    %1084 = vmatprep.subr.mxu0 %v1029
    %1085 = vmatpush1.msra.mxu0 %v1028
    %1086 = vmatprep.subr.mxu0 %v1032
    %1087 = vmatpush1.msra.mxu0 %v1031
    %1088 = vmatprep.subr.mxu0 %v1035
    %1089 = vmatpush1.msra.mxu0 %v1034
    %1090 = vmatprep.subr.mxu0 %v1038
    %1091 = vmatpush1.msra.mxu0 %v1037
    %1092 = vmatprep.subr.mxu0 %v1041
    %1093 = vmatpush1.msra.mxu0 %v1040
    %1094 = vmatprep.subr.mxu0 %v1044
    %1095 = vmatpush1.msra.mxu0 %v1043
    %1096 = vmatprep.subr.mxu0 %v1047
    %1097 = vmatpush1.msra.mxu0 %v1046
    %1098 = vmatprep.subr.mxu0 0.0
    %1099 = vmatpush1.msra.mxu0 0.0
    %1100 = vmatprep.subr.mxu0 0.0
    %1101 = vmatpush1.msra.mxu0 0.0
    %1102 = vmatprep.subr.mxu0 0.0
    %1103 = vmatpush1.msra.mxu0 0.0
    %1104 = vmatprep.subr.mxu0 0.0
    %1105 = vmatpush1.msra.mxu0 0.0
    %1106 = vmatprep.subr.mxu0 0.0
    %1107 = vmatpush1.msra.mxu0 0.0
    %1108 = vmatprep.subr.mxu0 0.0
    %1109 = vmatpush1.msra.mxu0 0.0
    %1110 = vmatprep.subr.mxu0 0.0
    %1111 = vmatpush1.msra.mxu0 0.0
    %1112 = vmatprep.subr.mxu0 0.0
    %1113 = vmatpush1.msra.mxu0 0.0
    %1114 = vmatprep.subr.mxu0 0.0
    %1115 = vmatpush1.msra.mxu0 0.0
    %1116 = vmatprep.subr.mxu0 0.0
    %1117 = vmatpush1.msra.mxu0 0.0
    %1118 = vmatprep.subr.mxu0 0.0
    %1119 = vmatpush1.msra.mxu0 0.0
    %1120 = vmatprep.subr.mxu0 0.0
    %1121 = vmatpush1.msra.mxu0 0.0
    %1122 = vmatprep.subr.mxu0 0.0
    %1123 = vmatpush1.msra.mxu0 0.0
    %1124 = vmatprep.subr.mxu0 0.0
    %1125 = vmatpush1.msra.mxu0 0.0
    %1126 = vmatprep.subr.mxu0 0.0
    %1127 = vmatpush1.msra.mxu0 0.0
    %1128 = vmatprep.subr.mxu0 0.0
    %1129 = vmatpush1.msra.mxu0 0.0
    %1130 = vmatprep.mubr.f32.mxu0 0.0
    %1131 = vmatmul.mubr.f32.gmra.mrb[0].mxu0 %v997
    %v1132 = vpop.f32.mrb[0].mxu0
    %v1133 = vadd.f32 %v1054, %v1132
    %v1134 = vpop.f32.mrb[0].mxu0
    %v1135 = vadd.f32 %v1058, %v1134
    %1136 = vdwg.mxu0
    %1137 = vmatprep.subr.mxu0 0.0
    %1138 = vmatpush1.msra.mxu0 %v1003
    %1139 = vmatprep.subr.mxu0 0.0
    %1140 = vmatpush1.msra.mxu0 %v1006
    %1141 = vmatprep.subr.mxu0 0.0
    %1142 = vmatpush1.msra.mxu0 %v1009
    %1143 = vmatprep.subr.mxu0 0.0
    %1144 = vmatpush1.msra.mxu0 %v1012
    %1145 = vmatprep.subr.mxu0 0.0
    %1146 = vmatpush1.msra.mxu0 %v1015
    %1147 = vmatprep.subr.mxu0 0.0
    %1148 = vmatpush1.msra.mxu0 %v1018
    %1149 = vmatprep.subr.mxu0 0.0
    %1150 = vmatpush1.msra.mxu0 %v1021
    %1151 = vmatprep.subr.mxu0 0.0
    %1152 = vmatpush1.msra.mxu0 %v1024
    %1153 = vmatprep.subr.mxu0 0.0
    %1154 = vmatpush1.msra.mxu0 %v1027
    %1155 = vmatprep.subr.mxu0 0.0
    %1156 = vmatpush1.msra.mxu0 %v1030
    %1157 = vmatprep.subr.mxu0 0.0
    %1158 = vmatpush1.msra.mxu0 %v1033
    %1159 = vmatprep.subr.mxu0 0.0
    %1160 = vmatpush1.msra.mxu0 %v1036
    %1161 = vmatprep.subr.mxu0 0.0
    %1162 = vmatpush1.msra.mxu0 %v1039
    %1163 = vmatprep.subr.mxu0 0.0
    %1164 = vmatpush1.msra.mxu0 %v1042
    %1165 = vmatprep.subr.mxu0 0.0
    %1166 = vmatpush1.msra.mxu0 %v1045
    %1167 = vmatprep.subr.mxu0 0.0
    %1168 = vmatpush1.msra.mxu0 %v1048
    %1169 = vmatprep.subr.mxu0 0.0
    %1170 = vmatpush1.msra.mxu0 0.0
    %1171 = vmatprep.subr.mxu0 0.0
    %1172 = vmatpush1.msra.mxu0 0.0
    %1173 = vmatprep.subr.mxu0 0.0
    %1174 = vmatpush1.msra.mxu0 0.0
    %1175 = vmatprep.subr.mxu0 0.0
    %1176 = vmatpush1.msra.mxu0 0.0
    %1177 = vmatprep.subr.mxu0 0.0
    %1178 = vmatpush1.msra.mxu0 0.0
    %1179 = vmatprep.subr.mxu0 0.0
    %1180 = vmatpush1.msra.mxu0 0.0
    %1181 = vmatprep.subr.mxu0 0.0
    %1182 = vmatpush1.msra.mxu0 0.0
    %1183 = vmatprep.subr.mxu0 0.0
    %1184 = vmatpush1.msra.mxu0 0.0
    %1185 = vmatprep.subr.mxu0 0.0
    %1186 = vmatpush1.msra.mxu0 0.0
    %1187 = vmatprep.subr.mxu0 0.0
    %1188 = vmatpush1.msra.mxu0 0.0
    %1189 = vmatprep.subr.mxu0 0.0
    %1190 = vmatpush1.msra.mxu0 0.0
    %1191 = vmatprep.subr.mxu0 0.0
    %1192 = vmatpush1.msra.mxu0 0.0
    %1193 = vmatprep.subr.mxu0 0.0
    %1194 = vmatpush1.msra.mxu0 0.0
    %1195 = vmatprep.subr.mxu0 0.0
    %1196 = vmatpush1.msra.mxu0 0.0
    %1197 = vmatprep.subr.mxu0 0.0
    %1198 = vmatpush1.msra.mxu0 0.0
    %1199 = vmatprep.subr.mxu0 0.0
    %1200 = vmatpush1.msra.mxu0 0.0
    %1201 = vmatprep.mubr.f32.mxu0 0.0
    %1202 = vmatmul.mubr.f32.gmra.mrb[0].mxu0 %v997
    %v1203 = vpop.f32.mrb[0].mxu0
    %v1204 = vadd.f32 %v1062, %v1203
    %v1205 = vpop.f32.mrb[0].mxu0
    %1206 = vdwg.mxu0
    %v1207 = vadd.f32 %v1000, %v1133
    %v1208 = vxor.u32 %v1207, 2147483648
    %v1209 = vmul.f32 %v1208, 1.442695
    %v1210 = vpow.pop %v1209
    %v1211 = vadd.f32 %v1210, 1.0
    %v1212 = vrcp.pop %v1211
    %v1213 = vmul.f32 1.0, %v1212
    %v1215 = vrot.slane %v1000, 1
    %v1217 = vadd.f32 %v1215, %v1135
    %v1218 = vxor.u32 %v1217, 2147483648
    %v1219 = vmul.f32 %v1218, 1.442695
    %v1220 = vpow.pop %v1219
    %v1221 = vadd.f32 %v1220, 1.0
    %v1222 = vrcp.pop %v1221
    %v1223 = vmul.f32 1.0, %v1222
    %v1224 = vmul.f32 %v1213, %v1204
    %v1225 = vrot.slane %v1000, 2
    %v1227 = vadd.f32 %v1225, %v1224
    %v1228 = vtanh.pop %v1227
    %v1229 = vsub.f32 %v997, %v1228
    %v1230 = vmul.f32 %v1223, %v1229
    %v1231 = vadd.f32 %v1228, %v1230
    %1232 = vst [vmem:[#allocation5 + $0x2] sm:$0x1] %v1231
    %s1233 = scalar_lea.vmem [#allocation4], 3
    %v1234 = vld [vmem:[%s1233] ss:$8 sm:$0x7]
    %v1235 = vld [vmem:[#allocation14] sm:$0xff]
    %v1236 = vld [vmem:[#allocation14 + $0x8] sm:$0xff]
    %v1237 = vld [vmem:[#allocation14 + $0x10] sm:$0xff]
    %v1238 = vld [vmem:[#allocation14 + $0x18] sm:$0xff]
    %v1239 = vld [vmem:[#allocation14 + $0x20] sm:$0xff]
    %v1240 = vld [vmem:[#allocation14 + $0x28] sm:$0xff]
    %v1241 = vld [vmem:[#allocation14 + $0x30] sm:$0xff]
    %v1242 = vld [vmem:[#allocation14 + $0x38] sm:$0xff]
    %v1243 = vld [vmem:[#allocation14 + $0x40] sm:$0xff]
    %v1244 = vld [vmem:[#allocation14 + $0x48] sm:$0xff]
    %v1245 = vld [vmem:[#allocation14 + $0x50] sm:$0xff]
    %v1246 = vld [vmem:[#allocation14 + $0x58] sm:$0xff]
    %v1247 = vld [vmem:[#allocation14 + $0x60] sm:$0xff]
    %v1248 = vld [vmem:[#allocation14 + $0x68] sm:$0xff]
    %v1249 = vld [vmem:[#allocation14 + $0x70] sm:$0xff]
    %v1250 = vld [vmem:[#allocation14 + $0x78] sm:$0xff]
    %v1251 = vld [vmem:[#allocation14 + $0x80] sm:$0xff]
    %v1252 = vld [vmem:[#allocation14 + $0x88] sm:$0xff]
    %v1253 = vld [vmem:[#allocation14 + $0x90] sm:$0xff]
    %v1254 = vld [vmem:[#allocation14 + $0x98] sm:$0xff]
    %v1255 = vld [vmem:[#allocation14 + $0xa0] sm:$0xff]
    %v1256 = vld [vmem:[#allocation14 + $0xa8] sm:$0xff]
    %v1257 = vld [vmem:[#allocation14 + $0xb0] sm:$0xff]
    %v1258 = vld [vmem:[#allocation14 + $0xb8] sm:$0xff]
    %v1259 = vld [vmem:[#allocation14 + $0xc0] sm:$0xff]
    %v1260 = vld [vmem:[#allocation14 + $0xc8] sm:$0xff]
    %v1261 = vld [vmem:[#allocation14 + $0xd0] sm:$0xff]
    %v1262 = vld [vmem:[#allocation14 + $0xd8] sm:$0xff]
    %v1263 = vld [vmem:[#allocation14 + $0xe0] sm:$0xff]
    %v1264 = vld [vmem:[#allocation14 + $0xe8] sm:$0xff]
    %v1265 = vld [vmem:[#allocation14 + $0xf0] sm:$0xff]
    %v1266 = vld [vmem:[#allocation14 + $0xf8] sm:$0xff]
    %v1267 = vld [vmem:[#allocation14 + $0x100] sm:$0xff]
    %v1268 = vld [vmem:[#allocation14 + $0x108] sm:$0xff]
    %v1269 = vld [vmem:[#allocation14 + $0x110] sm:$0xff]
    %v1270 = vld [vmem:[#allocation14 + $0x118] sm:$0xff]
    %v1271 = vld [vmem:[#allocation14 + $0x120] sm:$0xff]
    %v1272 = vld [vmem:[#allocation14 + $0x128] sm:$0xff]
    %v1273 = vld [vmem:[#allocation14 + $0x130] sm:$0xff]
    %v1274 = vld [vmem:[#allocation14 + $0x138] sm:$0xff]
    %v1275 = vld [vmem:[#allocation14 + $0x140] sm:$0xff]
    %v1276 = vld [vmem:[#allocation14 + $0x148] sm:$0xff]
    %v1277 = vld [vmem:[#allocation14 + $0x150] sm:$0xff]
    %v1278 = vld [vmem:[#allocation14 + $0x158] sm:$0xff]
    %v1279 = vld [vmem:[#allocation14 + $0x160] sm:$0xff]
    %v1280 = vld [vmem:[#allocation14 + $0x168] sm:$0xff]
    %v1281 = vld [vmem:[#allocation14 + $0x170] sm:$0xff]
    %v1282 = vld [vmem:[#allocation14 + $0x178] sm:$0xff]
    %v1283 = vld [vmem:[%s6] sm:$0x7]
    %v1285 = vlaneseq
    %v1286 = vshrl.u32 %v1285, 7
    %v1287 = vsub.s32 0, %v1286
    %v1288 = vrot.slane %v1283, %v1287
    %v1289 = vlaneseq
    %v1290 = vshrl.u32 %v1289, 7
    %v1291 = vsub.s32 1, %v1290
    %v1292 = vrot.slane %v1283, %v1291
    %v1293 = vlaneseq
    %v1294 = vshrl.u32 %v1293, 7
    %v1295 = vsub.s32 2, %v1294
    %v1296 = vrot.slane %v1283, %v1295
    %1300 = vmatprep.subr.mxu0 %v1236
    %1301 = vmatpush1.msra.mxu0 %v1235
    %1302 = vmatprep.subr.mxu0 %v1239
    %1303 = vmatpush1.msra.mxu0 %v1238
    %1304 = vmatprep.subr.mxu0 %v1242
    %1305 = vmatpush1.msra.mxu0 %v1241
    %1306 = vmatprep.subr.mxu0 %v1245
    %1307 = vmatpush1.msra.mxu0 %v1244
    %1308 = vmatprep.subr.mxu0 %v1248
    %1309 = vmatpush1.msra.mxu0 %v1247
    %1310 = vmatprep.subr.mxu0 %v1251
    %1311 = vmatpush1.msra.mxu0 %v1250
    %1312 = vmatprep.subr.mxu0 %v1254
    %1313 = vmatpush1.msra.mxu0 %v1253
    %1314 = vmatprep.subr.mxu0 %v1257
    %1315 = vmatpush1.msra.mxu0 %v1256
    %1316 = vmatprep.subr.mxu0 %v1260
    %1317 = vmatpush1.msra.mxu0 %v1259
    %1318 = vmatprep.subr.mxu0 %v1263
    %1319 = vmatpush1.msra.mxu0 %v1262
    %1320 = vmatprep.subr.mxu0 %v1266
    %1321 = vmatpush1.msra.mxu0 %v1265
    %1322 = vmatprep.subr.mxu0 %v1269
    %1323 = vmatpush1.msra.mxu0 %v1268
    %1324 = vmatprep.subr.mxu0 %v1272
    %1325 = vmatpush1.msra.mxu0 %v1271
    %1326 = vmatprep.subr.mxu0 %v1275
    %1327 = vmatpush1.msra.mxu0 %v1274
    %1328 = vmatprep.subr.mxu0 %v1278
    %1329 = vmatpush1.msra.mxu0 %v1277
    %1330 = vmatprep.subr.mxu0 %v1281
    %1331 = vmatpush1.msra.mxu0 %v1280
    %1332 = vmatprep.subr.mxu0 0.0
    %1333 = vmatpush1.msra.mxu0 0.0
    %1334 = vmatprep.subr.mxu0 0.0
    %1335 = vmatpush1.msra.mxu0 0.0
    %1336 = vmatprep.subr.mxu0 0.0
    %1337 = vmatpush1.msra.mxu0 0.0
    %1338 = vmatprep.subr.mxu0 0.0
    %1339 = vmatpush1.msra.mxu0 0.0
    %1340 = vmatprep.subr.mxu0 0.0
    %1341 = vmatpush1.msra.mxu0 0.0
    %1342 = vmatprep.subr.mxu0 0.0
    %1343 = vmatpush1.msra.mxu0 0.0
    %1344 = vmatprep.subr.mxu0 0.0
    %1345 = vmatpush1.msra.mxu0 0.0
    %1346 = vmatprep.subr.mxu0 0.0
    %1347 = vmatpush1.msra.mxu0 0.0
    %1348 = vmatprep.subr.mxu0 0.0
    %1349 = vmatpush1.msra.mxu0 0.0
    %1350 = vmatprep.subr.mxu0 0.0
    %1351 = vmatpush1.msra.mxu0 0.0
    %1352 = vmatprep.subr.mxu0 0.0
    %1353 = vmatpush1.msra.mxu0 0.0
    %1354 = vmatprep.subr.mxu0 0.0
    %1355 = vmatpush1.msra.mxu0 0.0
    %1356 = vmatprep.subr.mxu0 0.0
    %1357 = vmatpush1.msra.mxu0 0.0
    %1358 = vmatprep.subr.mxu0 0.0
    %1359 = vmatpush1.msra.mxu0 0.0
    %1360 = vmatprep.subr.mxu0 0.0
    %1361 = vmatpush1.msra.mxu0 0.0
    %1362 = vmatprep.subr.mxu0 0.0
    %1363 = vmatpush1.msra.mxu0 0.0
    %1364 = vmatprep.mubr.f32.mxu0 0.0
    %1365 = vmatmul.mubr.f32.gmra.mrb[0].mxu0 %v1231
    %v1366 = vpop.f32.mrb[0].mxu0
    %v1367 = vadd.f32 %v1288, %v1366
    %v1368 = vpop.f32.mrb[0].mxu0
    %v1369 = vadd.f32 %v1292, %v1368
    %1370 = vdwg.mxu0
    %1371 = vmatprep.subr.mxu0 0.0
    %1372 = vmatpush1.msra.mxu0 %v1237
    %1373 = vmatprep.subr.mxu0 0.0
    %1374 = vmatpush1.msra.mxu0 %v1240
    %1375 = vmatprep.subr.mxu0 0.0
    %1376 = vmatpush1.msra.mxu0 %v1243
    %1377 = vmatprep.subr.mxu0 0.0
    %1378 = vmatpush1.msra.mxu0 %v1246
    %1379 = vmatprep.subr.mxu0 0.0
    %1380 = vmatpush1.msra.mxu0 %v1249
    %1381 = vmatprep.subr.mxu0 0.0
    %1382 = vmatpush1.msra.mxu0 %v1252
    %1383 = vmatprep.subr.mxu0 0.0
    %1384 = vmatpush1.msra.mxu0 %v1255
    %1385 = vmatprep.subr.mxu0 0.0
    %1386 = vmatpush1.msra.mxu0 %v1258
    %1387 = vmatprep.subr.mxu0 0.0
    %1388 = vmatpush1.msra.mxu0 %v1261
    %1389 = vmatprep.subr.mxu0 0.0
    %1390 = vmatpush1.msra.mxu0 %v1264
    %1391 = vmatprep.subr.mxu0 0.0
    %1392 = vmatpush1.msra.mxu0 %v1267
    %1393 = vmatprep.subr.mxu0 0.0
    %1394 = vmatpush1.msra.mxu0 %v1270
    %1395 = vmatprep.subr.mxu0 0.0
    %1396 = vmatpush1.msra.mxu0 %v1273
    %1397 = vmatprep.subr.mxu0 0.0
    %1398 = vmatpush1.msra.mxu0 %v1276
    %1399 = vmatprep.subr.mxu0 0.0
    %1400 = vmatpush1.msra.mxu0 %v1279
    %1401 = vmatprep.subr.mxu0 0.0
    %1402 = vmatpush1.msra.mxu0 %v1282
    %1403 = vmatprep.subr.mxu0 0.0
    %1404 = vmatpush1.msra.mxu0 0.0
    %1405 = vmatprep.subr.mxu0 0.0
    %1406 = vmatpush1.msra.mxu0 0.0
    %1407 = vmatprep.subr.mxu0 0.0
    %1408 = vmatpush1.msra.mxu0 0.0
    %1409 = vmatprep.subr.mxu0 0.0
    %1410 = vmatpush1.msra.mxu0 0.0
    %1411 = vmatprep.subr.mxu0 0.0
    %1412 = vmatpush1.msra.mxu0 0.0
    %1413 = vmatprep.subr.mxu0 0.0
    %1414 = vmatpush1.msra.mxu0 0.0
    %1415 = vmatprep.subr.mxu0 0.0
    %1416 = vmatpush1.msra.mxu0 0.0
    %1417 = vmatprep.subr.mxu0 0.0
    %1418 = vmatpush1.msra.mxu0 0.0
    %1419 = vmatprep.subr.mxu0 0.0
    %1420 = vmatpush1.msra.mxu0 0.0
    %1421 = vmatprep.subr.mxu0 0.0
    %1422 = vmatpush1.msra.mxu0 0.0
    %1423 = vmatprep.subr.mxu0 0.0
    %1424 = vmatpush1.msra.mxu0 0.0
    %1425 = vmatprep.subr.mxu0 0.0
    %1426 = vmatpush1.msra.mxu0 0.0
    %1427 = vmatprep.subr.mxu0 0.0
    %1428 = vmatpush1.msra.mxu0 0.0
    %1429 = vmatprep.subr.mxu0 0.0
    %1430 = vmatpush1.msra.mxu0 0.0
    %1431 = vmatprep.subr.mxu0 0.0
    %1432 = vmatpush1.msra.mxu0 0.0
    %1433 = vmatprep.subr.mxu0 0.0
    %1434 = vmatpush1.msra.mxu0 0.0
    %1435 = vmatprep.mubr.f32.mxu0 0.0
    %1436 = vmatmul.mubr.f32.gmra.mrb[0].mxu0 %v1231
    %v1437 = vpop.f32.mrb[0].mxu0
    %v1438 = vadd.f32 %v1296, %v1437
    %v1439 = vpop.f32.mrb[0].mxu0
    %1440 = vdwg.mxu0
    %v1441 = vadd.f32 %v1234, %v1367
    %v1442 = vxor.u32 %v1441, 2147483648
    %v1443 = vmul.f32 %v1442, 1.442695
    %v1444 = vpow.pop %v1443
    %v1445 = vadd.f32 %v1444, 1.0
    %v1446 = vrcp.pop %v1445
    %v1447 = vmul.f32 1.0, %v1446
    %v1449 = vrot.slane %v1234, 1
    %v1451 = vadd.f32 %v1449, %v1369
    %v1452 = vxor.u32 %v1451, 2147483648
    %v1453 = vmul.f32 %v1452, 1.442695
    %v1454 = vpow.pop %v1453
    %v1455 = vadd.f32 %v1454, 1.0
    %v1456 = vrcp.pop %v1455
    %v1457 = vmul.f32 1.0, %v1456
    %v1458 = vmul.f32 %v1447, %v1438
    %v1459 = vrot.slane %v1234, 2
    %v1461 = vadd.f32 %v1459, %v1458
    %v1462 = vtanh.pop %v1461
    %v1463 = vsub.f32 %v1231, %v1462
    %v1464 = vmul.f32 %v1457, %v1463
    %v1465 = vadd.f32 %v1462, %v1464
    %1466 = vst [vmem:[#allocation5 + $0x3] sm:$0x1] %v1465
    %s1467 = scalar_lea.vmem [#allocation4], 4
    %v1468 = vld [vmem:[%s1467] ss:$8 sm:$0x7]
    %v1469 = vld [vmem:[#allocation14] sm:$0xff]
    %v1470 = vld [vmem:[#allocation14 + $0x8] sm:$0xff]
    %v1471 = vld [vmem:[#allocation14 + $0x10] sm:$0xff]
    %v1472 = vld [vmem:[#allocation14 + $0x18] sm:$0xff]
    %v1473 = vld [vmem:[#allocation14 + $0x20] sm:$0xff]
    %v1474 = vld [vmem:[#allocation14 + $0x28] sm:$0xff]
    %v1475 = vld [vmem:[#allocation14 + $0x30] sm:$0xff]
    %v1476 = vld [vmem:[#allocation14 + $0x38] sm:$0xff]
    %v1477 = vld [vmem:[#allocation14 + $0x40] sm:$0xff]
    %v1478 = vld [vmem:[#allocation14 + $0x48] sm:$0xff]
    %v1479 = vld [vmem:[#allocation14 + $0x50] sm:$0xff]
    %v1480 = vld [vmem:[#allocation14 + $0x58] sm:$0xff]
    %v1481 = vld [vmem:[#allocation14 + $0x60] sm:$0xff]
    %v1482 = vld [vmem:[#allocation14 + $0x68] sm:$0xff]
    %v1483 = vld [vmem:[#allocation14 + $0x70] sm:$0xff]
    %v1484 = vld [vmem:[#allocation14 + $0x78] sm:$0xff]
    %v1485 = vld [vmem:[#allocation14 + $0x80] sm:$0xff]
    %v1486 = vld [vmem:[#allocation14 + $0x88] sm:$0xff]
    %v1487 = vld [vmem:[#allocation14 + $0x90] sm:$0xff]
    %v1488 = vld [vmem:[#allocation14 + $0x98] sm:$0xff]
    %v1489 = vld [vmem:[#allocation14 + $0xa0] sm:$0xff]
    %v1490 = vld [vmem:[#allocation14 + $0xa8] sm:$0xff]
    %v1491 = vld [vmem:[#allocation14 + $0xb0] sm:$0xff]
    %v1492 = vld [vmem:[#allocation14 + $0xb8] sm:$0xff]
    %v1493 = vld [vmem:[#allocation14 + $0xc0] sm:$0xff]
    %v1494 = vld [vmem:[#allocation14 + $0xc8] sm:$0xff]
    %v1495 = vld [vmem:[#allocation14 + $0xd0] sm:$0xff]
    %v1496 = vld [vmem:[#allocation14 + $0xd8] sm:$0xff]
    %v1497 = vld [vmem:[#allocation14 + $0xe0] sm:$0xff]
    %v1498 = vld [vmem:[#allocation14 + $0xe8] sm:$0xff]
    %v1499 = vld [vmem:[#allocation14 + $0xf0] sm:$0xff]
    %v1500 = vld [vmem:[#allocation14 + $0xf8] sm:$0xff]
    %v1501 = vld [vmem:[#allocation14 + $0x100] sm:$0xff]
    %v1502 = vld [vmem:[#allocation14 + $0x108] sm:$0xff]
    %v1503 = vld [vmem:[#allocation14 + $0x110] sm:$0xff]
    %v1504 = vld [vmem:[#allocation14 + $0x118] sm:$0xff]
    %v1505 = vld [vmem:[#allocation14 + $0x120] sm:$0xff]
    %v1506 = vld [vmem:[#allocation14 + $0x128] sm:$0xff]
    %v1507 = vld [vmem:[#allocation14 + $0x130] sm:$0xff]
    %v1508 = vld [vmem:[#allocation14 + $0x138] sm:$0xff]
    %v1509 = vld [vmem:[#allocation14 + $0x140] sm:$0xff]
    %v1510 = vld [vmem:[#allocation14 + $0x148] sm:$0xff]
    %v1511 = vld [vmem:[#allocation14 + $0x150] sm:$0xff]
    %v1512 = vld [vmem:[#allocation14 + $0x158] sm:$0xff]
    %v1513 = vld [vmem:[#allocation14 + $0x160] sm:$0xff]
    %v1514 = vld [vmem:[#allocation14 + $0x168] sm:$0xff]
    %v1515 = vld [vmem:[#allocation14 + $0x170] sm:$0xff]
    %v1516 = vld [vmem:[#allocation14 + $0x178] sm:$0xff]
    %v1517 = vld [vmem:[%s6] sm:$0x7]
    %v1519 = vlaneseq
    %v1520 = vshrl.u32 %v1519, 7
    %v1521 = vsub.s32 0, %v1520
    %v1522 = vrot.slane %v1517, %v1521
    %v1523 = vlaneseq
    %v1524 = vshrl.u32 %v1523, 7
    %v1525 = vsub.s32 1, %v1524
    %v1526 = vrot.slane %v1517, %v1525
    %v1527 = vlaneseq
    %v1528 = vshrl.u32 %v1527, 7
    %v1529 = vsub.s32 2, %v1528
    %v1530 = vrot.slane %v1517, %v1529
    %1534 = vmatprep.subr.mxu0 %v1470
    %1535 = vmatpush1.msra.mxu0 %v1469
    %1536 = vmatprep.subr.mxu0 %v1473
    %1537 = vmatpush1.msra.mxu0 %v1472
    %1538 = vmatprep.subr.mxu0 %v1476
    %1539 = vmatpush1.msra.mxu0 %v1475
    %1540 = vmatprep.subr.mxu0 %v1479
    %1541 = vmatpush1.msra.mxu0 %v1478
    %1542 = vmatprep.subr.mxu0 %v1482
    %1543 = vmatpush1.msra.mxu0 %v1481
    %1544 = vmatprep.subr.mxu0 %v1485
    %1545 = vmatpush1.msra.mxu0 %v1484
    %1546 = vmatprep.subr.mxu0 %v1488
    %1547 = vmatpush1.msra.mxu0 %v1487
    %1548 = vmatprep.subr.mxu0 %v1491
    %1549 = vmatpush1.msra.mxu0 %v1490
    %1550 = vmatprep.subr.mxu0 %v1494
    %1551 = vmatpush1.msra.mxu0 %v1493
    %1552 = vmatprep.subr.mxu0 %v1497
    %1553 = vmatpush1.msra.mxu0 %v1496
    %1554 = vmatprep.subr.mxu0 %v1500
    %1555 = vmatpush1.msra.mxu0 %v1499
    %1556 = vmatprep.subr.mxu0 %v1503
    %1557 = vmatpush1.msra.mxu0 %v1502
    %1558 = vmatprep.subr.mxu0 %v1506
    %1559 = vmatpush1.msra.mxu0 %v1505
    %1560 = vmatprep.subr.mxu0 %v1509
    %1561 = vmatpush1.msra.mxu0 %v1508
    %1562 = vmatprep.subr.mxu0 %v1512
    %1563 = vmatpush1.msra.mxu0 %v1511
    %1564 = vmatprep.subr.mxu0 %v1515
    %1565 = vmatpush1.msra.mxu0 %v1514
    %1566 = vmatprep.subr.mxu0 0.0
    %1567 = vmatpush1.msra.mxu0 0.0
    %1568 = vmatprep.subr.mxu0 0.0
    %1569 = vmatpush1.msra.mxu0 0.0
    %1570 = vmatprep.subr.mxu0 0.0
    %1571 = vmatpush1.msra.mxu0 0.0
    %1572 = vmatprep.subr.mxu0 0.0
    %1573 = vmatpush1.msra.mxu0 0.0
    %1574 = vmatprep.subr.mxu0 0.0
    %1575 = vmatpush1.msra.mxu0 0.0
    %1576 = vmatprep.subr.mxu0 0.0
    %1577 = vmatpush1.msra.mxu0 0.0
    %1578 = vmatprep.subr.mxu0 0.0
    %1579 = vmatpush1.msra.mxu0 0.0
    %1580 = vmatprep.subr.mxu0 0.0
    %1581 = vmatpush1.msra.mxu0 0.0
    %1582 = vmatprep.subr.mxu0 0.0
    %1583 = vmatpush1.msra.mxu0 0.0
    %1584 = vmatprep.subr.mxu0 0.0
    %1585 = vmatpush1.msra.mxu0 0.0
    %1586 = vmatprep.subr.mxu0 0.0
    %1587 = vmatpush1.msra.mxu0 0.0
    %1588 = vmatprep.subr.mxu0 0.0
    %1589 = vmatpush1.msra.mxu0 0.0
    %1590 = vmatprep.subr.mxu0 0.0
    %1591 = vmatpush1.msra.mxu0 0.0
    %1592 = vmatprep.subr.mxu0 0.0
    %1593 = vmatpush1.msra.mxu0 0.0
    %1594 = vmatprep.subr.mxu0 0.0
    %1595 = vmatpush1.msra.mxu0 0.0
    %1596 = vmatprep.subr.mxu0 0.0
    %1597 = vmatpush1.msra.mxu0 0.0
    %1598 = vmatprep.mubr.f32.mxu0 0.0
    %1599 = vmatmul.mubr.f32.gmra.mrb[0].mxu0 %v1465
    %v1600 = vpop.f32.mrb[0].mxu0
    %v1601 = vadd.f32 %v1522, %v1600
    %v1602 = vpop.f32.mrb[0].mxu0
    %v1603 = vadd.f32 %v1526, %v1602
    %1604 = vdwg.mxu0
    %1605 = vmatprep.subr.mxu0 0.0
    %1606 = vmatpush1.msra.mxu0 %v1471
    %1607 = vmatprep.subr.mxu0 0.0
    %1608 = vmatpush1.msra.mxu0 %v1474
    %1609 = vmatprep.subr.mxu0 0.0
    %1610 = vmatpush1.msra.mxu0 %v1477
    %1611 = vmatprep.subr.mxu0 0.0
    %1612 = vmatpush1.msra.mxu0 %v1480
    %1613 = vmatprep.subr.mxu0 0.0
    %1614 = vmatpush1.msra.mxu0 %v1483
    %1615 = vmatprep.subr.mxu0 0.0
    %1616 = vmatpush1.msra.mxu0 %v1486
    %1617 = vmatprep.subr.mxu0 0.0
    %1618 = vmatpush1.msra.mxu0 %v1489
    %1619 = vmatprep.subr.mxu0 0.0
    %1620 = vmatpush1.msra.mxu0 %v1492
    %1621 = vmatprep.subr.mxu0 0.0
    %1622 = vmatpush1.msra.mxu0 %v1495
    %1623 = vmatprep.subr.mxu0 0.0
    %1624 = vmatpush1.msra.mxu0 %v1498
    %1625 = vmatprep.subr.mxu0 0.0
    %1626 = vmatpush1.msra.mxu0 %v1501
    %1627 = vmatprep.subr.mxu0 0.0
    %1628 = vmatpush1.msra.mxu0 %v1504
    %1629 = vmatprep.subr.mxu0 0.0
    %1630 = vmatpush1.msra.mxu0 %v1507
    %1631 = vmatprep.subr.mxu0 0.0
    %1632 = vmatpush1.msra.mxu0 %v1510
    %1633 = vmatprep.subr.mxu0 0.0
    %1634 = vmatpush1.msra.mxu0 %v1513
    %1635 = vmatprep.subr.mxu0 0.0
    %1636 = vmatpush1.msra.mxu0 %v1516
    %1637 = vmatprep.subr.mxu0 0.0
    %1638 = vmatpush1.msra.mxu0 0.0
    %1639 = vmatprep.subr.mxu0 0.0
    %1640 = vmatpush1.msra.mxu0 0.0
    %1641 = vmatprep.subr.mxu0 0.0
    %1642 = vmatpush1.msra.mxu0 0.0
    %1643 = vmatprep.subr.mxu0 0.0
    %1644 = vmatpush1.msra.mxu0 0.0
    %1645 = vmatprep.subr.mxu0 0.0
    %1646 = vmatpush1.msra.mxu0 0.0
    %1647 = vmatprep.subr.mxu0 0.0
    %1648 = vmatpush1.msra.mxu0 0.0
    %1649 = vmatprep.subr.mxu0 0.0
    %1650 = vmatpush1.msra.mxu0 0.0
    %1651 = vmatprep.subr.mxu0 0.0
    %1652 = vmatpush1.msra.mxu0 0.0
    %1653 = vmatprep.subr.mxu0 0.0
    %1654 = vmatpush1.msra.mxu0 0.0
    %1655 = vmatprep.subr.mxu0 0.0
    %1656 = vmatpush1.msra.mxu0 0.0
    %1657 = vmatprep.subr.mxu0 0.0
    %1658 = vmatpush1.msra.mxu0 0.0
    %1659 = vmatprep.subr.mxu0 0.0
    %1660 = vmatpush1.msra.mxu0 0.0
    %1661 = vmatprep.subr.mxu0 0.0
    %1662 = vmatpush1.msra.mxu0 0.0
    %1663 = vmatprep.subr.mxu0 0.0
    %1664 = vmatpush1.msra.mxu0 0.0
    %1665 = vmatprep.subr.mxu0 0.0
    %1666 = vmatpush1.msra.mxu0 0.0
    %1667 = vmatprep.subr.mxu0 0.0
    %1668 = vmatpush1.msra.mxu0 0.0
    %1669 = vmatprep.mubr.f32.mxu0 0.0
    %1670 = vmatmul.mubr.f32.gmra.mrb[0].mxu0 %v1465
    %v1671 = vpop.f32.mrb[0].mxu0
    %v1672 = vadd.f32 %v1530, %v1671
    %v1673 = vpop.f32.mrb[0].mxu0
    %1674 = vdwg.mxu0
    %v1675 = vadd.f32 %v1468, %v1601
    %v1676 = vxor.u32 %v1675, 2147483648
    %v1677 = vmul.f32 %v1676, 1.442695
    %v1678 = vpow.pop %v1677
    %v1679 = vadd.f32 %v1678, 1.0
    %v1680 = vrcp.pop %v1679
    %v1681 = vmul.f32 1.0, %v1680
    %v1683 = vrot.slane %v1468, 1
    %v1685 = vadd.f32 %v1683, %v1603
    %v1686 = vxor.u32 %v1685, 2147483648
    %v1687 = vmul.f32 %v1686, 1.442695
    %v1688 = vpow.pop %v1687
    %v1689 = vadd.f32 %v1688, 1.0
    %v1690 = vrcp.pop %v1689
    %v1691 = vmul.f32 1.0, %v1690
    %v1692 = vmul.f32 %v1681, %v1672
    %v1693 = vrot.slane %v1468, 2
    %v1695 = vadd.f32 %v1693, %v1692
    %v1696 = vtanh.pop %v1695
    %v1697 = vsub.f32 %v1465, %v1696
    %v1698 = vmul.f32 %v1691, %v1697
    %v1699 = vadd.f32 %v1696, %v1698
    %1700 = vst [vmem:[#allocation5 + $0x4] sm:$0x1] %v1699
    %s1701 = scalar_lea.vmem [#allocation4], 5
    %v1702 = vld [vmem:[%s1701] ss:$8 sm:$0x7]
    %v1703 = vld [vmem:[#allocation14] sm:$0xff]
    %v1704 = vld [vmem:[#allocation14 + $0x8] sm:$0xff]
    %v1705 = vld [vmem:[#allocation14 + $0x10] sm:$0xff]
    %v1706 = vld [vmem:[#allocation14 + $0x18] sm:$0xff]
    %v1707 = vld [vmem:[#allocation14 + $0x20] sm:$0xff]
    %v1708 = vld [vmem:[#allocation14 + $0x28] sm:$0xff]
    %v1709 = vld [vmem:[#allocation14 + $0x30] sm:$0xff]
    %v1710 = vld [vmem:[#allocation14 + $0x38] sm:$0xff]
    %v1711 = vld [vmem:[#allocation14 + $0x40] sm:$0xff]
    %v1712 = vld [vmem:[#allocation14 + $0x48] sm:$0xff]
    %v1713 = vld [vmem:[#allocation14 + $0x50] sm:$0xff]
    %v1714 = vld [vmem:[#allocation14 + $0x58] sm:$0xff]
    %v1715 = vld [vmem:[#allocation14 + $0x60] sm:$0xff]
    %v1716 = vld [vmem:[#allocation14 + $0x68] sm:$0xff]
    %v1717 = vld [vmem:[#allocation14 + $0x70] sm:$0xff]
    %v1718 = vld [vmem:[#allocation14 + $0x78] sm:$0xff]
    %v1719 = vld [vmem:[#allocation14 + $0x80] sm:$0xff]
    %v1720 = vld [vmem:[#allocation14 + $0x88] sm:$0xff]
    %v1721 = vld [vmem:[#allocation14 + $0x90] sm:$0xff]
    %v1722 = vld [vmem:[#allocation14 + $0x98] sm:$0xff]
    %v1723 = vld [vmem:[#allocation14 + $0xa0] sm:$0xff]
    %v1724 = vld [vmem:[#allocation14 + $0xa8] sm:$0xff]
    %v1725 = vld [vmem:[#allocation14 + $0xb0] sm:$0xff]
    %v1726 = vld [vmem:[#allocation14 + $0xb8] sm:$0xff]
    %v1727 = vld [vmem:[#allocation14 + $0xc0] sm:$0xff]
    %v1728 = vld [vmem:[#allocation14 + $0xc8] sm:$0xff]
    %v1729 = vld [vmem:[#allocation14 + $0xd0] sm:$0xff]
    %v1730 = vld [vmem:[#allocation14 + $0xd8] sm:$0xff]
    %v1731 = vld [vmem:[#allocation14 + $0xe0] sm:$0xff]
    %v1732 = vld [vmem:[#allocation14 + $0xe8] sm:$0xff]
    %v1733 = vld [vmem:[#allocation14 + $0xf0] sm:$0xff]
    %v1734 = vld [vmem:[#allocation14 + $0xf8] sm:$0xff]
    %v1735 = vld [vmem:[#allocation14 + $0x100] sm:$0xff]
    %v1736 = vld [vmem:[#allocation14 + $0x108] sm:$0xff]
    %v1737 = vld [vmem:[#allocation14 + $0x110] sm:$0xff]
    %v1738 = vld [vmem:[#allocation14 + $0x118] sm:$0xff]
    %v1739 = vld [vmem:[#allocation14 + $0x120] sm:$0xff]
    %v1740 = vld [vmem:[#allocation14 + $0x128] sm:$0xff]
    %v1741 = vld [vmem:[#allocation14 + $0x130] sm:$0xff]
    %v1742 = vld [vmem:[#allocation14 + $0x138] sm:$0xff]
    %v1743 = vld [vmem:[#allocation14 + $0x140] sm:$0xff]
    %v1744 = vld [vmem:[#allocation14 + $0x148] sm:$0xff]
    %v1745 = vld [vmem:[#allocation14 + $0x150] sm:$0xff]
    %v1746 = vld [vmem:[#allocation14 + $0x158] sm:$0xff]
    %v1747 = vld [vmem:[#allocation14 + $0x160] sm:$0xff]
    %v1748 = vld [vmem:[#allocation14 + $0x168] sm:$0xff]
    %v1749 = vld [vmem:[#allocation14 + $0x170] sm:$0xff]
    %v1750 = vld [vmem:[#allocation14 + $0x178] sm:$0xff]
    %v1751 = vld [vmem:[%s6] sm:$0x7]
    %v1753 = vlaneseq
    %v1754 = vshrl.u32 %v1753, 7
    %v1755 = vsub.s32 0, %v1754
    %v1756 = vrot.slane %v1751, %v1755
    %v1757 = vlaneseq
    %v1758 = vshrl.u32 %v1757, 7
    %v1759 = vsub.s32 1, %v1758
    %v1760 = vrot.slane %v1751, %v1759
    %v1761 = vlaneseq
    %v1762 = vshrl.u32 %v1761, 7
    %v1763 = vsub.s32 2, %v1762
    %v1764 = vrot.slane %v1751, %v1763
    %1768 = vmatprep.subr.mxu0 %v1704
    %1769 = vmatpush1.msra.mxu0 %v1703
    %1770 = vmatprep.subr.mxu0 %v1707
    %1771 = vmatpush1.msra.mxu0 %v1706
    %1772 = vmatprep.subr.mxu0 %v1710
    %1773 = vmatpush1.msra.mxu0 %v1709
    %1774 = vmatprep.subr.mxu0 %v1713
    %1775 = vmatpush1.msra.mxu0 %v1712
    %1776 = vmatprep.subr.mxu0 %v1716
    %1777 = vmatpush1.msra.mxu0 %v1715
    %1778 = vmatprep.subr.mxu0 %v1719
    %1779 = vmatpush1.msra.mxu0 %v1718
    %1780 = vmatprep.subr.mxu0 %v1722
    %1781 = vmatpush1.msra.mxu0 %v1721
    %1782 = vmatprep.subr.mxu0 %v1725
    %1783 = vmatpush1.msra.mxu0 %v1724
    %1784 = vmatprep.subr.mxu0 %v1728
    %1785 = vmatpush1.msra.mxu0 %v1727
    %1786 = vmatprep.subr.mxu0 %v1731
    %1787 = vmatpush1.msra.mxu0 %v1730
    %1788 = vmatprep.subr.mxu0 %v1734
    %1789 = vmatpush1.msra.mxu0 %v1733
    %1790 = vmatprep.subr.mxu0 %v1737
    %1791 = vmatpush1.msra.mxu0 %v1736
    %1792 = vmatprep.subr.mxu0 %v1740
    %1793 = vmatpush1.msra.mxu0 %v1739
    %1794 = vmatprep.subr.mxu0 %v1743
    %1795 = vmatpush1.msra.mxu0 %v1742
    %1796 = vmatprep.subr.mxu0 %v1746
    %1797 = vmatpush1.msra.mxu0 %v1745
    %1798 = vmatprep.subr.mxu0 %v1749
    %1799 = vmatpush1.msra.mxu0 %v1748
    %1800 = vmatprep.subr.mxu0 0.0
    %1801 = vmatpush1.msra.mxu0 0.0
    %1802 = vmatprep.subr.mxu0 0.0
    %1803 = vmatpush1.msra.mxu0 0.0
    %1804 = vmatprep.subr.mxu0 0.0
    %1805 = vmatpush1.msra.mxu0 0.0
    %1806 = vmatprep.subr.mxu0 0.0
    %1807 = vmatpush1.msra.mxu0 0.0
    %1808 = vmatprep.subr.mxu0 0.0
    %1809 = vmatpush1.msra.mxu0 0.0
    %1810 = vmatprep.subr.mxu0 0.0
    %1811 = vmatpush1.msra.mxu0 0.0
    %1812 = vmatprep.subr.mxu0 0.0
    %1813 = vmatpush1.msra.mxu0 0.0
    %1814 = vmatprep.subr.mxu0 0.0
    %1815 = vmatpush1.msra.mxu0 0.0
    %1816 = vmatprep.subr.mxu0 0.0
    %1817 = vmatpush1.msra.mxu0 0.0
    %1818 = vmatprep.subr.mxu0 0.0
    %1819 = vmatpush1.msra.mxu0 0.0
    %1820 = vmatprep.subr.mxu0 0.0
    %1821 = vmatpush1.msra.mxu0 0.0
    %1822 = vmatprep.subr.mxu0 0.0
    %1823 = vmatpush1.msra.mxu0 0.0
    %1824 = vmatprep.subr.mxu0 0.0
    %1825 = vmatpush1.msra.mxu0 0.0
    %1826 = vmatprep.subr.mxu0 0.0
    %1827 = vmatpush1.msra.mxu0 0.0
    %1828 = vmatprep.subr.mxu0 0.0
    %1829 = vmatpush1.msra.mxu0 0.0
    %1830 = vmatprep.subr.mxu0 0.0
    %1831 = vmatpush1.msra.mxu0 0.0
    %1832 = vmatprep.mubr.f32.mxu0 0.0
    %1833 = vmatmul.mubr.f32.gmra.mrb[0].mxu0 %v1699
    %v1834 = vpop.f32.mrb[0].mxu0
    %v1835 = vadd.f32 %v1756, %v1834
    %v1836 = vpop.f32.mrb[0].mxu0
    %v1837 = vadd.f32 %v1760, %v1836
    %1838 = vdwg.mxu0
    %1839 = vmatprep.subr.mxu0 0.0
    %1840 = vmatpush1.msra.mxu0 %v1705
    %1841 = vmatprep.subr.mxu0 0.0
    %1842 = vmatpush1.msra.mxu0 %v1708
    %1843 = vmatprep.subr.mxu0 0.0
    %1844 = vmatpush1.msra.mxu0 %v1711
    %1845 = vmatprep.subr.mxu0 0.0
    %1846 = vmatpush1.msra.mxu0 %v1714
    %1847 = vmatprep.subr.mxu0 0.0
    %1848 = vmatpush1.msra.mxu0 %v1717
    %1849 = vmatprep.subr.mxu0 0.0
    %1850 = vmatpush1.msra.mxu0 %v1720
    %1851 = vmatprep.subr.mxu0 0.0
    %1852 = vmatpush1.msra.mxu0 %v1723
    %1853 = vmatprep.subr.mxu0 0.0
    %1854 = vmatpush1.msra.mxu0 %v1726
    %1855 = vmatprep.subr.mxu0 0.0
    %1856 = vmatpush1.msra.mxu0 %v1729
    %1857 = vmatprep.subr.mxu0 0.0
    %1858 = vmatpush1.msra.mxu0 %v1732
    %1859 = vmatprep.subr.mxu0 0.0
    %1860 = vmatpush1.msra.mxu0 %v1735
    %1861 = vmatprep.subr.mxu0 0.0
    %1862 = vmatpush1.msra.mxu0 %v1738
    %1863 = vmatprep.subr.mxu0 0.0
    %1864 = vmatpush1.msra.mxu0 %v1741
    %1865 = vmatprep.subr.mxu0 0.0
    %1866 = vmatpush1.msra.mxu0 %v1744
    %1867 = vmatprep.subr.mxu0 0.0
    %1868 = vmatpush1.msra.mxu0 %v1747
    %1869 = vmatprep.subr.mxu0 0.0
    %1870 = vmatpush1.msra.mxu0 %v1750
    %1871 = vmatprep.subr.mxu0 0.0
    %1872 = vmatpush1.msra.mxu0 0.0
    %1873 = vmatprep.subr.mxu0 0.0
    %1874 = vmatpush1.msra.mxu0 0.0
    %1875 = vmatprep.subr.mxu0 0.0
    %1876 = vmatpush1.msra.mxu0 0.0
    %1877 = vmatprep.subr.mxu0 0.0
    %1878 = vmatpush1.msra.mxu0 0.0
    %1879 = vmatprep.subr.mxu0 0.0
    %1880 = vmatpush1.msra.mxu0 0.0
    %1881 = vmatprep.subr.mxu0 0.0
    %1882 = vmatpush1.msra.mxu0 0.0
    %1883 = vmatprep.subr.mxu0 0.0
    %1884 = vmatpush1.msra.mxu0 0.0
    %1885 = vmatprep.subr.mxu0 0.0
    %1886 = vmatpush1.msra.mxu0 0.0
    %1887 = vmatprep.subr.mxu0 0.0
    %1888 = vmatpush1.msra.mxu0 0.0
    %1889 = vmatprep.subr.mxu0 0.0
    %1890 = vmatpush1.msra.mxu0 0.0
    %1891 = vmatprep.subr.mxu0 0.0
    %1892 = vmatpush1.msra.mxu0 0.0
    %1893 = vmatprep.subr.mxu0 0.0
    %1894 = vmatpush1.msra.mxu0 0.0
    %1895 = vmatprep.subr.mxu0 0.0
    %1896 = vmatpush1.msra.mxu0 0.0
    %1897 = vmatprep.subr.mxu0 0.0
    %1898 = vmatpush1.msra.mxu0 0.0
    %1899 = vmatprep.subr.mxu0 0.0
    %1900 = vmatpush1.msra.mxu0 0.0
    %1901 = vmatprep.subr.mxu0 0.0
    %1902 = vmatpush1.msra.mxu0 0.0
    %1903 = vmatprep.mubr.f32.mxu0 0.0
    %1904 = vmatmul.mubr.f32.gmra.mrb[0].mxu0 %v1699
    %v1905 = vpop.f32.mrb[0].mxu0
    %v1906 = vadd.f32 %v1764, %v1905
    %v1907 = vpop.f32.mrb[0].mxu0
    %1908 = vdwg.mxu0
    %v1909 = vadd.f32 %v1702, %v1835
    %v1910 = vxor.u32 %v1909, 2147483648
    %v1911 = vmul.f32 %v1910, 1.442695
    %v1912 = vpow.pop %v1911
    %v1913 = vadd.f32 %v1912, 1.0
    %v1914 = vrcp.pop %v1913
    %v1915 = vmul.f32 1.0, %v1914
    %v1917 = vrot.slane %v1702, 1
    %v1919 = vadd.f32 %v1917, %v1837
    %v1920 = vxor.u32 %v1919, 2147483648
    %v1921 = vmul.f32 %v1920, 1.442695
    %v1922 = vpow.pop %v1921
    %v1923 = vadd.f32 %v1922, 1.0
    %v1924 = vrcp.pop %v1923
    %v1925 = vmul.f32 1.0, %v1924
    %v1926 = vmul.f32 %v1915, %v1906
    %v1927 = vrot.slane %v1702, 2
    %v1929 = vadd.f32 %v1927, %v1926
    %v1930 = vtanh.pop %v1929
    %v1931 = vsub.f32 %v1699, %v1930
    %v1932 = vmul.f32 %v1925, %v1931
    %v1933 = vadd.f32 %v1930, %v1932
    %1934 = vst [vmem:[#allocation5 + $0x5] sm:$0x1] %v1933
    %s1935 = scalar_lea.vmem [#allocation4], 6
    %v1936 = vld [vmem:[%s1935] ss:$8 sm:$0x7]
    %v1937 = vld [vmem:[#allocation14] sm:$0xff]
    %v1938 = vld [vmem:[#allocation14 + $0x8] sm:$0xff]
    %v1939 = vld [vmem:[#allocation14 + $0x10] sm:$0xff]
    %v1940 = vld [vmem:[#allocation14 + $0x18] sm:$0xff]
    %v1941 = vld [vmem:[#allocation14 + $0x20] sm:$0xff]
    %v1942 = vld [vmem:[#allocation14 + $0x28] sm:$0xff]
    %v1943 = vld [vmem:[#allocation14 + $0x30] sm:$0xff]
    %v1944 = vld [vmem:[#allocation14 + $0x38] sm:$0xff]
    %v1945 = vld [vmem:[#allocation14 + $0x40] sm:$0xff]
    %v1946 = vld [vmem:[#allocation14 + $0x48] sm:$0xff]
    %v1947 = vld [vmem:[#allocation14 + $0x50] sm:$0xff]
    %v1948 = vld [vmem:[#allocation14 + $0x58] sm:$0xff]
    %v1949 = vld [vmem:[#allocation14 + $0x60] sm:$0xff]
    %v1950 = vld [vmem:[#allocation14 + $0x68] sm:$0xff]
    %v1951 = vld [vmem:[#allocation14 + $0x70] sm:$0xff]
    %v1952 = vld [vmem:[#allocation14 + $0x78] sm:$0xff]
    %v1953 = vld [vmem:[#allocation14 + $0x80] sm:$0xff]
    %v1954 = vld [vmem:[#allocation14 + $0x88] sm:$0xff]
    %v1955 = vld [vmem:[#allocation14 + $0x90] sm:$0xff]
    %v1956 = vld [vmem:[#allocation14 + $0x98] sm:$0xff]
    %v1957 = vld [vmem:[#allocation14 + $0xa0] sm:$0xff]
    %v1958 = vld [vmem:[#allocation14 + $0xa8] sm:$0xff]
    %v1959 = vld [vmem:[#allocation14 + $0xb0] sm:$0xff]
    %v1960 = vld [vmem:[#allocation14 + $0xb8] sm:$0xff]
    %v1961 = vld [vmem:[#allocation14 + $0xc0] sm:$0xff]
    %v1962 = vld [vmem:[#allocation14 + $0xc8] sm:$0xff]
    %v1963 = vld [vmem:[#allocation14 + $0xd0] sm:$0xff]
    %v1964 = vld [vmem:[#allocation14 + $0xd8] sm:$0xff]
    %v1965 = vld [vmem:[#allocation14 + $0xe0] sm:$0xff]
    %v1966 = vld [vmem:[#allocation14 + $0xe8] sm:$0xff]
    %v1967 = vld [vmem:[#allocation14 + $0xf0] sm:$0xff]
    %v1968 = vld [vmem:[#allocation14 + $0xf8] sm:$0xff]
    %v1969 = vld [vmem:[#allocation14 + $0x100] sm:$0xff]
    %v1970 = vld [vmem:[#allocation14 + $0x108] sm:$0xff]
    %v1971 = vld [vmem:[#allocation14 + $0x110] sm:$0xff]
    %v1972 = vld [vmem:[#allocation14 + $0x118] sm:$0xff]
    %v1973 = vld [vmem:[#allocation14 + $0x120] sm:$0xff]
    %v1974 = vld [vmem:[#allocation14 + $0x128] sm:$0xff]
    %v1975 = vld [vmem:[#allocation14 + $0x130] sm:$0xff]
    %v1976 = vld [vmem:[#allocation14 + $0x138] sm:$0xff]
    %v1977 = vld [vmem:[#allocation14 + $0x140] sm:$0xff]
    %v1978 = vld [vmem:[#allocation14 + $0x148] sm:$0xff]
    %v1979 = vld [vmem:[#allocation14 + $0x150] sm:$0xff]
    %v1980 = vld [vmem:[#allocation14 + $0x158] sm:$0xff]
    %v1981 = vld [vmem:[#allocation14 + $0x160] sm:$0xff]
    %v1982 = vld [vmem:[#allocation14 + $0x168] sm:$0xff]
    %v1983 = vld [vmem:[#allocation14 + $0x170] sm:$0xff]
    %v1984 = vld [vmem:[#allocation14 + $0x178] sm:$0xff]
    %v1985 = vld [vmem:[%s6] sm:$0x7]
    %v1987 = vlaneseq
    %v1988 = vshrl.u32 %v1987, 7
    %v1989 = vsub.s32 0, %v1988
    %v1990 = vrot.slane %v1985, %v1989
    %v1991 = vlaneseq
    %v1992 = vshrl.u32 %v1991, 7
    %v1993 = vsub.s32 1, %v1992
    %v1994 = vrot.slane %v1985, %v1993
    %v1995 = vlaneseq
    %v1996 = vshrl.u32 %v1995, 7
    %v1997 = vsub.s32 2, %v1996
    %v1998 = vrot.slane %v1985, %v1997
    %2002 = vmatprep.subr.mxu0 %v1938
    %2003 = vmatpush1.msra.mxu0 %v1937
    %2004 = vmatprep.subr.mxu0 %v1941
    %2005 = vmatpush1.msra.mxu0 %v1940
    %2006 = vmatprep.subr.mxu0 %v1944
    %2007 = vmatpush1.msra.mxu0 %v1943
    %2008 = vmatprep.subr.mxu0 %v1947
    %2009 = vmatpush1.msra.mxu0 %v1946
    %2010 = vmatprep.subr.mxu0 %v1950
    %2011 = vmatpush1.msra.mxu0 %v1949
    %2012 = vmatprep.subr.mxu0 %v1953
    %2013 = vmatpush1.msra.mxu0 %v1952
    %2014 = vmatprep.subr.mxu0 %v1956
    %2015 = vmatpush1.msra.mxu0 %v1955
    %2016 = vmatprep.subr.mxu0 %v1959
    %2017 = vmatpush1.msra.mxu0 %v1958
    %2018 = vmatprep.subr.mxu0 %v1962
    %2019 = vmatpush1.msra.mxu0 %v1961
    %2020 = vmatprep.subr.mxu0 %v1965
    %2021 = vmatpush1.msra.mxu0 %v1964
    %2022 = vmatprep.subr.mxu0 %v1968
    %2023 = vmatpush1.msra.mxu0 %v1967
    %2024 = vmatprep.subr.mxu0 %v1971
    %2025 = vmatpush1.msra.mxu0 %v1970
    %2026 = vmatprep.subr.mxu0 %v1974
    %2027 = vmatpush1.msra.mxu0 %v1973
    %2028 = vmatprep.subr.mxu0 %v1977
    %2029 = vmatpush1.msra.mxu0 %v1976
    %2030 = vmatprep.subr.mxu0 %v1980
    %2031 = vmatpush1.msra.mxu0 %v1979
    %2032 = vmatprep.subr.mxu0 %v1983
    %2033 = vmatpush1.msra.mxu0 %v1982
    %2034 = vmatprep.subr.mxu0 0.0
    %2035 = vmatpush1.msra.mxu0 0.0
    %2036 = vmatprep.subr.mxu0 0.0
    %2037 = vmatpush1.msra.mxu0 0.0
    %2038 = vmatprep.subr.mxu0 0.0
    %2039 = vmatpush1.msra.mxu0 0.0
    %2040 = vmatprep.subr.mxu0 0.0
    %2041 = vmatpush1.msra.mxu0 0.0
    %2042 = vmatprep.subr.mxu0 0.0
    %2043 = vmatpush1.msra.mxu0 0.0
    %2044 = vmatprep.subr.mxu0 0.0
    %2045 = vmatpush1.msra.mxu0 0.0
    %2046 = vmatprep.subr.mxu0 0.0
    %2047 = vmatpush1.msra.mxu0 0.0
    %2048 = vmatprep.subr.mxu0 0.0
    %2049 = vmatpush1.msra.mxu0 0.0
    %2050 = vmatprep.subr.mxu0 0.0
    %2051 = vmatpush1.msra.mxu0 0.0
    %2052 = vmatprep.subr.mxu0 0.0
    %2053 = vmatpush1.msra.mxu0 0.0
    %2054 = vmatprep.subr.mxu0 0.0
    %2055 = vmatpush1.msra.mxu0 0.0
    %2056 = vmatprep.subr.mxu0 0.0
    %2057 = vmatpush1.msra.mxu0 0.0
    %2058 = vmatprep.subr.mxu0 0.0
    %2059 = vmatpush1.msra.mxu0 0.0
    %2060 = vmatprep.subr.mxu0 0.0
    %2061 = vmatpush1.msra.mxu0 0.0
    %2062 = vmatprep.subr.mxu0 0.0
    %2063 = vmatpush1.msra.mxu0 0.0
    %2064 = vmatprep.subr.mxu0 0.0
    %2065 = vmatpush1.msra.mxu0 0.0
    %2066 = vmatprep.mubr.f32.mxu0 0.0
    %2067 = vmatmul.mubr.f32.gmra.mrb[0].mxu0 %v1933
    %v2068 = vpop.f32.mrb[0].mxu0
    %v2069 = vadd.f32 %v1990, %v2068
    %v2070 = vpop.f32.mrb[0].mxu0
    %v2071 = vadd.f32 %v1994, %v2070
    %2072 = vdwg.mxu0
    %2073 = vmatprep.subr.mxu0 0.0
    %2074 = vmatpush1.msra.mxu0 %v1939
    %2075 = vmatprep.subr.mxu0 0.0
    %2076 = vmatpush1.msra.mxu0 %v1942
    %2077 = vmatprep.subr.mxu0 0.0
    %2078 = vmatpush1.msra.mxu0 %v1945
    %2079 = vmatprep.subr.mxu0 0.0
    %2080 = vmatpush1.msra.mxu0 %v1948
    %2081 = vmatprep.subr.mxu0 0.0
    %2082 = vmatpush1.msra.mxu0 %v1951
    %2083 = vmatprep.subr.mxu0 0.0
    %2084 = vmatpush1.msra.mxu0 %v1954
    %2085 = vmatprep.subr.mxu0 0.0
    %2086 = vmatpush1.msra.mxu0 %v1957
    %2087 = vmatprep.subr.mxu0 0.0
    %2088 = vmatpush1.msra.mxu0 %v1960
    %2089 = vmatprep.subr.mxu0 0.0
    %2090 = vmatpush1.msra.mxu0 %v1963
    %2091 = vmatprep.subr.mxu0 0.0
    %2092 = vmatpush1.msra.mxu0 %v1966
    %2093 = vmatprep.subr.mxu0 0.0
    %2094 = vmatpush1.msra.mxu0 %v1969
    %2095 = vmatprep.subr.mxu0 0.0
    %2096 = vmatpush1.msra.mxu0 %v1972
    %2097 = vmatprep.subr.mxu0 0.0
    %2098 = vmatpush1.msra.mxu0 %v1975
    %2099 = vmatprep.subr.mxu0 0.0
    %2100 = vmatpush1.msra.mxu0 %v1978
    %2101 = vmatprep.subr.mxu0 0.0
    %2102 = vmatpush1.msra.mxu0 %v1981
    %2103 = vmatprep.subr.mxu0 0.0
    %2104 = vmatpush1.msra.mxu0 %v1984
    %2105 = vmatprep.subr.mxu0 0.0
    %2106 = vmatpush1.msra.mxu0 0.0
    %2107 = vmatprep.subr.mxu0 0.0
    %2108 = vmatpush1.msra.mxu0 0.0
    %2109 = vmatprep.subr.mxu0 0.0
    %2110 = vmatpush1.msra.mxu0 0.0
    %2111 = vmatprep.subr.mxu0 0.0
    %2112 = vmatpush1.msra.mxu0 0.0
    %2113 = vmatprep.subr.mxu0 0.0
    %2114 = vmatpush1.msra.mxu0 0.0
    %2115 = vmatprep.subr.mxu0 0.0
    %2116 = vmatpush1.msra.mxu0 0.0
    %2117 = vmatprep.subr.mxu0 0.0
    %2118 = vmatpush1.msra.mxu0 0.0
    %2119 = vmatprep.subr.mxu0 0.0
    %2120 = vmatpush1.msra.mxu0 0.0
    %2121 = vmatprep.subr.mxu0 0.0
    %2122 = vmatpush1.msra.mxu0 0.0
    %2123 = vmatprep.subr.mxu0 0.0
    %2124 = vmatpush1.msra.mxu0 0.0
    %2125 = vmatprep.subr.mxu0 0.0
    %2126 = vmatpush1.msra.mxu0 0.0
    %2127 = vmatprep.subr.mxu0 0.0
    %2128 = vmatpush1.msra.mxu0 0.0
    %2129 = vmatprep.subr.mxu0 0.0
    %2130 = vmatpush1.msra.mxu0 0.0
    %2131 = vmatprep.subr.mxu0 0.0
    %2132 = vmatpush1.msra.mxu0 0.0
    %2133 = vmatprep.subr.mxu0 0.0
    %2134 = vmatpush1.msra.mxu0 0.0
    %2135 = vmatprep.subr.mxu0 0.0
    %2136 = vmatpush1.msra.mxu0 0.0
    %2137 = vmatprep.mubr.f32.mxu0 0.0
    %2138 = vmatmul.mubr.f32.gmra.mrb[0].mxu0 %v1933
    %v2139 = vpop.f32.mrb[0].mxu0
    %v2140 = vadd.f32 %v1998, %v2139
    %v2141 = vpop.f32.mrb[0].mxu0
    %2142 = vdwg.mxu0
    %v2143 = vadd.f32 %v1936, %v2069
    %v2144 = vxor.u32 %v2143, 2147483648
    %v2145 = vmul.f32 %v2144, 1.442695
    %v2146 = vpow.pop %v2145
    %v2147 = vadd.f32 %v2146, 1.0
    %v2148 = vrcp.pop %v2147
    %v2149 = vmul.f32 1.0, %v2148
    %v2151 = vrot.slane %v1936, 1
    %v2153 = vadd.f32 %v2151, %v2071
    %v2154 = vxor.u32 %v2153, 2147483648
    %v2155 = vmul.f32 %v2154, 1.442695
    %v2156 = vpow.pop %v2155
    %v2157 = vadd.f32 %v2156, 1.0
    %v2158 = vrcp.pop %v2157
    %v2159 = vmul.f32 1.0, %v2158
    %v2160 = vmul.f32 %v2149, %v2140
    %v2161 = vrot.slane %v1936, 2
    %v2163 = vadd.f32 %v2161, %v2160
    %v2164 = vtanh.pop %v2163
    %v2165 = vsub.f32 %v1933, %v2164
    %v2166 = vmul.f32 %v2159, %v2165
    %v2167 = vadd.f32 %v2164, %v2166
    %2168 = vst [vmem:[#allocation5 + $0x6] sm:$0x1] %v2167
    %s2169 = scalar_lea.vmem [#allocation4], 7
    %v2170 = vld [vmem:[%s2169] ss:$8 sm:$0x7]
    %v2171 = vld [vmem:[#allocation14] sm:$0xff]
    %v2172 = vld [vmem:[#allocation14 + $0x8] sm:$0xff]
    %v2173 = vld [vmem:[#allocation14 + $0x10] sm:$0xff]
    %v2174 = vld [vmem:[#allocation14 + $0x18] sm:$0xff]
    %v2175 = vld [vmem:[#allocation14 + $0x20] sm:$0xff]
    %v2176 = vld [vmem:[#allocation14 + $0x28] sm:$0xff]
    %v2177 = vld [vmem:[#allocation14 + $0x30] sm:$0xff]
    %v2178 = vld [vmem:[#allocation14 + $0x38] sm:$0xff]
    %v2179 = vld [vmem:[#allocation14 + $0x40] sm:$0xff]
    %v2180 = vld [vmem:[#allocation14 + $0x48] sm:$0xff]
    %v2181 = vld [vmem:[#allocation14 + $0x50] sm:$0xff]
    %v2182 = vld [vmem:[#allocation14 + $0x58] sm:$0xff]
    %v2183 = vld [vmem:[#allocation14 + $0x60] sm:$0xff]
    %v2184 = vld [vmem:[#allocation14 + $0x68] sm:$0xff]
    %v2185 = vld [vmem:[#allocation14 + $0x70] sm:$0xff]
    %v2186 = vld [vmem:[#allocation14 + $0x78] sm:$0xff]
    %v2187 = vld [vmem:[#allocation14 + $0x80] sm:$0xff]
    %v2188 = vld [vmem:[#allocation14 + $0x88] sm:$0xff]
    %v2189 = vld [vmem:[#allocation14 + $0x90] sm:$0xff]
    %v2190 = vld [vmem:[#allocation14 + $0x98] sm:$0xff]
    %v2191 = vld [vmem:[#allocation14 + $0xa0] sm:$0xff]
    %v2192 = vld [vmem:[#allocation14 + $0xa8] sm:$0xff]
    %v2193 = vld [vmem:[#allocation14 + $0xb0] sm:$0xff]
    %v2194 = vld [vmem:[#allocation14 + $0xb8] sm:$0xff]
    %v2195 = vld [vmem:[#allocation14 + $0xc0] sm:$0xff]
    %v2196 = vld [vmem:[#allocation14 + $0xc8] sm:$0xff]
    %v2197 = vld [vmem:[#allocation14 + $0xd0] sm:$0xff]
    %v2198 = vld [vmem:[#allocation14 + $0xd8] sm:$0xff]
    %v2199 = vld [vmem:[#allocation14 + $0xe0] sm:$0xff]
    %v2200 = vld [vmem:[#allocation14 + $0xe8] sm:$0xff]
    %v2201 = vld [vmem:[#allocation14 + $0xf0] sm:$0xff]
    %v2202 = vld [vmem:[#allocation14 + $0xf8] sm:$0xff]
    %v2203 = vld [vmem:[#allocation14 + $0x100] sm:$0xff]
    %v2204 = vld [vmem:[#allocation14 + $0x108] sm:$0xff]
    %v2205 = vld [vmem:[#allocation14 + $0x110] sm:$0xff]
    %v2206 = vld [vmem:[#allocation14 + $0x118] sm:$0xff]
    %v2207 = vld [vmem:[#allocation14 + $0x120] sm:$0xff]
    %v2208 = vld [vmem:[#allocation14 + $0x128] sm:$0xff]
    %v2209 = vld [vmem:[#allocation14 + $0x130] sm:$0xff]
    %v2210 = vld [vmem:[#allocation14 + $0x138] sm:$0xff]
    %v2211 = vld [vmem:[#allocation14 + $0x140] sm:$0xff]
    %v2212 = vld [vmem:[#allocation14 + $0x148] sm:$0xff]
    %v2213 = vld [vmem:[#allocation14 + $0x150] sm:$0xff]
    %v2214 = vld [vmem:[#allocation14 + $0x158] sm:$0xff]
    %v2215 = vld [vmem:[#allocation14 + $0x160] sm:$0xff]
    %v2216 = vld [vmem:[#allocation14 + $0x168] sm:$0xff]
    %v2217 = vld [vmem:[#allocation14 + $0x170] sm:$0xff]
    %v2218 = vld [vmem:[#allocation14 + $0x178] sm:$0xff]
    %v2219 = vld [vmem:[%s6] sm:$0x7]
    %v2221 = vlaneseq
    %v2222 = vshrl.u32 %v2221, 7
    %v2223 = vsub.s32 0, %v2222
    %v2224 = vrot.slane %v2219, %v2223
    %v2225 = vlaneseq
    %v2226 = vshrl.u32 %v2225, 7
    %v2227 = vsub.s32 1, %v2226
    %v2228 = vrot.slane %v2219, %v2227
    %v2229 = vlaneseq
    %v2230 = vshrl.u32 %v2229, 7
    %v2231 = vsub.s32 2, %v2230
    %v2232 = vrot.slane %v2219, %v2231
    %2236 = vmatprep.subr.mxu0 %v2172
    %2237 = vmatpush1.msra.mxu0 %v2171
    %2238 = vmatprep.subr.mxu0 %v2175
    %2239 = vmatpush1.msra.mxu0 %v2174
    %2240 = vmatprep.subr.mxu0 %v2178
    %2241 = vmatpush1.msra.mxu0 %v2177
    %2242 = vmatprep.subr.mxu0 %v2181
    %2243 = vmatpush1.msra.mxu0 %v2180
    %2244 = vmatprep.subr.mxu0 %v2184
    %2245 = vmatpush1.msra.mxu0 %v2183
    %2246 = vmatprep.subr.mxu0 %v2187
    %2247 = vmatpush1.msra.mxu0 %v2186
    %2248 = vmatprep.subr.mxu0 %v2190
    %2249 = vmatpush1.msra.mxu0 %v2189
    %2250 = vmatprep.subr.mxu0 %v2193
    %2251 = vmatpush1.msra.mxu0 %v2192
    %2252 = vmatprep.subr.mxu0 %v2196
    %2253 = vmatpush1.msra.mxu0 %v2195
    %2254 = vmatprep.subr.mxu0 %v2199
    %2255 = vmatpush1.msra.mxu0 %v2198
    %2256 = vmatprep.subr.mxu0 %v2202
    %2257 = vmatpush1.msra.mxu0 %v2201
    %2258 = vmatprep.subr.mxu0 %v2205
    %2259 = vmatpush1.msra.mxu0 %v2204
    %2260 = vmatprep.subr.mxu0 %v2208
    %2261 = vmatpush1.msra.mxu0 %v2207
    %2262 = vmatprep.subr.mxu0 %v2211
    %2263 = vmatpush1.msra.mxu0 %v2210
    %2264 = vmatprep.subr.mxu0 %v2214
    %2265 = vmatpush1.msra.mxu0 %v2213
    %2266 = vmatprep.subr.mxu0 %v2217
    %2267 = vmatpush1.msra.mxu0 %v2216
    %2268 = vmatprep.subr.mxu0 0.0
    %2269 = vmatpush1.msra.mxu0 0.0
    %2270 = vmatprep.subr.mxu0 0.0
    %2271 = vmatpush1.msra.mxu0 0.0
    %2272 = vmatprep.subr.mxu0 0.0
    %2273 = vmatpush1.msra.mxu0 0.0
    %2274 = vmatprep.subr.mxu0 0.0
    %2275 = vmatpush1.msra.mxu0 0.0
    %2276 = vmatprep.subr.mxu0 0.0
    %2277 = vmatpush1.msra.mxu0 0.0
    %2278 = vmatprep.subr.mxu0 0.0
    %2279 = vmatpush1.msra.mxu0 0.0
    %2280 = vmatprep.subr.mxu0 0.0
    %2281 = vmatpush1.msra.mxu0 0.0
    %2282 = vmatprep.subr.mxu0 0.0
    %2283 = vmatpush1.msra.mxu0 0.0
    %2284 = vmatprep.subr.mxu0 0.0
    %2285 = vmatpush1.msra.mxu0 0.0
    %2286 = vmatprep.subr.mxu0 0.0
    %2287 = vmatpush1.msra.mxu0 0.0
    %2288 = vmatprep.subr.mxu0 0.0
    %2289 = vmatpush1.msra.mxu0 0.0
    %2290 = vmatprep.subr.mxu0 0.0
    %2291 = vmatpush1.msra.mxu0 0.0
    %2292 = vmatprep.subr.mxu0 0.0
    %2293 = vmatpush1.msra.mxu0 0.0
    %2294 = vmatprep.subr.mxu0 0.0
    %2295 = vmatpush1.msra.mxu0 0.0
    %2296 = vmatprep.subr.mxu0 0.0
    %2297 = vmatpush1.msra.mxu0 0.0
    %2298 = vmatprep.subr.mxu0 0.0
    %2299 = vmatpush1.msra.mxu0 0.0
    %2300 = vmatprep.mubr.f32.mxu0 0.0
    %2301 = vmatmul.mubr.f32.gmra.mrb[0].mxu0 %v2167
    %v2302 = vpop.f32.mrb[0].mxu0
    %v2303 = vadd.f32 %v2224, %v2302
    %v2304 = vpop.f32.mrb[0].mxu0
    %v2305 = vadd.f32 %v2228, %v2304
    %2306 = vdwg.mxu0
    %2307 = vmatprep.subr.mxu0 0.0
    %2308 = vmatpush1.msra.mxu0 %v2173
    %2309 = vmatprep.subr.mxu0 0.0
    %2310 = vmatpush1.msra.mxu0 %v2176
    %2311 = vmatprep.subr.mxu0 0.0
    %2312 = vmatpush1.msra.mxu0 %v2179
    %2313 = vmatprep.subr.mxu0 0.0
    %2314 = vmatpush1.msra.mxu0 %v2182
    %2315 = vmatprep.subr.mxu0 0.0
    %2316 = vmatpush1.msra.mxu0 %v2185
    %2317 = vmatprep.subr.mxu0 0.0
    %2318 = vmatpush1.msra.mxu0 %v2188
    %2319 = vmatprep.subr.mxu0 0.0
    %2320 = vmatpush1.msra.mxu0 %v2191
    %2321 = vmatprep.subr.mxu0 0.0
    %2322 = vmatpush1.msra.mxu0 %v2194
    %2323 = vmatprep.subr.mxu0 0.0
    %2324 = vmatpush1.msra.mxu0 %v2197
    %2325 = vmatprep.subr.mxu0 0.0
    %2326 = vmatpush1.msra.mxu0 %v2200
    %2327 = vmatprep.subr.mxu0 0.0
    %2328 = vmatpush1.msra.mxu0 %v2203
    %2329 = vmatprep.subr.mxu0 0.0
    %2330 = vmatpush1.msra.mxu0 %v2206
    %2331 = vmatprep.subr.mxu0 0.0
    %2332 = vmatpush1.msra.mxu0 %v2209
    %2333 = vmatprep.subr.mxu0 0.0
    %2334 = vmatpush1.msra.mxu0 %v2212
    %2335 = vmatprep.subr.mxu0 0.0
    %2336 = vmatpush1.msra.mxu0 %v2215
    %2337 = vmatprep.subr.mxu0 0.0
    %2338 = vmatpush1.msra.mxu0 %v2218
    %2339 = vmatprep.subr.mxu0 0.0
    %2340 = vmatpush1.msra.mxu0 0.0
    %2341 = vmatprep.subr.mxu0 0.0
    %2342 = vmatpush1.msra.mxu0 0.0
    %2343 = vmatprep.subr.mxu0 0.0
    %2344 = vmatpush1.msra.mxu0 0.0
    %2345 = vmatprep.subr.mxu0 0.0
    %2346 = vmatpush1.msra.mxu0 0.0
    %2347 = vmatprep.subr.mxu0 0.0
    %2348 = vmatpush1.msra.mxu0 0.0
    %2349 = vmatprep.subr.mxu0 0.0
    %2350 = vmatpush1.msra.mxu0 0.0
    %2351 = vmatprep.subr.mxu0 0.0
    %2352 = vmatpush1.msra.mxu0 0.0
    %2353 = vmatprep.subr.mxu0 0.0
    %2354 = vmatpush1.msra.mxu0 0.0
    %2355 = vmatprep.subr.mxu0 0.0
    %2356 = vmatpush1.msra.mxu0 0.0
    %2357 = vmatprep.subr.mxu0 0.0
    %2358 = vmatpush1.msra.mxu0 0.0
    %2359 = vmatprep.subr.mxu0 0.0
    %2360 = vmatpush1.msra.mxu0 0.0
    %2361 = vmatprep.subr.mxu0 0.0
    %2362 = vmatpush1.msra.mxu0 0.0
    %2363 = vmatprep.subr.mxu0 0.0
    %2364 = vmatpush1.msra.mxu0 0.0
    %2365 = vmatprep.subr.mxu0 0.0
    %2366 = vmatpush1.msra.mxu0 0.0
    %2367 = vmatprep.subr.mxu0 0.0
    %2368 = vmatpush1.msra.mxu0 0.0
    %2369 = vmatprep.subr.mxu0 0.0
    %2370 = vmatpush1.msra.mxu0 0.0
    %2371 = vmatprep.mubr.f32.mxu0 0.0
    %2372 = vmatmul.mubr.f32.gmra.mrb[0].mxu0 %v2167
    %v2373 = vpop.f32.mrb[0].mxu0
    %v2374 = vadd.f32 %v2232, %v2373
    %v2375 = vpop.f32.mrb[0].mxu0
    %2376 = vdwg.mxu0
    %v2377 = vadd.f32 %v2170, %v2303
    %v2378 = vxor.u32 %v2377, 2147483648
    %v2379 = vmul.f32 %v2378, 1.442695
    %v2380 = vpow.pop %v2379
    %v2381 = vadd.f32 %v2380, 1.0
    %v2382 = vrcp.pop %v2381
    %v2383 = vmul.f32 1.0, %v2382
    %v2385 = vrot.slane %v2170, 1
    %v2387 = vadd.f32 %v2385, %v2305
    %v2388 = vxor.u32 %v2387, 2147483648
    %v2389 = vmul.f32 %v2388, 1.442695
    %v2390 = vpow.pop %v2389
    %v2391 = vadd.f32 %v2390, 1.0
    %v2392 = vrcp.pop %v2391
    %v2393 = vmul.f32 1.0, %v2392
    %v2394 = vmul.f32 %v2383, %v2374
    %v2395 = vrot.slane %v2170, 2
    %v2397 = vadd.f32 %v2395, %v2394
    %v2398 = vtanh.pop %v2397
    %v2399 = vsub.f32 %v2167, %v2398
    %v2400 = vmul.f32 %v2393, %v2399
    %v2401 = vadd.f32 %v2398, %v2400
    %2402 = vst [vmem:[#allocation5 + $0x7] sm:$0x1] %v2401
    %2403 = vst [vmem:[%s11] sm:$0x1] %v2401
    %v2404 = vld [vmem:[#allocation5] sm:$0xff]
    %v2405 = vld [vmem:[#allocation16] sm:$0xff]
    %v2406 = vld [vmem:[#allocation16 + $0x8] sm:$0xff]
    %v2407 = vld [vmem:[#allocation16 + $0x10] sm:$0xff]
    %v2408 = vld [vmem:[#allocation16 + $0x18] sm:$0xff]
    %v2409 = vld [vmem:[#allocation16 + $0x20] sm:$0xff]
    %v2410 = vld [vmem:[#allocation16 + $0x28] sm:$0xff]
    %v2411 = vld [vmem:[#allocation16 + $0x30] sm:$0xff]
    %v2412 = vld [vmem:[#allocation16 + $0x38] sm:$0xff]
    %v2413 = vld [vmem:[#allocation16 + $0x40] sm:$0xff]
    %v2414 = vld [vmem:[#allocation16 + $0x48] sm:$0xff]
    %v2415 = vld [vmem:[#allocation16 + $0x50] sm:$0xff]
    %v2416 = vld [vmem:[#allocation16 + $0x58] sm:$0xff]
    %v2417 = vld [vmem:[#allocation16 + $0x60] sm:$0xff]
    %v2418 = vld [vmem:[#allocation16 + $0x68] sm:$0xff]
    %v2419 = vld [vmem:[#allocation16 + $0x70] sm:$0xff]
    %v2420 = vld [vmem:[#allocation16 + $0x78] sm:$0xff]
    %v2421 = vld [vmem:[%s8] sm:$0x1]
    %v2423 = vlaneseq
    %v2424 = vshrl.u32 %v2423, 7
    %v2425 = vsub.s32 0, %v2424
    %v2426 = vrot.slane %v2421, %v2425
    %2428 = vmatprep.subr.mxu0 0.0
    %2429 = vmatpush1.msra.mxu0 %v2405
    %2430 = vmatprep.subr.mxu0 0.0
    %2431 = vmatpush1.msra.mxu0 %v2406
    %2432 = vmatprep.subr.mxu0 0.0
    %2433 = vmatpush1.msra.mxu0 %v2407
    %2434 = vmatprep.subr.mxu0 0.0
    %2435 = vmatpush1.msra.mxu0 %v2408
    %2436 = vmatprep.subr.mxu0 0.0
    %2437 = vmatpush1.msra.mxu0 %v2409
    %2438 = vmatprep.subr.mxu0 0.0
    %2439 = vmatpush1.msra.mxu0 %v2410
    %2440 = vmatprep.subr.mxu0 0.0
    %2441 = vmatpush1.msra.mxu0 %v2411
    %2442 = vmatprep.subr.mxu0 0.0
    %2443 = vmatpush1.msra.mxu0 %v2412
    %2444 = vmatprep.subr.mxu0 0.0
    %2445 = vmatpush1.msra.mxu0 %v2413
    %2446 = vmatprep.subr.mxu0 0.0
    %2447 = vmatpush1.msra.mxu0 %v2414
    %2448 = vmatprep.subr.mxu0 0.0
    %2449 = vmatpush1.msra.mxu0 %v2415
    %2450 = vmatprep.subr.mxu0 0.0
    %2451 = vmatpush1.msra.mxu0 %v2416
    %2452 = vmatprep.subr.mxu0 0.0
    %2453 = vmatpush1.msra.mxu0 %v2417
    %2454 = vmatprep.subr.mxu0 0.0
    %2455 = vmatpush1.msra.mxu0 %v2418
    %2456 = vmatprep.subr.mxu0 0.0
    %2457 = vmatpush1.msra.mxu0 %v2419
    %2458 = vmatprep.subr.mxu0 0.0
    %2459 = vmatpush1.msra.mxu0 %v2420
    %2460 = vmatprep.subr.mxu0 0.0
    %2461 = vmatpush1.msra.mxu0 0.0
    %2462 = vmatprep.subr.mxu0 0.0
    %2463 = vmatpush1.msra.mxu0 0.0
    %2464 = vmatprep.subr.mxu0 0.0
    %2465 = vmatpush1.msra.mxu0 0.0
    %2466 = vmatprep.subr.mxu0 0.0
    %2467 = vmatpush1.msra.mxu0 0.0
    %2468 = vmatprep.subr.mxu0 0.0
    %2469 = vmatpush1.msra.mxu0 0.0
    %2470 = vmatprep.subr.mxu0 0.0
    %2471 = vmatpush1.msra.mxu0 0.0
    %2472 = vmatprep.subr.mxu0 0.0
    %2473 = vmatpush1.msra.mxu0 0.0
    %2474 = vmatprep.subr.mxu0 0.0
    %2475 = vmatpush1.msra.mxu0 0.0
    %2476 = vmatprep.subr.mxu0 0.0
    %2477 = vmatpush1.msra.mxu0 0.0
    %2478 = vmatprep.subr.mxu0 0.0
    %2479 = vmatpush1.msra.mxu0 0.0
    %2480 = vmatprep.subr.mxu0 0.0
    %2481 = vmatpush1.msra.mxu0 0.0
    %2482 = vmatprep.subr.mxu0 0.0
    %2483 = vmatpush1.msra.mxu0 0.0
    %2484 = vmatprep.subr.mxu0 0.0
    %2485 = vmatpush1.msra.mxu0 0.0
    %2486 = vmatprep.subr.mxu0 0.0
    %2487 = vmatpush1.msra.mxu0 0.0
    %2488 = vmatprep.subr.mxu0 0.0
    %2489 = vmatpush1.msra.mxu0 0.0
    %2490 = vmatprep.subr.mxu0 0.0
    %2491 = vmatpush1.msra.mxu0 0.0
    %2492 = vmatprep.mubr.f32.mxu0 0.0
    %2493 = vmatmul.mubr.f32.gmra.mrb[0].mxu0 %v2404
    %v2494 = vpop.f32.mrb[0].mxu0
    %v2495 = vadd.f32 %v2426, %v2494
    %v2496 = vpop.f32.mrb[0].mxu0
    %2497 = vdwg.mxu0
    %2498 = vst [vmem:[#allocation17] sm:$0xff] %v2495
    // Predicated region
    $region65: #{rnn_decode.1} parent=1 // pred_check
      _
    $region66: #{rnn_decode.1} parent=1 // pred_check_branch
      %2500 = sbr.rel (0) target = $region68
    $region67: #{rnn_decode.1} parent=1 // pred_region
      %s2502 = ssub.s32 128, 128
      %2503 = vsyncadd [#allocation10], %s2502
      %s2505 = sshll.u32 [#allocation17], 4
      %s2506 = int_to_ptr.vmem [resolvable:$true] %s2505
      %2508 = dma.vmem_to_hbm [thread:$0]  %s2506, 128, %s10, [#allocation10]
    $region68: #{rnn_decode.1} parent=1 // pred_fallthru
      _
    // Predicated region
    $region69: #{rnn_decode.1} parent=1 // pred_check
      _
    $region70: #{rnn_decode.1} parent=1 // pred_check_branch
      %2510 = sbr.rel (0) target = $region72
    $region71: #{rnn_decode.1} parent=1 // pred_region
      _
    $region72: #{rnn_decode.1} parent=1 // pred_fallthru
      _
    // Predicated region
    $region73: #{rnn_decode.1} parent=1 // pred_check
      _
    $region74: #{rnn_decode.1} parent=1 // pred_check_branch
      %2512 = sbr.rel (0) target = $region76
    $region75: #{rnn_decode.1} parent=1 // pred_region
      %2513 = dma.done [#allocation10], 128
    $region76: #{rnn_decode.1} parent=1 // pred_fallthru
      _
    // Predicated region
    $region77: #{rnn_decode.1} parent=1 // pred_check
      _
    $region78: #{rnn_decode.1} parent=1 // pred_check_branch
      %2515 = sbr.rel (0) target = $region80
    $region79: #{rnn_decode.1} parent=1 // pred_region
      _
    $region80: #{rnn_decode.1} parent=1 // pred_fallthru
      _
    %2516 = vsyncpa [#allocation9], 1
    %2517 = vsyncpa [#allocation12], 1
    %2518 = vsyncpa [#allocation15], 1
    %2519 = vsyncpa [#allocation10], 1

</llo_original>
